<compile_context>
chip_gen: v7x
topology: tpu7x:2x2x1
jax: 0.10.0
libtpu: 0.0.40
codegen_flags: <defaults>
</compile_context>

<pallas_src>
import functools

import jax
import jax.numpy as jnp
from jax.experimental import pallas as pl
from jax.experimental.pallas import tpu as pltpu

HIDDEN = 768            # BERT hidden size (nn.Linear(768, 512))
HALF = HIDDEN // 2      # u32-packed embedding row width
FC1 = 512
NCLASS = 2
PADN = 128              # lane-dense padded logits width
NBUF = 4                # gather pipeline depth (power of two)


def bert_arch_kernel(ids_ref,                     # SMEM [B*S] int32  (scalar prefetch)
                     tlen_ref,                    # SMEM [B//tb] int32 (scalar prefetch)
                     inv_ref,                     # VMEM [tb, 1] f32   (1 / #unmasked tokens)
                     emb_hbm,                     # HBM  [V+1, HALF] u32 (packed bf16, zero last row)
                     pw_ref, pb_ref,              # VMEM [H, H] bf16 (row-permuted), [1, H] f32
                     w1_ref, b1_ref,              # VMEM [H, FC1] bf16, [1, FC1] f32
                     w2_ref, b2_ref,              # VMEM [FC1, PADN] bf16, [1, PADN] f32
                     out_ref,                     # VMEM [tb, PADN] f32
                     gbuf,                        # VMEM [NBUF, tb, HALF] u32 gather buffers
                     sem,                         # DMA sems (NBUF,)
                     acc_ref,                     # VMEM [tb, H] f32 pooled accumulator
                     *, seq_len):
    bi = pl.program_id(0)
    tb = acc_ref.shape[0]
    nbuf = gbuf.shape[0]                          # power of two
    base = bi * (tb * seq_len)                    # flattened ids offset of this batch tile
    ncol = tlen_ref[bi]                           # max unmasked extent within the tile

    acc_ref[...] = jnp.zeros_like(acc_ref)

    def issue_col(col, slot):
        # Gather the tb packed embedding rows of sequence column `col` into gbuf[slot].
        @pl.loop(0, tb)
        def _(r):
            tok = ids_ref[base + r * seq_len + col]
            pltpu.make_async_copy(emb_hbm.at[pl.ds(tok, 1), :],
                                  gbuf.at[slot, pl.ds(r, 1), :],
                                  sem.at[slot]).start()

    def wait_col(slot):
        # NOTE: dummy descriptors must match the real per-row copies ([1, HALF] u32)
        # exactly, or the DMA semaphore accounting silently breaks.
        @pl.loop(0, tb)
        def _(r):
            pltpu.make_async_copy(emb_hbm.at[pl.ds(0, 1), :],
                                  gbuf.at[slot, pl.ds(r, 1), :],
                                  sem.at[slot]).wait()

    # Prime NBUF-1 columns (one slot stays free for the issue-before-wait refill).
    @pl.loop(0, jnp.minimum(ncol, nbuf - 1))
    def _(c):
        issue_col(c, c)

    @pl.loop(0, ncol)
    def _(t):
        nxt = t + (nbuf - 1)

        # Issue BEFORE waiting: the target slot was drained at step t-1, so 2-3
        # columns are always in flight while we consume column t.
        @pl.when(nxt < ncol)
        def _():
            issue_col(nxt, nxt & (nbuf - 1))

        slot = t & (nbuf - 1)
        wait_col(slot)

        # Unpack u32 -> two f32 halves (even features | odd features) and accumulate.
        # Masked positions gathered the all-zero row, so they contribute nothing.
        u = gbuf[slot]                                                  # [tb, HALF] u32
        acc_ref[:, :HALF] += pltpu.bitcast(u << 16, jnp.float32)        # even features
        acc_ref[:, HALF:] += pltpu.bitcast(u & jnp.uint32(0xFFFF0000),
                                           jnp.float32)                 # odd features

    # ---------------- head (once per batch tile) ----------------
    # Masked mean pool; inv_ref holds the exact reciprocal (clamped >=1 in wrapper).
    pooled = acc_ref[...] * inv_ref[...]                                # [tb, H] (permuted feats)

    # TODO(synk): the pretrained BERT encoder has no in-script Pallas equivalent;
    # stand-in backbone = masked mean pool + BERT-style tanh pooler.
    # pooler_w rows were permuted to match the even|odd feature layout.
    cls_hs = jnp.tanh(
        jnp.dot(pooled.astype(jnp.bfloat16), pw_ref[...],
                preferred_element_type=jnp.float32) + pb_ref[...])

    # fc1 -> relu -> (dropout: identity at eval) -> fc2 -> log_softmax(dim=1)
    h = jnp.dot(cls_hs.astype(jnp.bfloat16), w1_ref[...],
                preferred_element_type=jnp.float32) + b1_ref[...]
    h = jnp.maximum(h, 0.0)
    # TODO(synk): nn.Dropout(0.1) is identity at inference; not applied.
    logits = jnp.dot(h.astype(jnp.bfloat16), w2_ref[...],
                     preferred_element_type=jnp.float32) + b2_ref[...]

    # Lane-dense [tb, 128] output block; exclude padded classes from the softmax.
    col_id = jax.lax.broadcasted_iota(jnp.int32, logits.shape, 1)
    logits = jnp.where(col_id < NCLASS, logits, jnp.float32(-1e30))
    mx = jnp.max(logits, axis=1, keepdims=True)
    lse = mx + jnp.log(jnp.sum(jnp.exp(logits - mx), axis=1, keepdims=True))
    out_ref[...] = logits - lse


@functools.partial(jax.jit, static_argnames=("tb",))
def bert_arch_forward(sent_id, mask, kparams, *, tb=64):
    B, S = sent_id.shape
    assert B % tb == 0 and tb % 8 == 0, "batch tile must divide B and be sublane aligned"
    n_tiles = B // tb

    pad_row = kparams["emb_u32"].shape[0] - 1   # all-zero row appended in prepare_params
    # Fold the attention mask into the ids: masked positions gather the zero row.
    ids = jnp.where(mask != 0, sent_id, pad_row).astype(jnp.int32).reshape(-1)   # [B*S]

    # Per-batch-tile max unmasked extent -> dynamic column trip count in-kernel.
    pos1 = jnp.where(mask != 0, jnp.arange(1, S + 1, dtype=jnp.int32)[None, :], 0)
    tile_len = jnp.max(jnp.max(pos1, axis=1).reshape(n_tiles, tb), axis=1).astype(jnp.int32)

    # Exact reciprocal of the token count (clamped to avoid 0/0 on fully-masked rows).
    msum = jnp.sum(mask != 0, axis=1, keepdims=True).astype(jnp.float32)         # [B, 1]
    inv_denom = 1.0 / jnp.maximum(msum, 1.0)

    kernel = functools.partial(bert_arch_kernel, seq_len=S)

    out_padded = pl.pallas_call(
        kernel,
        out_shape=jax.ShapeDtypeStruct((B, PADN), jnp.float32),
        grid_spec=pltpu.PrefetchScalarGridSpec(
            num_scalar_prefetch=2,
            grid=(n_tiles,),
            in_specs=[
                pl.BlockSpec((tb, 1), lambda bi, ids_r, tl_r: (bi, 0)),            # inv_denom
                pl.BlockSpec(memory_space=pl.ANY),                                 # emb table (HBM)
                pl.BlockSpec((HIDDEN, HIDDEN), lambda bi, ids_r, tl_r: (0, 0)),    # pooler_w bf16
                pl.BlockSpec((1, HIDDEN),      lambda bi, ids_r, tl_r: (0, 0)),    # pooler_b
                pl.BlockSpec((HIDDEN, FC1),    lambda bi, ids_r, tl_r: (0, 0)),    # fc1_w bf16
                pl.BlockSpec((1, FC1),         lambda bi, ids_r, tl_r: (0, 0)),    # fc1_b
                pl.BlockSpec((FC1, PADN),      lambda bi, ids_r, tl_r: (0, 0)),    # fc2_w bf16 (padded)
                pl.BlockSpec((1, PADN),        lambda bi, ids_r, tl_r: (0, 0)),    # fc2_b (padded)
            ],
            out_specs=pl.BlockSpec((tb, PADN), lambda bi, ids_r, tl_r: (bi, 0)),
            scratch_shapes=[
                pltpu.VMEM((NBUF, tb, HALF), jnp.uint32),    # gather buffers (4-deep)
                pltpu.SemaphoreType.DMA((NBUF,)),            # one sem per buffer slot
                pltpu.VMEM((tb, HIDDEN), jnp.float32),       # pooled accumulator
            ],
        ),
        compiler_params=pltpu.CompilerParams(
            dimension_semantics=("parallel",)),              # v7x: both TCs split batch tiles
    )(ids, tile_len, inv_denom, kparams["emb_u32"],
      kparams["pooler_w"], kparams["pooler_b"],
      kparams["fc1_w"], kparams["fc1_b"],
      kparams["fc2_w"], kparams["fc2_b"])

    return out_padded[:, :NCLASS]


def init_params(key, vocab=32):
    """Logical (PyTorch-shaped) parameters."""
    ks = jax.random.split(key, 4)
    s = 0.02
    return {
        "emb":      jax.random.normal(ks[0], (vocab, HIDDEN), jnp.float32) * s,
        "pooler_w": jax.random.normal(ks[1], (HIDDEN, HIDDEN), jnp.float32) * s,
        "pooler_b": jnp.zeros((1, HIDDEN), jnp.float32),
        "fc1_w":    jax.random.normal(ks[2], (HIDDEN, FC1), jnp.float32) * s,
        "fc1_b":    jnp.zeros((1, FC1), jnp.float32),
        "fc2_w":    jax.random.normal(ks[3], (FC1, NCLASS), jnp.float32) * s,
        "fc2_b":    jnp.zeros((1, NCLASS), jnp.float32),
    }


def prepare_params(params):
    """One-time (checkpoint-load-time) conversion to kernel-friendly layouts."""
    # bf16 embedding table with an all-zero row appended for masked-out positions,
    # packed as u32 lane pairs: even feature -> low 16 bits, odd feature -> high 16.
    emb_bf16 = jnp.concatenate(
        [params["emb"].astype(jnp.bfloat16),
         jnp.zeros((1, HIDDEN), jnp.bfloat16)], axis=0)                  # [V+1, H]
    lo_u = jax.lax.bitcast_convert_type(emb_bf16[:, 0::2], jnp.uint16).astype(jnp.uint32)
    hi_u = jax.lax.bitcast_convert_type(emb_bf16[:, 1::2], jnp.uint16).astype(jnp.uint32)
    emb_u32 = lo_u | (hi_u << 16)                                        # [V+1, HALF]

    # Absorb the even|odd feature permutation into the pooler weight rows.
    perm = jnp.concatenate([jnp.arange(0, HIDDEN, 2), jnp.arange(1, HIDDEN, 2)])
    pooler_w = params["pooler_w"][perm, :].astype(jnp.bfloat16)

    # Pad the 2-class fc2 to 128 lanes for lane-dense MXU output / stores (bf16 weights).
    w2p = jnp.zeros((FC1, PADN), jnp.float32).at[:, :NCLASS].set(params["fc2_w"])
    b2p = jnp.zeros((1, PADN), jnp.float32).at[:, :NCLASS].set(params["fc2_b"])
    return {
        "emb_u32":  emb_u32,
        "pooler_w": pooler_w,
        "pooler_b": params["pooler_b"].astype(jnp.float32),
        "fc1_w":    params["fc1_w"].astype(jnp.bfloat16),
        "fc1_b":    params["fc1_b"].astype(jnp.float32),
        "fc2_w":    w2p.astype(jnp.bfloat16),
        "fc2_b":    b2p.astype(jnp.float32),
    }


def reference_forward(sent_id, mask, params):
    """Pure-JAX reference mirroring the kernel's bf16 quantization points."""
    b16 = lambda x: x.astype(jnp.bfloat16).astype(jnp.float32)
    x = b16(params["emb"])[sent_id]                                      # [B, S, H]
    m = (mask != 0).astype(jnp.float32)[..., None]
    pooled = (x * m).sum(1) / jnp.maximum(m.sum(1), 1.0)
    cls_hs = jnp.tanh(b16(pooled) @ b16(params["pooler_w"]) + params["pooler_b"])
    h = jnp.maximum(b16(cls_hs) @ b16(params["fc1_w"]) + params["fc1_b"], 0.0)
    logits = b16(h) @ b16(params["fc2_w"]) + params["fc2_b"]
    return jax.nn.log_softmax(logits, axis=1)


if __name__ == "__main__":
    key = jax.random.PRNGKey(0)
    pkey, dkey, mkey = jax.random.split(key, 3)

    B, S, VOCAB, TB = 128, 32, 64, 64      # 2 batch tiles -> both v7x TensorCores busy
    params = init_params(pkey, vocab=VOCAB)
    kparams = prepare_params(params)

    sent_id = jax.random.randint(dkey, (B, S), 0, VOCAB, dtype=jnp.int32)
    # ragged attention mask: each row keeps a random non-empty prefix of tokens
    lens = jax.random.randint(mkey, (B, 1), 1, S + 1)
    mask = (jnp.arange(S)[None, :] < lens).astype(jnp.int32)

    out = bert_arch_forward(sent_id, mask, kparams, tb=TB)
    out = jax.block_until_ready(out)

    assert out.shape == (B, NCLASS) and out.dtype == jnp.float32
    assert bool(jnp.all(jnp.isfinite(out)))
    # log-softmax rows must exponentiate-sum to ~1
    assert jnp.allclose(jnp.sum(jnp.exp(out), axis=1), 1.0, atol=1e-5)
    # numerics must match the pure-JAX reference
    ref = reference_forward(sent_id, mask, params)
    assert jnp.allclose(out, ref, atol=5e-3), float(jnp.max(jnp.abs(out - ref)))
    print("KERNEL_OK")
</pallas_src>

<mosaic_0001>
module attributes {stable_mosaic.version = 11 : i64} {
  func.func @bert_arch_kernel(%arg0: i32, %arg1: memref<4096xi32, #tpu.memory_space<smem>>, %arg2: memref<2xi32, #tpu.memory_space<smem>>, %arg3: memref<64x1xf32, #tpu.memory_space<vmem>>, %arg4: memref<65x384xi32, #tpu.memory_space<any>>, %arg5: memref<768x768xbf16, #tpu.memory_space<vmem>>, %arg6: memref<1x768xf32, #tpu.memory_space<vmem>>, %arg7: memref<768x512xbf16, #tpu.memory_space<vmem>>, %arg8: memref<1x512xf32, #tpu.memory_space<vmem>>, %arg9: memref<512x128xbf16, #tpu.memory_space<vmem>>, %arg10: memref<1x128xf32, #tpu.memory_space<vmem>>, %arg11: memref<64x128xf32, #tpu.memory_space<vmem>>, %arg12: memref<4x64x384xi32, #tpu.memory_space<vmem>>, %arg13: memref<4x!tpu.dma_semaphore, #tpu.memory_space<semaphore_mem>>, %arg14: memref<64x768xf32, #tpu.memory_space<vmem>>) attributes {dimension_semantics = [#tpu.dimension_semantics<parallel>], iteration_bounds = array<i64: 2>, scalar_prefetch = 2 : i64, scratch_operands = 3 : i64, tpu.core_type = #tpu.core_type<tc>, window_params = [{transform_indices = @transform_0, window_bounds = array<i64: 64, 1>}, {}, {pipeline_mode = #tpu.pipeline_mode<synchronous>, transform_indices = @transform_2, window_bounds = array<i64: 768, 768>}, {pipeline_mode = #tpu.pipeline_mode<synchronous>, transform_indices = @transform_3, window_bounds = array<i64: 1, 768>}, {pipeline_mode = #tpu.pipeline_mode<synchronous>, transform_indices = @transform_4, window_bounds = array<i64: 768, 512>}, {pipeline_mode = #tpu.pipeline_mode<synchronous>, transform_indices = @transform_5, window_bounds = array<i64: 1, 512>}, {pipeline_mode = #tpu.pipeline_mode<synchronous>, transform_indices = @transform_6, window_bounds = array<i64: 512, 128>}, {pipeline_mode = #tpu.pipeline_mode<synchronous>, transform_indices = @transform_7, window_bounds = array<i64: 1, 128>}, {transform_indices = @transform_8, window_bounds = array<i64: 64, 128>}]} {
    %c2048_i32 = arith.constant 2048 : i32
    %0 = arith.muli %arg0, %c2048_i32 : i32
    %1 = arith.index_cast %arg0 : i32 to index
    %2 = memref.load %arg2[%1] : memref<2xi32, #tpu.memory_space<smem>>
    %cst = arith.constant 0.000000e+00 : f32
    %3 = vector.broadcast %cst : f32 to vector<64x768xf32>
    %c0 = arith.constant 0 : index
    %c0_0 = arith.constant 0 : index
    %4 = vector.load %arg14[%c0, %c0_0] : memref<64x768xf32, #tpu.memory_space<vmem>>, vector<64x768xf32>
    tpu.vector_store %arg14[%c0, %c0_0], %3 {strides = array<i32>} : memref<64x768xf32, #tpu.memory_space<vmem>>, vector<64x768xf32>,
    %c3_i32 = arith.constant 3 : i32
    %5 = arith.minsi %2, %c3_i32 : i32
    %c0_i32 = arith.constant 0 : i32
    %6 = arith.subi %5, %c0_i32 : i32
    %c1_i32 = arith.constant 1 : i32
    %c1_i32_1 = arith.constant 1 : i32
    %7 = arith.subi %c1_i32, %c1_i32_1 : i32
    %8 = arith.addi %6, %7 : i32
    %c1_i32_2 = arith.constant 1 : i32
    %9 = arith.divsi %8, %c1_i32_2 : i32
    %c1_i32_3 = arith.constant 1 : i32
    %c0_i32_4 = arith.constant 0 : i32
    %c0_i32_5 = arith.constant 0 : i32
    %10 = arith.subi %9, %c0_i32_5 : i32
    %11 = arith.addi %c0_i32_5, %10 : i32
    %c1_i32_6 = arith.constant 1 : i32
    scf.for %arg15 = %c0_i32_5 to %11 step %c1_i32_6  : i32 {
      %60 = arith.muli %arg15, %c1_i32_3 : i32
      %61 = arith.addi %c0_i32_4, %60 : i32
      %c0_i32_40 = arith.constant 0 : i32
      %c64_i32 = arith.constant 64 : i32
      %62 = arith.addi %c0_i32_40, %c64_i32 : i32
      %c1_i32_41 = arith.constant 1 : i32
      scf.for %arg16 = %c0_i32_40 to %62 step %c1_i32_41  : i32 {
        %c1_i32_43 = arith.constant 1 : i32
        %63 = arith.muli %arg16, %c1_i32_43 : i32
        %c0_i32_44 = arith.constant 0 : i32
        %64 = arith.addi %c0_i32_44, %63 : i32
        %c32_i32 = arith.constant 32 : i32
        %65 = arith.muli %64, %c32_i32 : i32
        %66 = arith.addi %0, %65 : i32
        %67 = arith.addi %66, %61 : i32
        %68 = arith.index_cast %67 : i32 to index
        %69 = memref.load %arg1[%68] : memref<4096xi32, #tpu.memory_space<smem>>
        %c0_i32_45 = arith.constant 0 : i32
        %70 = tpu.memref_slice %arg4[%69, %c0_i32_45] : memref<65x384xi32, #tpu.memory_space<any>> -> memref<1x384xi32, #tpu.memory_space<any>>
        %c0_i32_46 = arith.constant 0 : i32
        %71 = tpu.memref_slice %arg12[%61, %64, %c0_i32_46] : memref<4x64x384xi32, #tpu.memory_space<vmem>> -> memref<1x1x384xi32, #tpu.memory_space<vmem>>
        %72 = tpu.memref_squeeze %71 : memref<1x1x384xi32, #tpu.memory_space<vmem>> -> memref<1x384xi32, #tpu.memory_space<vmem>>
        %73 = tpu.memref_slice %arg13[%61] : memref<4x!tpu.dma_semaphore, #tpu.memory_space<semaphore_mem>> -> memref<1x!tpu.dma_semaphore, #tpu.memory_space<semaphore_mem>>
        %74 = tpu.memref_squeeze %73 : memref<1x!tpu.dma_semaphore, #tpu.memory_space<semaphore_mem>> -> memref<!tpu.dma_semaphore, #tpu.memory_space<semaphore_mem>>
        tpu.enqueue_dma source(%70 : memref<1x384xi32, #tpu.memory_space<any>>) target(%72 : memref<1x384xi32, #tpu.memory_space<vmem>>) target_semaphore(%74 : memref<!tpu.dma_semaphore, #tpu.memory_space<semaphore_mem>>)
      }
      %c64_i32_42 = arith.constant 64 : i32
    }
    %c0_i32_7 = arith.constant 0 : i32
    %12 = arith.subi %2, %c0_i32_7 : i32
    %c1_i32_8 = arith.constant 1 : i32
    %c1_i32_9 = arith.constant 1 : i32
    %13 = arith.subi %c1_i32_8, %c1_i32_9 : i32
    %14 = arith.addi %12, %13 : i32
    %c1_i32_10 = arith.constant 1 : i32
    %15 = arith.divsi %14, %c1_i32_10 : i32
    %c1_i32_11 = arith.constant 1 : i32
    %c0_i32_12 = arith.constant 0 : i32
    %c0_i32_13 = arith.constant 0 : i32
    %16 = arith.subi %15, %c0_i32_13 : i32
    %17 = arith.addi %c0_i32_13, %16 : i32
    %c1_i32_14 = arith.constant 1 : i32
    scf.for %arg15 = %c0_i32_13 to %17 step %c1_i32_14  : i32 {
      %60 = arith.muli %arg15, %c1_i32_11 : i32
      %61 = arith.addi %c0_i32_12, %60 : i32
      %c3_i32_40 = arith.constant 3 : i32
      %62 = arith.addi %61, %c3_i32_40 : i32
      %63 = arith.cmpi slt, %62, %2 : i32
      %64 = arith.extui %63 : i1 to i32
      %c0_i32_41 = arith.constant 0 : i32
      %65 = arith.cmpi ne, %64, %c0_i32_41 : i32
      scf.if %65 {
        %c3_i32_55 = arith.constant 3 : i32
        %83 = arith.andi %62, %c3_i32_55 : i32
        %c0_i32_56 = arith.constant 0 : i32
        %c64_i32_57 = arith.constant 64 : i32
        %84 = arith.addi %c0_i32_56, %c64_i32_57 : i32
        %c1_i32_58 = arith.constant 1 : i32
        scf.for %arg16 = %c0_i32_56 to %84 step %c1_i32_58  : i32 {
          %c1_i32_60 = arith.constant 1 : i32
          %85 = arith.muli %arg16, %c1_i32_60 : i32
          %c0_i32_61 = arith.constant 0 : i32
          %86 = arith.addi %c0_i32_61, %85 : i32
          %c32_i32 = arith.constant 32 : i32
          %87 = arith.muli %86, %c32_i32 : i32
          %88 = arith.addi %0, %87 : i32
          %89 = arith.addi %88, %62 : i32
          %90 = arith.index_cast %89 : i32 to index
          %91 = memref.load %arg1[%90] : memref<4096xi32, #tpu.memory_space<smem>>
          %c0_i32_62 = arith.constant 0 : i32
          %92 = tpu.memref_slice %arg4[%91, %c0_i32_62] : memref<65x384xi32, #tpu.memory_space<any>> -> memref<1x384xi32, #tpu.memory_space<any>>
          %c0_i32_63 = arith.constant 0 : i32
          %93 = tpu.memref_slice %arg12[%83, %86, %c0_i32_63] : memref<4x64x384xi32, #tpu.memory_space<vmem>> -> memref<1x1x384xi32, #tpu.memory_space<vmem>>
          %94 = tpu.memref_squeeze %93 : memref<1x1x384xi32, #tpu.memory_space<vmem>> -> memref<1x384xi32, #tpu.memory_space<vmem>>
          %95 = tpu.memref_slice %arg13[%83] : memref<4x!tpu.dma_semaphore, #tpu.memory_space<semaphore_mem>> -> memref<1x!tpu.dma_semaphore, #tpu.memory_space<semaphore_mem>>
          %96 = tpu.memref_squeeze %95 : memref<1x!tpu.dma_semaphore, #tpu.memory_space<semaphore_mem>> -> memref<!tpu.dma_semaphore, #tpu.memory_space<semaphore_mem>>
          tpu.enqueue_dma source(%92 : memref<1x384xi32, #tpu.memory_space<any>>) target(%94 : memref<1x384xi32, #tpu.memory_space<vmem>>) target_semaphore(%96 : memref<!tpu.dma_semaphore, #tpu.memory_space<semaphore_mem>>)
        }
        %c64_i32_59 = arith.constant 64 : i32
      } else {
      }
      %c3_i32_42 = arith.constant 3 : i32
      %66 = arith.andi %61, %c3_i32_42 : i32
      %c0_i32_43 = arith.constant 0 : i32
      %c64_i32 = arith.constant 64 : i32
      %67 = arith.addi %c0_i32_43, %c64_i32 : i32
      %c1_i32_44 = arith.constant 1 : i32
      scf.for %arg16 = %c0_i32_43 to %67 step %c1_i32_44  : i32 {
        %c1_i32_55 = arith.constant 1 : i32
        %83 = arith.muli %arg16, %c1_i32_55 : i32
        %c0_i32_56 = arith.constant 0 : i32
        %84 = arith.addi %c0_i32_56, %83 : i32
        %c0_i32_57 = arith.constant 0 : i32
        %c0_i32_58 = arith.constant 0 : i32
        %85 = tpu.memref_slice %arg4[%c0_i32_57, %c0_i32_58] : memref<65x384xi32, #tpu.memory_space<any>> -> memref<1x384xi32, #tpu.memory_space<any>>
        %c0_i32_59 = arith.constant 0 : i32
        %86 = tpu.memref_slice %arg12[%66, %84, %c0_i32_59] : memref<4x64x384xi32, #tpu.memory_space<vmem>> -> memref<1x1x384xi32, #tpu.memory_space<vmem>>
        %87 = tpu.memref_squeeze %86 : memref<1x1x384xi32, #tpu.memory_space<vmem>> -> memref<1x384xi32, #tpu.memory_space<vmem>>
        %88 = tpu.memref_slice %arg13[%66] : memref<4x!tpu.dma_semaphore, #tpu.memory_space<semaphore_mem>> -> memref<1x!tpu.dma_semaphore, #tpu.memory_space<semaphore_mem>>
        %89 = tpu.memref_squeeze %88 : memref<1x!tpu.dma_semaphore, #tpu.memory_space<semaphore_mem>> -> memref<!tpu.dma_semaphore, #tpu.memory_space<semaphore_mem>>
        tpu.wait_dma2 semaphore(%89 : memref<!tpu.dma_semaphore, #tpu.memory_space<semaphore_mem>>) src(%85 : memref<1x384xi32, #tpu.memory_space<any>>) dst(%87 : memref<1x384xi32, #tpu.memory_space<vmem>>)
      }
      %c64_i32_45 = arith.constant 64 : i32
      %68 = arith.index_cast %66 : i32 to index
      %c0_46 = arith.constant 0 : index
      %c0_47 = arith.constant 0 : index
      %69 = vector.load %arg12[%68, %c0_46, %c0_47] : memref<4x64x384xi32, #tpu.memory_space<vmem>>, vector<1x64x384xi32>
      %70 = vector.shape_cast %69 : vector<1x64x384xi32> to vector<64x384xi32>
      %c0_48 = arith.constant 0 : index
      %c0_49 = arith.constant 0 : index
      %71 = vector.load %arg14[%c0_48, %c0_49] : memref<64x768xf32, #tpu.memory_space<vmem>>, vector<64x384xf32>
      %c16_i32 = arith.constant 16 : i32
      %72 = vector.broadcast %c16_i32 : i32 to vector<64x384xi32>
      %73 = arith.shli %70, %72 : vector<64x384xi32>
      %74 = tpu.bitcast %73 : vector<64x384xi32> -> vector<64x384xf32>
      %75 = arith.addf %71, %74 : vector<64x384xf32>
      %c0_50 = arith.constant 0 : index
      %c0_51 = arith.constant 0 : index
      %76 = vector.load %arg14[%c0_50, %c0_51] : memref<64x768xf32, #tpu.memory_space<vmem>>, vector<64x384xf32>
      tpu.vector_store %arg14[%c0_50, %c0_51], %75 {strides = array<i32>} : memref<64x768xf32, #tpu.memory_space<vmem>>, vector<64x384xf32>,
      %c0_52 = arith.constant 0 : index
      %c384 = arith.constant 384 : index
      %77 = vector.load %arg14[%c0_52, %c384] : memref<64x768xf32, #tpu.memory_space<vmem>>, vector<64x384xf32>
      %c-65536_i32 = arith.constant -65536 : i32
      %78 = vector.broadcast %c-65536_i32 : i32 to vector<64x384xi32>
      %79 = arith.andi %70, %78 : vector<64x384xi32>
      %80 = tpu.bitcast %79 : vector<64x384xi32> -> vector<64x384xf32>
      %81 = arith.addf %77, %80 : vector<64x384xf32>
      %c0_53 = arith.constant 0 : index
      %c384_54 = arith.constant 384 : index
      %82 = vector.load %arg14[%c0_53, %c384_54] : memref<64x768xf32, #tpu.memory_space<vmem>>, vector<64x384xf32>
      tpu.vector_store %arg14[%c0_53, %c384_54], %81 {strides = array<i32>} : memref<64x768xf32, #tpu.memory_space<vmem>>, vector<64x384xf32>,
    }
    %c0_15 = arith.constant 0 : index
    %c0_16 = arith.constant 0 : index
    %18 = vector.load %arg14[%c0_15, %c0_16] : memref<64x768xf32, #tpu.memory_space<vmem>>, vector<64x768xf32>
    %c0_17 = arith.constant 0 : index
    %c0_18 = arith.constant 0 : index
    %19 = vector.load %arg3[%c0_17, %c0_18] : memref<64x1xf32, #tpu.memory_space<vmem>>, vector<64x1xf32>
    %20 = vector.broadcast %19 : vector<64x1xf32> to vector<64x768xf32>
    %21 = arith.mulf %18, %20 : vector<64x768xf32>
    %22 = arith.truncf %21 : vector<64x768xf32> to vector<64x768xbf16>
    %c0_19 = arith.constant 0 : index
    %c0_20 = arith.constant 0 : index
    %23 = vector.load %arg5[%c0_19, %c0_20] : memref<768x768xbf16, #tpu.memory_space<vmem>>, vector<768x768xbf16>
    %cst_21 = arith.constant dense<0.000000e+00> : vector<64x768xf32>
    %24 = tpu.matmul %22, %23, %cst_21 {dimension_numbers = #tpu.dot_dimension_numbers<[1], [0], [0], [1], [0, 0, 1, 1], [], []>} : vector<64x768xbf16>, vector<768x768xbf16>, vector<64x768xf32> -> vector<64x768xf32>
    %c0_22 = arith.constant 0 : index
    %c0_23 = arith.constant 0 : index
    %25 = vector.load %arg6[%c0_22, %c0_23] : memref<1x768xf32, #tpu.memory_space<vmem>>, vector<1x768xf32>
    %26 = vector.broadcast %25 : vector<1x768xf32> to vector<64x768xf32>
    %27 = arith.addf %24, %26 : vector<64x768xf32>
    %28 = math.tanh %27 : vector<64x768xf32>
    %29 = arith.truncf %28 : vector<64x768xf32> to vector<64x768xbf16>
    %c0_24 = arith.constant 0 : index
    %c0_25 = arith.constant 0 : index
    %30 = vector.load %arg7[%c0_24, %c0_25] : memref<768x512xbf16, #tpu.memory_space<vmem>>, vector<768x512xbf16>
    %cst_26 = arith.constant dense<0.000000e+00> : vector<64x512xf32>
    %31 = tpu.matmul %29, %30, %cst_26 {dimension_numbers = #tpu.dot_dimension_numbers<[1], [0], [0], [1], [0, 0, 1, 1], [], []>} : vector<64x768xbf16>, vector<768x512xbf16>, vector<64x512xf32> -> vector<64x512xf32>
    %c0_27 = arith.constant 0 : index
    %c0_28 = arith.constant 0 : index
    %32 = vector.load %arg8[%c0_27, %c0_28] : memref<1x512xf32, #tpu.memory_space<vmem>>, vector<1x512xf32>
    %33 = vector.broadcast %32 : vector<1x512xf32> to vector<64x512xf32>
    %34 = arith.addf %31, %33 : vector<64x512xf32>
    %cst_29 = arith.constant 0.000000e+00 : f32
    %35 = vector.broadcast %cst_29 : f32 to vector<64x512xf32>
    %36 = arith.maximumf %34, %35 : vector<64x512xf32>
    %37 = arith.truncf %36 : vector<64x512xf32> to vector<64x512xbf16>
    %c0_30 = arith.constant 0 : index
    %c0_31 = arith.constant 0 : index
    %38 = vector.load %arg9[%c0_30, %c0_31] : memref<512x128xbf16, #tpu.memory_space<vmem>>, vector<512x128xbf16>
    %cst_32 = arith.constant dense<0.000000e+00> : vector<64x128xf32>
    %39 = tpu.matmul %37, %38, %cst_32 {dimension_numbers = #tpu.dot_dimension_numbers<[1], [0], [0], [1], [0, 0, 1, 1], [], []>} : vector<64x512xbf16>, vector<512x128xbf16>, vector<64x128xf32> -> vector<64x128xf32>
    %c0_33 = arith.constant 0 : index
    %c0_34 = arith.constant 0 : index
    %40 = vector.load %arg10[%c0_33, %c0_34] : memref<1x128xf32, #tpu.memory_space<vmem>>, vector<1x128xf32>
    %41 = vector.broadcast %40 : vector<1x128xf32> to vector<64x128xf32>
    %42 = arith.addf %39, %41 : vector<64x128xf32>
    %43 = tpu.iota {dimensions = array<i32: 1>} : vector<64x128xi32>
    %c2_i32 = arith.constant 2 : i32
    %44 = vector.broadcast %c2_i32 : i32 to vector<64x128xi32>
    %45 = arith.cmpi slt, %43, %44 : vector<64x128xi32>
    %cst_35 = arith.constant -1.000000e+30 : f32
    %46 = vector.broadcast %cst_35 : f32 to vector<64x128xf32>
    %47 = arith.select %45, %42, %46 : vector<64x128xi1>, vector<64x128xf32>
    %cst_36 = arith.constant dense<0xFF800000> : vector<64xf32>
    %48 = vector.multi_reduction <maximumf>, %47, %cst_36 [1] : vector<64x128xf32> to vector<64xf32>
    %49 = vector.shape_cast %48 : vector<64xf32> to vector<64x1xf32>
    %50 = vector.broadcast %49 : vector<64x1xf32> to vector<64x128xf32>
    %51 = arith.subf %47, %50 : vector<64x128xf32>
    %52 = math.exp %51 : vector<64x128xf32>
    %cst_37 = arith.constant dense<0.000000e+00> : vector<64xf32>
    %53 = vector.multi_reduction <add>, %52, %cst_37 [1] : vector<64x128xf32> to vector<64xf32>
    %54 = vector.shape_cast %53 : vector<64xf32> to vector<64x1xf32>
    %55 = math.log %54 : vector<64x1xf32>
    %56 = arith.addf %49, %55 : vector<64x1xf32>
    %57 = vector.broadcast %56 : vector<64x1xf32> to vector<64x128xf32>
    %58 = arith.subf %47, %57 : vector<64x128xf32>
    %c0_38 = arith.constant 0 : index
    %c0_39 = arith.constant 0 : index
    %59 = vector.load %arg11[%c0_38, %c0_39] : memref<64x128xf32, #tpu.memory_space<vmem>>, vector<64x128xf32>
    tpu.vector_store %arg11[%c0_38, %c0_39], %58 {strides = array<i32>} : memref<64x128xf32, #tpu.memory_space<vmem>>, vector<64x128xf32>,
    return
  }
  func.func @transform_0(%arg0: i32, %arg1: memref<4096xi32, #tpu.memory_space<smem>>, %arg2: memref<2xi32, #tpu.memory_space<smem>>) -> (i32, i32) {
    %c0_i32 = arith.constant 0 : i32
    %c0_i32_0 = arith.constant 0 : i32
    return %arg0, %c0_i32 : i32, i32
  }
  func.func @transform_2(%arg0: i32, %arg1: memref<4096xi32, #tpu.memory_space<smem>>, %arg2: memref<2xi32, #tpu.memory_space<smem>>) -> (i32, i32) {
    %c0_i32 = arith.constant 0 : i32
    %c0_i32_0 = arith.constant 0 : i32
    %c0_i32_1 = arith.constant 0 : i32
    return %c0_i32, %c0_i32_0 : i32, i32
  }
  func.func @transform_3(%arg0: i32, %arg1: memref<4096xi32, #tpu.memory_space<smem>>, %arg2: memref<2xi32, #tpu.memory_space<smem>>) -> (i32, i32) {
    %c0_i32 = arith.constant 0 : i32
    %c0_i32_0 = arith.constant 0 : i32
    %c0_i32_1 = arith.constant 0 : i32
    return %c0_i32, %c0_i32_0 : i32, i32
  }
  func.func @transform_4(%arg0: i32, %arg1: memref<4096xi32, #tpu.memory_space<smem>>, %arg2: memref<2xi32, #tpu.memory_space<smem>>) -> (i32, i32) {
    %c0_i32 = arith.constant 0 : i32
    %c0_i32_0 = arith.constant 0 : i32
    %c0_i32_1 = arith.constant 0 : i32
    return %c0_i32, %c0_i32_0 : i32, i32
  }
  func.func @transform_5(%arg0: i32, %arg1: memref<4096xi32, #tpu.memory_space<smem>>, %arg2: memref<2xi32, #tpu.memory_space<smem>>) -> (i32, i32) {
    %c0_i32 = arith.constant 0 : i32
    %c0_i32_0 = arith.constant 0 : i32
    %c0_i32_1 = arith.constant 0 : i32
    return %c0_i32, %c0_i32_0 : i32, i32
  }
  func.func @transform_6(%arg0: i32, %arg1: memref<4096xi32, #tpu.memory_space<smem>>, %arg2: memref<2xi32, #tpu.memory_space<smem>>) -> (i32, i32) {
    %c0_i32 = arith.constant 0 : i32
    %c0_i32_0 = arith.constant 0 : i32
    %c0_i32_1 = arith.constant 0 : i32
    return %c0_i32, %c0_i32_0 : i32, i32
  }
  func.func @transform_7(%arg0: i32, %arg1: memref<4096xi32, #tpu.memory_space<smem>>, %arg2: memref<2xi32, #tpu.memory_space<smem>>) -> (i32, i32) {
    %c0_i32 = arith.constant 0 : i32
    %c0_i32_0 = arith.constant 0 : i32
    %c0_i32_1 = arith.constant 0 : i32
    return %c0_i32, %c0_i32_0 : i32, i32
  }
  func.func @transform_8(%arg0: i32, %arg1: memref<4096xi32, #tpu.memory_space<smem>>, %arg2: memref<2xi32, #tpu.memory_space<smem>>) -> (i32, i32) {
    %c0_i32 = arith.constant 0 : i32
    %c0_i32_0 = arith.constant 0 : i32
    return %arg0, %c0_i32 : i32, i32
  }
}

</mosaic_0001>

<llo_original>
// kernel: bert_arch_forward.1
$region0: #{bert_arch_forward.1}
  #allocation0 [shape = 'u32[]', space=smem, size = 0x4, offset = 0x4, fixed_abs, tag = 'smem constant byte address 0x4 - core index']
  #allocation1 [shape = 'u32[144,128]{1,0:T(1,128)}', space=vmem, size = 0x12000, scoped, tag = 'internal scratch']
  #allocation2 [shape = 's32[4,64,384]{2,1,0:T(8,128)}', space=vmem, size = 0x60000, scoped, tag = 'scratch operand']
  #allocation3 [shape = 's32[4]{0}', space=sflag, size = 0x10, scoped, tag = 'scratch operand']
  #allocation4 [shape = 'f32[64,768]{1,0:T(8,128)}', space=vmem, size = 0x30000, scoped, tag = 'scratch operand']
  #allocation5 [shape = 's32[1]{0}', space=sflag, size = 0x4, scoped, tag = 'scoped memory for bert_arch_forward.1']
  #allocation6 [shape = 'u8[16384]{0}', space=smem, size = 0x4000, scoped, tag = 'prefetched SMEM operand 0']
  #allocation7 [shape = 'u8[512]{0}', space=smem, size = 0x200, scoped, tag = 'prefetched SMEM operand 1']
  #allocation18 [shape = 's32[]', space=sflag, size = 0x4, offset = 0, fixed_abs, tag = 'sflag constant byte address 0x0 - dummy sync flag']
  #allocation19 [shape = 's32[]', space=sflag, size = 0x4, offset = 0, fixed_abs, tag = 'sflag constant byte address 0x0 - dummy sync flag']
  %s0 = inlined_call_operand.vmem [shape: s32[4096], index: 0, kind: input, shape index: {}]
  %s1 = inlined_call_operand.vmem [shape: s32[2], index: 1, kind: input, shape index: {}]
  %s2 = inlined_call_operand.vmem [shape: f32[128,1], index: 2, kind: input, shape index: {}]
  %s3 = inlined_call_operand.hbm [shape: u32[65,384], index: 3, kind: input, shape index: {}]
  %s4 = inlined_call_operand.hbm [shape: bf16[768,768], index: 4, kind: input, shape index: {}]
  %s5 = inlined_call_operand.hbm [shape: f32[1,768], index: 5, kind: input, shape index: {}]
  %s6 = inlined_call_operand.hbm [shape: bf16[768,512], index: 6, kind: input, shape index: {}]
  %s7 = inlined_call_operand.hbm [shape: f32[1,512], index: 7, kind: input, shape index: {}]
  %s8 = inlined_call_operand.hbm [shape: bf16[512,128], index: 8, kind: input, shape index: {}]
  %s9 = inlined_call_operand.hbm [shape: f32[1,128], index: 9, kind: input, shape index: {}]
  %s10 = inlined_call_operand.vmem [shape: f32[128,128], index: 10, kind: output, shape index: {}]
  %s11 = sld [smem:[#allocation0]]
  $region124: #{bert_arch_forward.1} parent=0
    _
  %s13 = ssub.s32 1, %s11
  %s14 = scalar_select 0, %s13, %s11
  %s15 = sshll.u32 %s0, 4
  %s16 = int_to_ptr.vmem [resolvable:$true] %s15
  %18 = dma.vmem_to_smem %s16, 512, [#allocation6], [#allocation5]
  %s19 = sshll.u32 %s1, 4
  %s20 = int_to_ptr.vmem [resolvable:$true] %s19
  %22 = dma.vmem_to_smem %s20, 16, [#allocation7], [#allocation5]
  %23 = dma.done [#allocation5], 528
  %24 = sfence
  $region1: #{bert_arch_forward.1} parent=0
    #allocation8 [shape = 'u8[1179648]{0}', space=vmem, size = 0x120000, scoped, tag = 'input window, operand 4, single buffered']
    #allocation9 [shape = 's32[2]{0}', space=sflag, size = 0x8, scoped, tag = 'scoped memory for bert_arch_forward.1']
    #allocation10 [shape = 'u8[3072]{0}', space=vmem, size = 0xc00, scoped, tag = 'input window, operand 5, single buffered']
    #allocation11 [shape = 's32[1]{0}', space=sflag, size = 0x4, scoped, tag = 'scoped memory for bert_arch_forward.1']
    #allocation12 [shape = 'u8[786432]{0}', space=vmem, size = 0xc0000, scoped, tag = 'input window, operand 6, single buffered']
    #allocation13 [shape = 'u8[2048]{0}', space=vmem, size = 0x800, scoped, tag = 'input window, operand 7, single buffered']
    #allocation14 [shape = 's32[1]{0}', space=sflag, size = 0x4, scoped, tag = 'scoped memory for bert_arch_forward.1']
    #allocation15 [shape = 'u8[131072]{0}', space=vmem, size = 0x20000, scoped, tag = 'input window, operand 8, single buffered']
    #allocation16 [shape = 'u8[512]{0}', space=vmem, size = 0x400, scoped, tag = 'input window, operand 9, single buffered']
    #allocation17 [shape = 's32[1]{0}', space=sflag, size = 0x4, scoped, tag = 'scoped memory for bert_arch_forward.1']
    %25 = vsyncpa [#allocation9], 0
    %26 = vsyncpa [#allocation11], 0
    %27 = vsyncpa [#allocation14], 0
    %28 = vsyncpa [#allocation17], 0
    loop: start=0, step=1, limit=4
    $region2: #{bert_arch_forward.1} parent=1 // loop_pre_header
      _
    $region3: #{bert_arch_forward.1} parent=1 // loop_header
      %s30 = sphi 0, %s34
      %p31 = scmp.ge.s32.totalorder %s30, 4
      %s40 = sphi 0, %s42
      %s43 = sphi 0, %s40
      %s44 = sphi 0, %s43
      %s60 = sphi 0, %s44
      %s64 = sphi 0, %s64
      %s66 = sphi 0, %s64
      %s67 = sphi 0, %s66
      %s81 = sphi 0, %s67
      %s85 = sphi 0, %s85
      %s87 = sphi 0, %s85
      %s88 = sphi 0, %s87
      %s102 = sphi 0, %s88
      %s106 = sphi 0, %s106
      %s108 = sphi 0, %s106
      %s109 = sphi 0, %s108
      %s123 = sphi 0, %s109
      %s127 = sphi 0, %s127
      %s129 = sphi 0, %s127
      %s130 = sphi 0, %s129
      %s144 = sphi 0, %s130
      %s148 = sphi 0, %s148
      %s150 = sphi 0, %s148
      %s151 = sphi 0, %s150
      %s165 = sphi 0, %s151
      %s169 = sphi 0, %s169
      %s171 = sphi 0, %s169
      %s172 = sphi 0, %s171
      %s186 = sphi 0, %s172
      %s192 = sphi 0, %s194
      %s195 = sphi 0, %s192
      %s196 = sphi 0, %s195
      %s212 = sphi 0, %s196
    $region4: #{bert_arch_forward.1} parent=1 // loop_header_branch
      %33 = sbr.rel (%p31) target = $region8
    $region5: #{bert_arch_forward.1} parent=1 // loop_body
      %s35 = ssub.s32 %s30, 1
      %s36 = ssub.s32 %s30, 2
      %s37 = sadd.s32 %s30, 1
      %s38 = ssub.s32 %s30, %s37
      %p39 = scmp.eq.s32.totalorder %s38, 0
      %s41 = sadd.s32 %s40, 1
      %s42 = scalar_select %p39, %s40, %s41
      %p45 = pneg %p39
      %p46 = scmp.eq.s32.totalorder %s30, 1
      %p47 = por %p45, %p46
      %p48 = scmp.ne.s32.totalorder %s40, %s43
      %p49 = scmp.eq.s32.totalorder %s30, 0
      %p50 = por %p48, %p49
      %p51 = scmp.ne.s32.totalorder %s40, %s43
      %p52 = scmp.eq.s32.totalorder %s35, 1
      %p53 = por %p51, %p52
      %p54 = scmp.ne.s32.totalorder %s43, %s44
      %p55 = scmp.eq.s32.totalorder %s35, 0
      %p56 = por %p54, %p55
      %p57 = scmp.ne.s32.totalorder %s43, %s44
      %p58 = scmp.eq.s32.totalorder %s36, 1
      %p59 = por %p57, %p58
      %p61 = scmp.ne.s32.totalorder %s44, %s60
      %p62 = scmp.eq.s32.totalorder %s36, 0
      %p63 = por %p61, %p62
      %s65 = sadd.s32 %s64, 1
      %p68 = scmp.eq.s32.totalorder %s30, 1
      %p69 = scmp.ne.s32.totalorder %s64, %s66
      %p70 = scmp.eq.s32.totalorder %s30, 0
      %p71 = por %p69, %p70
      %p72 = scmp.ne.s32.totalorder %s64, %s66
      %p73 = scmp.eq.s32.totalorder %s35, 1
      %p74 = por %p72, %p73
      %p75 = scmp.ne.s32.totalorder %s66, %s67
      %p76 = scmp.eq.s32.totalorder %s35, 0
      %p77 = por %p75, %p76
      %p78 = scmp.ne.s32.totalorder %s66, %s67
      %p79 = scmp.eq.s32.totalorder %s36, 1
      %p80 = por %p78, %p79
      %p82 = scmp.ne.s32.totalorder %s67, %s81
      %p83 = scmp.eq.s32.totalorder %s36, 0
      %p84 = por %p82, %p83
      %s86 = sadd.s32 %s85, 1
      %p89 = scmp.eq.s32.totalorder %s30, 1
      %p90 = scmp.ne.s32.totalorder %s85, %s87
      %p91 = scmp.eq.s32.totalorder %s30, 0
      %p92 = por %p90, %p91
      %p93 = scmp.ne.s32.totalorder %s85, %s87
      %p94 = scmp.eq.s32.totalorder %s35, 1
      %p95 = por %p93, %p94
      %p96 = scmp.ne.s32.totalorder %s87, %s88
      %p97 = scmp.eq.s32.totalorder %s35, 0
      %p98 = por %p96, %p97
      %p99 = scmp.ne.s32.totalorder %s87, %s88
      %p100 = scmp.eq.s32.totalorder %s36, 1
      %p101 = por %p99, %p100
      %p103 = scmp.ne.s32.totalorder %s88, %s102
      %p104 = scmp.eq.s32.totalorder %s36, 0
      %p105 = por %p103, %p104
      %s107 = sadd.s32 %s106, 1
      %p110 = scmp.eq.s32.totalorder %s30, 1
      %p111 = scmp.ne.s32.totalorder %s106, %s108
      %p112 = scmp.eq.s32.totalorder %s30, 0
      %p113 = por %p111, %p112
      %p114 = scmp.ne.s32.totalorder %s106, %s108
      %p115 = scmp.eq.s32.totalorder %s35, 1
      %p116 = por %p114, %p115
      %p117 = scmp.ne.s32.totalorder %s108, %s109
      %p118 = scmp.eq.s32.totalorder %s35, 0
      %p119 = por %p117, %p118
      %p120 = scmp.ne.s32.totalorder %s108, %s109
      %p121 = scmp.eq.s32.totalorder %s36, 1
      %p122 = por %p120, %p121
      %p124 = scmp.ne.s32.totalorder %s109, %s123
      %p125 = scmp.eq.s32.totalorder %s36, 0
      %p126 = por %p124, %p125
      %s128 = sadd.s32 %s127, 1
      %p131 = scmp.eq.s32.totalorder %s30, 1
      %p132 = scmp.ne.s32.totalorder %s127, %s129
      %p133 = scmp.eq.s32.totalorder %s30, 0
      %p134 = por %p132, %p133
      %p135 = scmp.ne.s32.totalorder %s127, %s129
      %p136 = scmp.eq.s32.totalorder %s35, 1
      %p137 = por %p135, %p136
      %p138 = scmp.ne.s32.totalorder %s129, %s130
      %p139 = scmp.eq.s32.totalorder %s35, 0
      %p140 = por %p138, %p139
      %p141 = scmp.ne.s32.totalorder %s129, %s130
      %p142 = scmp.eq.s32.totalorder %s36, 1
      %p143 = por %p141, %p142
      %p145 = scmp.ne.s32.totalorder %s130, %s144
      %p146 = scmp.eq.s32.totalorder %s36, 0
      %p147 = por %p145, %p146
      %s149 = sadd.s32 %s148, 1
      %p152 = scmp.eq.s32.totalorder %s30, 1
      %p153 = scmp.ne.s32.totalorder %s148, %s150
      %p154 = scmp.eq.s32.totalorder %s30, 0
      %p155 = por %p153, %p154
      %p156 = scmp.ne.s32.totalorder %s148, %s150
      %p157 = scmp.eq.s32.totalorder %s35, 1
      %p158 = por %p156, %p157
      %p159 = scmp.ne.s32.totalorder %s150, %s151
      %p160 = scmp.eq.s32.totalorder %s35, 0
      %p161 = por %p159, %p160
      %p162 = scmp.ne.s32.totalorder %s150, %s151
      %p163 = scmp.eq.s32.totalorder %s36, 1
      %p164 = por %p162, %p163
      %p166 = scmp.ne.s32.totalorder %s151, %s165
      %p167 = scmp.eq.s32.totalorder %s36, 0
      %p168 = por %p166, %p167
      %s170 = sadd.s32 %s169, 1
      %p173 = scmp.eq.s32.totalorder %s30, 1
      %p174 = scmp.ne.s32.totalorder %s169, %s171
      %p175 = scmp.eq.s32.totalorder %s30, 0
      %p176 = por %p174, %p175
      %p177 = scmp.ne.s32.totalorder %s169, %s171
      %p178 = scmp.eq.s32.totalorder %s35, 1
      %p179 = por %p177, %p178
      %p180 = scmp.ne.s32.totalorder %s171, %s172
      %p181 = scmp.eq.s32.totalorder %s35, 0
      %p182 = por %p180, %p181
      %p183 = scmp.ne.s32.totalorder %s171, %s172
      %p184 = scmp.eq.s32.totalorder %s36, 1
      %p185 = por %p183, %p184
      %p187 = scmp.ne.s32.totalorder %s172, %s186
      %p188 = scmp.eq.s32.totalorder %s36, 0
      %p189 = por %p187, %p188
      %s190 = ssub.s32 %s30, %s37
      %p191 = scmp.eq.s32.totalorder %s190, 0
      %s193 = sadd.s32 %s192, 1
      %s194 = scalar_select %p191, %s192, %s193
      %p197 = pneg %p191
      %p198 = scmp.eq.s32.totalorder %s30, 1
      %p199 = por %p197, %p198
      %p200 = scmp.ne.s32.totalorder %s192, %s195
      %p201 = scmp.eq.s32.totalorder %s30, 0
      %p202 = por %p200, %p201
      %p203 = scmp.ne.s32.totalorder %s192, %s195
      %p204 = scmp.eq.s32.totalorder %s35, 1
      %p205 = por %p203, %p204
      %p206 = scmp.ne.s32.totalorder %s195, %s196
      %p207 = scmp.eq.s32.totalorder %s35, 0
      %p208 = por %p206, %p207
      %p209 = scmp.ne.s32.totalorder %s195, %s196
      %p210 = scmp.eq.s32.totalorder %s36, 1
      %p211 = por %p209, %p210
      %p213 = scmp.ne.s32.totalorder %s196, %s212
      %p214 = scmp.eq.s32.totalorder %s36, 0
      %p215 = por %p213, %p214
      %p216 = scmp.le.s32.totalorder 1, %s30
      %p217 = scmp.lt.s32.totalorder %s30, 3
      %p218 = pnand %p216, %p217
      %p219 = pneg %p218
      // Predicated region
      $region9: #{bert_arch_forward.1} parent=5 // pred_check
        _
      $region10: #{bert_arch_forward.1} parent=5 // pred_check_branch
        %221 = sbr.rel (%p218) target = $region12
      $region11: #{bert_arch_forward.1} parent=5 // pred_region
        %s222 = ssub.s32 %s30, 1
        // Predicated region
        $region13: #{bert_arch_forward.1} parent=11 // pred_check
          %p223 = pneg %p77
        $region14: #{bert_arch_forward.1} parent=11 // pred_check_branch
          %225 = sbr.rel (%p223) target = $region16
        $region15: #{bert_arch_forward.1} parent=11 // pred_region
          %s227 = ssub.s32 36864, 36864
          %228 = vsyncadd [#allocation9], %s227
          %s229 = sshll.u32 [#allocation8], 4
          %s230 = int_to_ptr.vmem [resolvable:$true] %s229
          %235 = dma.hbm_to_vmem [thread:$0]  %s4, 36864, %s230, [#allocation9], 384, 384, 24
        $region16: #{bert_arch_forward.1} parent=11 // pred_fallthru
          _
        // Predicated region
        $region17: #{bert_arch_forward.1} parent=11 // pred_check
          %p236 = pneg %p98
        $region18: #{bert_arch_forward.1} parent=11 // pred_check_branch
          %238 = sbr.rel (%p236) target = $region20
        $region19: #{bert_arch_forward.1} parent=11 // pred_region
          %s240 = ssub.s32 96, 96
          %241 = vsyncadd [#allocation11], %s240
          %s243 = sshll.u32 [#allocation10], 4
          %s244 = int_to_ptr.vmem [resolvable:$true] %s243
          %246 = dma.hbm_to_vmem [thread:$0]  %s5, 96, %s244, [#allocation11]
        $region20: #{bert_arch_forward.1} parent=11 // pred_fallthru
          _
        // Predicated region
        $region21: #{bert_arch_forward.1} parent=11 // pred_check
          %p247 = pneg %p119
        $region22: #{bert_arch_forward.1} parent=11 // pred_check_branch
          %249 = sbr.rel (%p247) target = $region24
        $region23: #{bert_arch_forward.1} parent=11 // pred_region
          %s251 = ssub.s32 24576, 24576
          %252 = vsyncadd [#allocation11], %s251
          %s253 = sshll.u32 [#allocation12], 4
          %s254 = int_to_ptr.vmem [resolvable:$true] %s253
          %259 = dma.hbm_to_vmem [thread:$0]  %s6, 24576, %s254, [#allocation11], 256, 256, 16
        $region24: #{bert_arch_forward.1} parent=11 // pred_fallthru
          _
        // Predicated region
        $region25: #{bert_arch_forward.1} parent=11 // pred_check
          %p260 = pneg %p140
        $region26: #{bert_arch_forward.1} parent=11 // pred_check_branch
          %262 = sbr.rel (%p260) target = $region28
        $region27: #{bert_arch_forward.1} parent=11 // pred_region
          %s264 = ssub.s32 64, 64
          %265 = vsyncadd [#allocation14], %s264
          %s267 = sshll.u32 [#allocation13], 4
          %s268 = int_to_ptr.vmem [resolvable:$true] %s267
          %270 = dma.hbm_to_vmem [thread:$0]  %s7, 64, %s268, [#allocation14]
        $region28: #{bert_arch_forward.1} parent=11 // pred_fallthru
          _
        // Predicated region
        $region29: #{bert_arch_forward.1} parent=11 // pred_check
          %p271 = pneg %p161
        $region30: #{bert_arch_forward.1} parent=11 // pred_check_branch
          %273 = sbr.rel (%p271) target = $region32
        $region31: #{bert_arch_forward.1} parent=11 // pred_region
          %s275 = ssub.s32 4096, 4096
          %276 = vsyncadd [#allocation14], %s275
          %s277 = sshll.u32 [#allocation15], 4
          %s278 = int_to_ptr.vmem [resolvable:$true] %s277
          %283 = dma.hbm_to_vmem [thread:$0]  %s8, 4096, %s278, [#allocation14], 64, 64, 4
        $region32: #{bert_arch_forward.1} parent=11 // pred_fallthru
          _
        // Predicated region
        $region33: #{bert_arch_forward.1} parent=11 // pred_check
          %p284 = pneg %p182
        $region34: #{bert_arch_forward.1} parent=11 // pred_check_branch
          %286 = sbr.rel (%p284) target = $region36
        $region35: #{bert_arch_forward.1} parent=11 // pred_region
          %s288 = ssub.s32 16, 16
          %289 = vsyncadd [#allocation17], %s288
          %s291 = sshll.u32 [#allocation16], 4
          %s292 = int_to_ptr.vmem [resolvable:$true] %s291
          %294 = dma.hbm_to_vmem [thread:$0]  %s9, 16, %s292, [#allocation17]
        $region36: #{bert_arch_forward.1} parent=11 // pred_fallthru
          _
      $region12: #{bert_arch_forward.1} parent=5 // pred_fallthru
        _
      %p295 = scmp.lt.s32.totalorder %s30, 2
      // Predicated region
      $region37: #{bert_arch_forward.1} parent=5 // pred_check
        %p296 = pneg %p295
      $region38: #{bert_arch_forward.1} parent=5 // pred_check_branch
        %298 = sbr.rel (%p296) target = $region40
      $region39: #{bert_arch_forward.1} parent=5 // pred_region
        // Predicated region
        $region41: #{bert_arch_forward.1} parent=39 // pred_check
          %p299 = pneg %p50
        $region42: #{bert_arch_forward.1} parent=39 // pred_check_branch
          %301 = sbr.rel (%p299) target = $region44
        $region43: #{bert_arch_forward.1} parent=39 // pred_region
          %s302 = smul.u32 8, %s30
          %p303 = scmp.lt.s32.totalorder %s302, 15
          %s304 = scalar_select %p303, %s302, 15
          %s305 = smul.addr %s304, 8
          %s306 = scalar_lea.vmem %s2, %s305
          %s307 = smul.u32 8, %s30
        $region44: #{bert_arch_forward.1} parent=39 // pred_fallthru
          _
      $region40: #{bert_arch_forward.1} parent=5 // pred_fallthru
        _
      %p308 = scmp.le.s32.totalorder 1, %s30
      %p309 = scmp.lt.s32.totalorder %s30, 3
      %p310 = pnand %p308, %p309
      %p311 = pneg %p310
      // Predicated region
      $region45: #{bert_arch_forward.1} parent=5 // pred_check
        _
      $region46: #{bert_arch_forward.1} parent=5 // pred_check_branch
        %313 = sbr.rel (%p310) target = $region48
      $region47: #{bert_arch_forward.1} parent=5 // pred_region
        %s314 = ssub.s32 %s30, 1
        // Predicated region
        $region49: #{bert_arch_forward.1} parent=47 // pred_check
          %p315 = pneg %p77
        $region50: #{bert_arch_forward.1} parent=47 // pred_check_branch
          %317 = sbr.rel (%p315) target = $region52
        $region51: #{bert_arch_forward.1} parent=47 // pred_region
          %318 = dma.done [#allocation9], 36864
        $region52: #{bert_arch_forward.1} parent=47 // pred_fallthru
          _
        // Predicated region
        $region53: #{bert_arch_forward.1} parent=47 // pred_check
          %p319 = pneg %p98
        $region54: #{bert_arch_forward.1} parent=47 // pred_check_branch
          %321 = sbr.rel (%p319) target = $region56
        $region55: #{bert_arch_forward.1} parent=47 // pred_region
          %322 = dma.done [#allocation11], 96
        $region56: #{bert_arch_forward.1} parent=47 // pred_fallthru
          _
        // Predicated region
        $region57: #{bert_arch_forward.1} parent=47 // pred_check
          %p323 = pneg %p119
        $region58: #{bert_arch_forward.1} parent=47 // pred_check_branch
          %325 = sbr.rel (%p323) target = $region60
        $region59: #{bert_arch_forward.1} parent=47 // pred_region
          %326 = dma.done [#allocation11], 24576
        $region60: #{bert_arch_forward.1} parent=47 // pred_fallthru
          _
        // Predicated region
        $region61: #{bert_arch_forward.1} parent=47 // pred_check
          %p327 = pneg %p140
        $region62: #{bert_arch_forward.1} parent=47 // pred_check_branch
          %329 = sbr.rel (%p327) target = $region64
        $region63: #{bert_arch_forward.1} parent=47 // pred_region
          %330 = dma.done [#allocation14], 64
        $region64: #{bert_arch_forward.1} parent=47 // pred_fallthru
          _
        // Predicated region
        $region65: #{bert_arch_forward.1} parent=47 // pred_check
          %p331 = pneg %p161
        $region66: #{bert_arch_forward.1} parent=47 // pred_check_branch
          %333 = sbr.rel (%p331) target = $region68
        $region67: #{bert_arch_forward.1} parent=47 // pred_region
          %334 = dma.done [#allocation14], 4096
        $region68: #{bert_arch_forward.1} parent=47 // pred_fallthru
          _
        // Predicated region
        $region69: #{bert_arch_forward.1} parent=47 // pred_check
          %p335 = pneg %p182
        $region70: #{bert_arch_forward.1} parent=47 // pred_check_branch
          %337 = sbr.rel (%p335) target = $region72
        $region71: #{bert_arch_forward.1} parent=47 // pred_region
          %338 = dma.done [#allocation17], 16
        $region72: #{bert_arch_forward.1} parent=47 // pred_fallthru
          _
        %s339 = smul.u32 8, %s35
        %p340 = scmp.lt.s32.totalorder %s339, 15
        %s341 = scalar_select %p340, %s339, 15
        %s342 = smul.addr %s341, 8
        %s343 = scalar_lea.vmem %s2, %s342
        %p344 = pneg %p56
        %p345 = pneg %p53
        %p346 = pneg %p77
        %p347 = pneg %p74
        %p348 = pneg %p98
        %p349 = pneg %p95
        %p350 = pneg %p119
        %p351 = pneg %p116
        %p352 = pneg %p140
        %p353 = pneg %p137
        %p354 = pneg %p161
        %p355 = pneg %p158
        %p356 = pneg %p182
        %p357 = pneg %p179
        %p358 = pneg %p208
        %p359 = pneg %p205
        %s360 = smul.u32 8, %s35
        %p361 = scmp.lt.s32.totalorder %s360, 15
        %s362 = scalar_select %p361, %s360, 15
        %s363 = smul.addr %s362, 8
        %s364 = scalar_lea.vmem %s10, %s363
        %s365 = smul.u32 8, %s35
        %p366 = scmp.lt.s32.totalorder %s365, 15
        %s367 = scalar_select %p366, %s365, 15
        %s368 = smul.addr %s367, 8
        %s369 = scalar_lea.vmem %s2, %s368
        %s370 = smul.u32 8, %s35
        %s371 = smul.u32 8, %s35
        %p372 = scmp.lt.s32.totalorder %s371, 15
        %s373 = scalar_select %p372, %s371, 15
        %s374 = smul.addr %s373, 8
        %s375 = scalar_lea.vmem %s10, %s374
        %s376 = smul.u32 8, %s35
        %s378 = smul.u32 %s35, 2048
        %s379 = sld [smem:[#allocation7 + %s35]]
        %380 = vst [vmem:[#allocation4] sm:$0xff] 0.0
        %381 = vst [vmem:[#allocation4 + $0x8] sm:$0xff] 0.0
        %382 = vst [vmem:[#allocation4 + $0x10] sm:$0xff] 0.0
        %383 = vst [vmem:[#allocation4 + $0x18] sm:$0xff] 0.0
        %384 = vst [vmem:[#allocation4 + $0x20] sm:$0xff] 0.0
        %385 = vst [vmem:[#allocation4 + $0x28] sm:$0xff] 0.0
        %386 = vst [vmem:[#allocation4 + $0x30] sm:$0xff] 0.0
        %387 = vst [vmem:[#allocation4 + $0x38] sm:$0xff] 0.0
        %388 = vst [vmem:[#allocation4 + $0x40] sm:$0xff] 0.0
        %389 = vst [vmem:[#allocation4 + $0x48] sm:$0xff] 0.0
        %390 = vst [vmem:[#allocation4 + $0x50] sm:$0xff] 0.0
        %391 = vst [vmem:[#allocation4 + $0x58] sm:$0xff] 0.0
        %392 = vst [vmem:[#allocation4 + $0x60] sm:$0xff] 0.0
        %393 = vst [vmem:[#allocation4 + $0x68] sm:$0xff] 0.0
        %394 = vst [vmem:[#allocation4 + $0x70] sm:$0xff] 0.0
        %395 = vst [vmem:[#allocation4 + $0x78] sm:$0xff] 0.0
        %396 = vst [vmem:[#allocation4 + $0x80] sm:$0xff] 0.0
        %397 = vst [vmem:[#allocation4 + $0x88] sm:$0xff] 0.0
        %398 = vst [vmem:[#allocation4 + $0x90] sm:$0xff] 0.0
        %399 = vst [vmem:[#allocation4 + $0x98] sm:$0xff] 0.0
        %400 = vst [vmem:[#allocation4 + $0xa0] sm:$0xff] 0.0
        %401 = vst [vmem:[#allocation4 + $0xa8] sm:$0xff] 0.0
        %402 = vst [vmem:[#allocation4 + $0xb0] sm:$0xff] 0.0
        %403 = vst [vmem:[#allocation4 + $0xb8] sm:$0xff] 0.0
        %404 = vst [vmem:[#allocation4 + $0xc0] sm:$0xff] 0.0
        %405 = vst [vmem:[#allocation4 + $0xc8] sm:$0xff] 0.0
        %406 = vst [vmem:[#allocation4 + $0xd0] sm:$0xff] 0.0
        %407 = vst [vmem:[#allocation4 + $0xd8] sm:$0xff] 0.0
        %408 = vst [vmem:[#allocation4 + $0xe0] sm:$0xff] 0.0
        %409 = vst [vmem:[#allocation4 + $0xe8] sm:$0xff] 0.0
        %410 = vst [vmem:[#allocation4 + $0xf0] sm:$0xff] 0.0
        %411 = vst [vmem:[#allocation4 + $0xf8] sm:$0xff] 0.0
        %412 = vst [vmem:[#allocation4 + $0x100] sm:$0xff] 0.0
        %413 = vst [vmem:[#allocation4 + $0x108] sm:$0xff] 0.0
        %414 = vst [vmem:[#allocation4 + $0x110] sm:$0xff] 0.0
        %415 = vst [vmem:[#allocation4 + $0x118] sm:$0xff] 0.0
        %416 = vst [vmem:[#allocation4 + $0x120] sm:$0xff] 0.0
        %417 = vst [vmem:[#allocation4 + $0x128] sm:$0xff] 0.0
        %418 = vst [vmem:[#allocation4 + $0x130] sm:$0xff] 0.0
        %419 = vst [vmem:[#allocation4 + $0x138] sm:$0xff] 0.0
        %420 = vst [vmem:[#allocation4 + $0x140] sm:$0xff] 0.0
        %421 = vst [vmem:[#allocation4 + $0x148] sm:$0xff] 0.0
        %422 = vst [vmem:[#allocation4 + $0x150] sm:$0xff] 0.0
        %423 = vst [vmem:[#allocation4 + $0x158] sm:$0xff] 0.0
        %424 = vst [vmem:[#allocation4 + $0x160] sm:$0xff] 0.0
        %425 = vst [vmem:[#allocation4 + $0x168] sm:$0xff] 0.0
        %426 = vst [vmem:[#allocation4 + $0x170] sm:$0xff] 0.0
        %427 = vst [vmem:[#allocation4 + $0x178] sm:$0xff] 0.0
        %p428 = scmp.lt.s32.totalorder %s379, 3
        %s429 = scalar_select %p428, %s379, 3
        // While loop
        $region73: #{bert_arch_forward.1} parent=47 // loop_pre_header
          _
        $region74: #{bert_arch_forward.1} parent=47 // loop_header
          %s431 = sphi 0, %s433
          %p432 = scmp.ge.s32.totalorder %s431, %s429
        $region75: #{bert_arch_forward.1} parent=47 // loop_header_branch
          %435 = sbr.rel (%p432) target = $region79
        $region76: #{bert_arch_forward.1} parent=47 // loop_body
          loop: start=0, step=1, limit=64
          $region80: #{bert_arch_forward.1} parent=76 // loop_pre_header
            _
          $region81: #{bert_arch_forward.1} parent=76 // loop_header
            %s437 = sphi 0, %s441
            %p438 = scmp.ge.s32.totalorder %s437, 64
          $region82: #{bert_arch_forward.1} parent=76 // loop_header_branch
            %440 = sbr.rel (%p438) target = $region86
          $region83: #{bert_arch_forward.1} parent=76 // loop_body
            %s442 = smul.u32 %s437, 32
            %s443 = sadd.s32 %s378, %s442
            %s444 = sadd.s32 %s443, %s431
            %s445 = sld [smem:[#allocation6 + %s444]]
            %s446 = sshrl.u32 %s445, 3
            %s447 = sand.u32 %s445, 7
            %s448 = smul.u32 %s446, 24
            %s449 = sadd.s32 %s447, %s448
            %s450 = smul.addr %s449, 16
            %s451 = scalar_lea.hbm %s3, %s450
            %s452 = sshrl.u32 %s437, 3
            %s453 = sand.u32 %s437, 7
            %s454 = smul.u32 %s452, 24
            %s455 = sadd.s32 %s453, %s454
            %s456 = smul.u32 %s431, 192
            %s457 = sadd.s32 %s455, %s456
            %s458 = scalar_lea.vmem [#allocation2], %s457
            %s459 = scalar_lea.sflag [#allocation3], %s431
            %s461 = sshll.u32 %s458, 4
            %s462 = int_to_ptr.vmem [resolvable:$true] %s461
            %464 = dma.hbm_to_vmem [thread:$0]  %s451, 48, %s462, %s459, 128, 128, 1
          $region84: #{bert_arch_forward.1} parent=76 // loop_footer
            %s441 = sadd.s32 1, %s437
          $region85: #{bert_arch_forward.1} parent=76 // loop_footer_branch
            %436 = sbr.rel target = $region81
          $region86: #{bert_arch_forward.1} parent=76 // loop_exit
            _
        $region77: #{bert_arch_forward.1} parent=47 // loop_footer
          %s433 = sadd.s32 %s431, 1
        $region78: #{bert_arch_forward.1} parent=47 // loop_footer_branch
          %430 = sbr.rel target = $region74
        $region79: #{bert_arch_forward.1} parent=47 // loop_exit
          _
        // While loop
        $region87: #{bert_arch_forward.1} parent=47 // loop_pre_header
          _
        $region88: #{bert_arch_forward.1} parent=47 // loop_header
          %s466 = sphi 0, %s468
          %p467 = scmp.ge.s32.totalorder %s466, %s379
        $region89: #{bert_arch_forward.1} parent=47 // loop_header_branch
          %470 = sbr.rel (%p467) target = $region93
        $region90: #{bert_arch_forward.1} parent=47 // loop_body
          %s471 = sadd.s32 %s466, 3
          %p472 = scmp.lt.s32.totalorder %s471, %s379
          // Predicated region
          $region94: #{bert_arch_forward.1} parent=90 // pred_check
            %p473 = pneg %p472
          $region95: #{bert_arch_forward.1} parent=90 // pred_check_branch
            %475 = sbr.rel (%p473) target = $region97
          $region96: #{bert_arch_forward.1} parent=90 // pred_region
            %s476 = sand.u32 %s471, 3
            loop: start=0, step=1, limit=64
            $region98: #{bert_arch_forward.1} parent=96 // loop_pre_header
              _
            $region99: #{bert_arch_forward.1} parent=96 // loop_header
              %s478 = sphi 0, %s482
              %p479 = scmp.ge.s32.totalorder %s478, 64
            $region100: #{bert_arch_forward.1} parent=96 // loop_header_branch
              %481 = sbr.rel (%p479) target = $region104
            $region101: #{bert_arch_forward.1} parent=96 // loop_body
              %s483 = smul.u32 %s478, 32
              %s484 = sadd.s32 %s378, %s483
              %s485 = sadd.s32 %s484, %s471
              %s486 = sld [smem:[#allocation6 + %s485]]
              %s487 = sshrl.u32 %s486, 3
              %s488 = sand.u32 %s486, 7
              %s489 = smul.u32 %s487, 24
              %s490 = sadd.s32 %s488, %s489
              %s491 = smul.addr %s490, 16
              %s492 = scalar_lea.hbm %s3, %s491
              %s493 = sshrl.u32 %s478, 3
              %s494 = sand.u32 %s478, 7
              %s495 = smul.u32 %s493, 24
              %s496 = sadd.s32 %s494, %s495
              %s497 = smul.u32 %s476, 192
              %s498 = sadd.s32 %s496, %s497
              %s499 = scalar_lea.vmem [#allocation2], %s498
              %s500 = scalar_lea.sflag [#allocation3], %s476
              %s502 = sshll.u32 %s499, 4
              %s503 = int_to_ptr.vmem [resolvable:$true] %s502
              %505 = dma.hbm_to_vmem [thread:$0]  %s492, 48, %s503, %s500, 128, 128, 1
            $region102: #{bert_arch_forward.1} parent=96 // loop_footer
              %s482 = sadd.s32 1, %s478
            $region103: #{bert_arch_forward.1} parent=96 // loop_footer_branch
              %477 = sbr.rel target = $region99
            $region104: #{bert_arch_forward.1} parent=96 // loop_exit
              _
          $region97: #{bert_arch_forward.1} parent=90 // pred_fallthru
            _
          %s506 = sand.u32 %s466, 3
          loop: start=0, step=1, limit=64
          $region105: #{bert_arch_forward.1} parent=90 // loop_pre_header
            _
          $region106: #{bert_arch_forward.1} parent=90 // loop_header
            %s508 = sphi 0, %s512
            %p509 = scmp.ge.s32.totalorder %s508, 64
          $region107: #{bert_arch_forward.1} parent=90 // loop_header_branch
            %511 = sbr.rel (%p509) target = $region111
          $region108: #{bert_arch_forward.1} parent=90 // loop_body
            %s513 = scalar_lea.sflag [#allocation3], %s506
            %s514 = smul.u32 1, 3
            %s515 = sshll.u32 %s514, 4
            %516 = dma.done %s513, %s515
          $region109: #{bert_arch_forward.1} parent=90 // loop_footer
            %s512 = sadd.s32 1, %s508
          $region110: #{bert_arch_forward.1} parent=90 // loop_footer_branch
            %507 = sbr.rel target = $region106
          $region111: #{bert_arch_forward.1} parent=90 // loop_exit
            _
          %s517 = smul.u32 %s506, 24
          %s518 = smul.addr %s517, 8
          %s519 = scalar_lea.vmem [#allocation2], %s518
          %v520 = vld [vmem:[%s519] sm:$0xff]
          %v521 = vld [vmem:[%s519 + $0x8] sm:$0xff]
          %v522 = vld [vmem:[%s519 + $0x10] sm:$0xff]
          %v523 = vld [vmem:[%s519 + $0x18] sm:$0xff]
          %v524 = vld [vmem:[%s519 + $0x20] sm:$0xff]
          %v525 = vld [vmem:[%s519 + $0x28] sm:$0xff]
          %v526 = vld [vmem:[%s519 + $0x30] sm:$0xff]
          %v527 = vld [vmem:[%s519 + $0x38] sm:$0xff]
          %v528 = vld [vmem:[%s519 + $0x40] sm:$0xff]
          %v529 = vld [vmem:[%s519 + $0x48] sm:$0xff]
          %v530 = vld [vmem:[%s519 + $0x50] sm:$0xff]
          %v531 = vld [vmem:[%s519 + $0x58] sm:$0xff]
          %v532 = vld [vmem:[%s519 + $0x60] sm:$0xff]
          %v533 = vld [vmem:[%s519 + $0x68] sm:$0xff]
          %v534 = vld [vmem:[%s519 + $0x70] sm:$0xff]
          %v535 = vld [vmem:[%s519 + $0x78] sm:$0xff]
          %v536 = vld [vmem:[%s519 + $0x80] sm:$0xff]
          %v537 = vld [vmem:[%s519 + $0x88] sm:$0xff]
          %v538 = vld [vmem:[%s519 + $0x90] sm:$0xff]
          %v539 = vld [vmem:[%s519 + $0x98] sm:$0xff]
          %v540 = vld [vmem:[%s519 + $0xa0] sm:$0xff]
          %v541 = vld [vmem:[%s519 + $0xa8] sm:$0xff]
          %v542 = vld [vmem:[%s519 + $0xb0] sm:$0xff]
          %v543 = vld [vmem:[%s519 + $0xb8] sm:$0xff]
          %v544 = vld [vmem:[#allocation4] sm:$0xff]
          %v545 = vld [vmem:[#allocation4 + $0x8] sm:$0xff]
          %v546 = vld [vmem:[#allocation4 + $0x10] sm:$0xff]
          %v547 = vld [vmem:[#allocation4 + $0x30] sm:$0xff]
          %v548 = vld [vmem:[#allocation4 + $0x38] sm:$0xff]
          %v549 = vld [vmem:[#allocation4 + $0x40] sm:$0xff]
          %v550 = vld [vmem:[#allocation4 + $0x60] sm:$0xff]
          %v551 = vld [vmem:[#allocation4 + $0x68] sm:$0xff]
          %v552 = vld [vmem:[#allocation4 + $0x70] sm:$0xff]
          %v553 = vld [vmem:[#allocation4 + $0x90] sm:$0xff]
          %v554 = vld [vmem:[#allocation4 + $0x98] sm:$0xff]
          %v555 = vld [vmem:[#allocation4 + $0xa0] sm:$0xff]
          %v556 = vld [vmem:[#allocation4 + $0xc0] sm:$0xff]
          %v557 = vld [vmem:[#allocation4 + $0xc8] sm:$0xff]
          %v558 = vld [vmem:[#allocation4 + $0xd0] sm:$0xff]
          %v559 = vld [vmem:[#allocation4 + $0xf0] sm:$0xff]
          %v560 = vld [vmem:[#allocation4 + $0xf8] sm:$0xff]
          %v561 = vld [vmem:[#allocation4 + $0x100] sm:$0xff]
          %v562 = vld [vmem:[#allocation4 + $0x120] sm:$0xff]
          %v563 = vld [vmem:[#allocation4 + $0x128] sm:$0xff]
          %v564 = vld [vmem:[#allocation4 + $0x130] sm:$0xff]
          %v565 = vld [vmem:[#allocation4 + $0x150] sm:$0xff]
          %v566 = vld [vmem:[#allocation4 + $0x158] sm:$0xff]
          %v567 = vld [vmem:[#allocation4 + $0x160] sm:$0xff]
          %v568 = vshll.u32 %v520, 16
          %v569 = vshll.u32 %v521, 16
          %v570 = vshll.u32 %v522, 16
          %v571 = vshll.u32 %v523, 16
          %v572 = vshll.u32 %v524, 16
          %v573 = vshll.u32 %v525, 16
          %v574 = vshll.u32 %v526, 16
          %v575 = vshll.u32 %v527, 16
          %v576 = vshll.u32 %v528, 16
          %v577 = vshll.u32 %v529, 16
          %v578 = vshll.u32 %v530, 16
          %v579 = vshll.u32 %v531, 16
          %v580 = vshll.u32 %v532, 16
          %v581 = vshll.u32 %v533, 16
          %v582 = vshll.u32 %v534, 16
          %v583 = vshll.u32 %v535, 16
          %v584 = vshll.u32 %v536, 16
          %v585 = vshll.u32 %v537, 16
          %v586 = vshll.u32 %v538, 16
          %v587 = vshll.u32 %v539, 16
          %v588 = vshll.u32 %v540, 16
          %v589 = vshll.u32 %v541, 16
          %v590 = vshll.u32 %v542, 16
          %v591 = vshll.u32 %v543, 16
          %v616 = vadd.f32 %v544, %v568
          %v617 = vadd.f32 %v545, %v569
          %v618 = vadd.f32 %v546, %v570
          %v619 = vadd.f32 %v547, %v571
          %v620 = vadd.f32 %v548, %v572
          %v621 = vadd.f32 %v549, %v573
          %v622 = vadd.f32 %v550, %v574
          %v623 = vadd.f32 %v551, %v575
          %v624 = vadd.f32 %v552, %v576
          %v625 = vadd.f32 %v553, %v577
          %v626 = vadd.f32 %v554, %v578
          %v627 = vadd.f32 %v555, %v579
          %v628 = vadd.f32 %v556, %v580
          %v629 = vadd.f32 %v557, %v581
          %v630 = vadd.f32 %v558, %v582
          %v631 = vadd.f32 %v559, %v583
          %v632 = vadd.f32 %v560, %v584
          %v633 = vadd.f32 %v561, %v585
          %v634 = vadd.f32 %v562, %v586
          %v635 = vadd.f32 %v563, %v587
          %v636 = vadd.f32 %v564, %v588
          %v637 = vadd.f32 %v565, %v589
          %v638 = vadd.f32 %v566, %v590
          %v639 = vadd.f32 %v567, %v591
          %640 = vst [vmem:[#allocation4] sm:$0xff] %v616
          %641 = vst [vmem:[#allocation4 + $0x8] sm:$0xff] %v617
          %642 = vst [vmem:[#allocation4 + $0x10] sm:$0xff] %v618
          %643 = vst [vmem:[#allocation4 + $0x30] sm:$0xff] %v619
          %644 = vst [vmem:[#allocation4 + $0x38] sm:$0xff] %v620
          %645 = vst [vmem:[#allocation4 + $0x40] sm:$0xff] %v621
          %646 = vst [vmem:[#allocation4 + $0x60] sm:$0xff] %v622
          %647 = vst [vmem:[#allocation4 + $0x68] sm:$0xff] %v623
          %648 = vst [vmem:[#allocation4 + $0x70] sm:$0xff] %v624
          %649 = vst [vmem:[#allocation4 + $0x90] sm:$0xff] %v625
          %650 = vst [vmem:[#allocation4 + $0x98] sm:$0xff] %v626
          %651 = vst [vmem:[#allocation4 + $0xa0] sm:$0xff] %v627
          %652 = vst [vmem:[#allocation4 + $0xc0] sm:$0xff] %v628
          %653 = vst [vmem:[#allocation4 + $0xc8] sm:$0xff] %v629
          %654 = vst [vmem:[#allocation4 + $0xd0] sm:$0xff] %v630
          %655 = vst [vmem:[#allocation4 + $0xf0] sm:$0xff] %v631
          %656 = vst [vmem:[#allocation4 + $0xf8] sm:$0xff] %v632
          %657 = vst [vmem:[#allocation4 + $0x100] sm:$0xff] %v633
          %658 = vst [vmem:[#allocation4 + $0x120] sm:$0xff] %v634
          %659 = vst [vmem:[#allocation4 + $0x128] sm:$0xff] %v635
          %660 = vst [vmem:[#allocation4 + $0x130] sm:$0xff] %v636
          %661 = vst [vmem:[#allocation4 + $0x150] sm:$0xff] %v637
          %662 = vst [vmem:[#allocation4 + $0x158] sm:$0xff] %v638
          %663 = vst [vmem:[#allocation4 + $0x160] sm:$0xff] %v639
          %v664 = vld [vmem:[#allocation4 + $0x18] sm:$0xff]
          %v665 = vld [vmem:[#allocation4 + $0x20] sm:$0xff]
          %v666 = vld [vmem:[#allocation4 + $0x28] sm:$0xff]
          %v667 = vld [vmem:[#allocation4 + $0x48] sm:$0xff]
          %v668 = vld [vmem:[#allocation4 + $0x50] sm:$0xff]
          %v669 = vld [vmem:[#allocation4 + $0x58] sm:$0xff]
          %v670 = vld [vmem:[#allocation4 + $0x78] sm:$0xff]
          %v671 = vld [vmem:[#allocation4 + $0x80] sm:$0xff]
          %v672 = vld [vmem:[#allocation4 + $0x88] sm:$0xff]
          %v673 = vld [vmem:[#allocation4 + $0xa8] sm:$0xff]
          %v674 = vld [vmem:[#allocation4 + $0xb0] sm:$0xff]
          %v675 = vld [vmem:[#allocation4 + $0xb8] sm:$0xff]
          %v676 = vld [vmem:[#allocation4 + $0xd8] sm:$0xff]
          %v677 = vld [vmem:[#allocation4 + $0xe0] sm:$0xff]
          %v678 = vld [vmem:[#allocation4 + $0xe8] sm:$0xff]
          %v679 = vld [vmem:[#allocation4 + $0x108] sm:$0xff]
          %v680 = vld [vmem:[#allocation4 + $0x110] sm:$0xff]
          %v681 = vld [vmem:[#allocation4 + $0x118] sm:$0xff]
          %v682 = vld [vmem:[#allocation4 + $0x138] sm:$0xff]
          %v683 = vld [vmem:[#allocation4 + $0x140] sm:$0xff]
          %v684 = vld [vmem:[#allocation4 + $0x148] sm:$0xff]
          %v685 = vld [vmem:[#allocation4 + $0x168] sm:$0xff]
          %v686 = vld [vmem:[#allocation4 + $0x170] sm:$0xff]
          %v687 = vld [vmem:[#allocation4 + $0x178] sm:$0xff]
          %v688 = vand.u32 %v520, 4294901760
          %v689 = vand.u32 %v521, 4294901760
          %v690 = vand.u32 %v522, 4294901760
          %v691 = vand.u32 %v523, 4294901760
          %v692 = vand.u32 %v524, 4294901760
          %v693 = vand.u32 %v525, 4294901760
          %v694 = vand.u32 %v526, 4294901760
          %v695 = vand.u32 %v527, 4294901760
          %v696 = vand.u32 %v528, 4294901760
          %v697 = vand.u32 %v529, 4294901760
          %v698 = vand.u32 %v530, 4294901760
          %v699 = vand.u32 %v531, 4294901760
          %v700 = vand.u32 %v532, 4294901760
          %v701 = vand.u32 %v533, 4294901760
          %v702 = vand.u32 %v534, 4294901760
          %v703 = vand.u32 %v535, 4294901760
          %v704 = vand.u32 %v536, 4294901760
          %v705 = vand.u32 %v537, 4294901760
          %v706 = vand.u32 %v538, 4294901760
          %v707 = vand.u32 %v539, 4294901760
          %v708 = vand.u32 %v540, 4294901760
          %v709 = vand.u32 %v541, 4294901760
          %v710 = vand.u32 %v542, 4294901760
          %v711 = vand.u32 %v543, 4294901760
          %v736 = vadd.f32 %v664, %v688
          %v737 = vadd.f32 %v665, %v689
          %v738 = vadd.f32 %v666, %v690
          %v739 = vadd.f32 %v667, %v691
          %v740 = vadd.f32 %v668, %v692
          %v741 = vadd.f32 %v669, %v693
          %v742 = vadd.f32 %v670, %v694
          %v743 = vadd.f32 %v671, %v695
          %v744 = vadd.f32 %v672, %v696
          %v745 = vadd.f32 %v673, %v697
          %v746 = vadd.f32 %v674, %v698
          %v747 = vadd.f32 %v675, %v699
          %v748 = vadd.f32 %v676, %v700
          %v749 = vadd.f32 %v677, %v701
          %v750 = vadd.f32 %v678, %v702
          %v751 = vadd.f32 %v679, %v703
          %v752 = vadd.f32 %v680, %v704
          %v753 = vadd.f32 %v681, %v705
          %v754 = vadd.f32 %v682, %v706
          %v755 = vadd.f32 %v683, %v707
          %v756 = vadd.f32 %v684, %v708
          %v757 = vadd.f32 %v685, %v709
          %v758 = vadd.f32 %v686, %v710
          %v759 = vadd.f32 %v687, %v711
          %760 = vst [vmem:[#allocation4 + $0x18] sm:$0xff] %v736
          %761 = vst [vmem:[#allocation4 + $0x20] sm:$0xff] %v737
          %762 = vst [vmem:[#allocation4 + $0x28] sm:$0xff] %v738
          %763 = vst [vmem:[#allocation4 + $0x48] sm:$0xff] %v739
          %764 = vst [vmem:[#allocation4 + $0x50] sm:$0xff] %v740
          %765 = vst [vmem:[#allocation4 + $0x58] sm:$0xff] %v741
          %766 = vst [vmem:[#allocation4 + $0x78] sm:$0xff] %v742
          %767 = vst [vmem:[#allocation4 + $0x80] sm:$0xff] %v743
          %768 = vst [vmem:[#allocation4 + $0x88] sm:$0xff] %v744
          %769 = vst [vmem:[#allocation4 + $0xa8] sm:$0xff] %v745
          %770 = vst [vmem:[#allocation4 + $0xb0] sm:$0xff] %v746
          %771 = vst [vmem:[#allocation4 + $0xb8] sm:$0xff] %v747
          %772 = vst [vmem:[#allocation4 + $0xd8] sm:$0xff] %v748
          %773 = vst [vmem:[#allocation4 + $0xe0] sm:$0xff] %v749
          %774 = vst [vmem:[#allocation4 + $0xe8] sm:$0xff] %v750
          %775 = vst [vmem:[#allocation4 + $0x108] sm:$0xff] %v751
          %776 = vst [vmem:[#allocation4 + $0x110] sm:$0xff] %v752
          %777 = vst [vmem:[#allocation4 + $0x118] sm:$0xff] %v753
          %778 = vst [vmem:[#allocation4 + $0x138] sm:$0xff] %v754
          %779 = vst [vmem:[#allocation4 + $0x140] sm:$0xff] %v755
          %780 = vst [vmem:[#allocation4 + $0x148] sm:$0xff] %v756
          %781 = vst [vmem:[#allocation4 + $0x168] sm:$0xff] %v757
          %782 = vst [vmem:[#allocation4 + $0x170] sm:$0xff] %v758
          %783 = vst [vmem:[#allocation4 + $0x178] sm:$0xff] %v759
        $region91: #{bert_arch_forward.1} parent=47 // loop_footer
          %s468 = sadd.s32 %s466, 1
        $region92: #{bert_arch_forward.1} parent=47 // loop_footer_branch
          %465 = sbr.rel target = $region88
        $region93: #{bert_arch_forward.1} parent=47 // loop_exit
          _
        %v784 = vld [vmem:[#allocation4] sm:$0xff]
        %v785 = vld [vmem:[#allocation4 + $0x8] sm:$0xff]
        %v786 = vld [vmem:[#allocation4 + $0x10] sm:$0xff]
        %v787 = vld [vmem:[#allocation4 + $0x18] sm:$0xff]
        %v788 = vld [vmem:[#allocation4 + $0x20] sm:$0xff]
        %v789 = vld [vmem:[#allocation4 + $0x28] sm:$0xff]
        %v790 = vld [vmem:[#allocation4 + $0x30] sm:$0xff]
        %v791 = vld [vmem:[#allocation4 + $0x38] sm:$0xff]
        %v792 = vld [vmem:[#allocation4 + $0x40] sm:$0xff]
        %v793 = vld [vmem:[#allocation4 + $0x48] sm:$0xff]
        %v794 = vld [vmem:[#allocation4 + $0x50] sm:$0xff]
        %v795 = vld [vmem:[#allocation4 + $0x58] sm:$0xff]
        %v796 = vld [vmem:[#allocation4 + $0x60] sm:$0xff]
        %v797 = vld [vmem:[#allocation4 + $0x68] sm:$0xff]
        %v798 = vld [vmem:[#allocation4 + $0x70] sm:$0xff]
        %v799 = vld [vmem:[#allocation4 + $0x78] sm:$0xff]
        %v800 = vld [vmem:[#allocation4 + $0x80] sm:$0xff]
        %v801 = vld [vmem:[#allocation4 + $0x88] sm:$0xff]
        %v802 = vld [vmem:[#allocation4 + $0x90] sm:$0xff]
        %v803 = vld [vmem:[#allocation4 + $0x98] sm:$0xff]
        %v804 = vld [vmem:[#allocation4 + $0xa0] sm:$0xff]
        %v805 = vld [vmem:[#allocation4 + $0xa8] sm:$0xff]
        %v806 = vld [vmem:[#allocation4 + $0xb0] sm:$0xff]
        %v807 = vld [vmem:[#allocation4 + $0xb8] sm:$0xff]
        %v808 = vld [vmem:[#allocation4 + $0xc0] sm:$0xff]
        %v809 = vld [vmem:[#allocation4 + $0xc8] sm:$0xff]
        %v810 = vld [vmem:[#allocation4 + $0xd0] sm:$0xff]
        %v811 = vld [vmem:[#allocation4 + $0xd8] sm:$0xff]
        %v812 = vld [vmem:[#allocation4 + $0xe0] sm:$0xff]
        %v813 = vld [vmem:[#allocation4 + $0xe8] sm:$0xff]
        %v814 = vld [vmem:[#allocation4 + $0xf0] sm:$0xff]
        %v815 = vld [vmem:[#allocation4 + $0xf8] sm:$0xff]
        %v816 = vld [vmem:[#allocation4 + $0x100] sm:$0xff]
        %v817 = vld [vmem:[#allocation4 + $0x108] sm:$0xff]
        %v818 = vld [vmem:[#allocation4 + $0x110] sm:$0xff]
        %v819 = vld [vmem:[#allocation4 + $0x118] sm:$0xff]
        %v820 = vld [vmem:[#allocation4 + $0x120] sm:$0xff]
        %v821 = vld [vmem:[#allocation4 + $0x128] sm:$0xff]
        %v822 = vld [vmem:[#allocation4 + $0x130] sm:$0xff]
        %v823 = vld [vmem:[#allocation4 + $0x138] sm:$0xff]
        %v824 = vld [vmem:[#allocation4 + $0x140] sm:$0xff]
        %v825 = vld [vmem:[#allocation4 + $0x148] sm:$0xff]
        %v826 = vld [vmem:[#allocation4 + $0x150] sm:$0xff]
        %v827 = vld [vmem:[#allocation4 + $0x158] sm:$0xff]
        %v828 = vld [vmem:[#allocation4 + $0x160] sm:$0xff]
        %v829 = vld [vmem:[#allocation4 + $0x168] sm:$0xff]
        %v830 = vld [vmem:[#allocation4 + $0x170] sm:$0xff]
        %v831 = vld [vmem:[#allocation4 + $0x178] sm:$0xff]
        %v832 = vld [vmem:[%s369] sm:$0xff]
        %v833 = vld [vmem:[%s369 + $0x8] sm:$0xff]
        %v834 = vld [vmem:[%s369 + $0x10] sm:$0xff]
        %v835 = vld [vmem:[%s369 + $0x18] sm:$0xff]
        %v836 = vld [vmem:[%s369 + $0x20] sm:$0xff]
        %v837 = vld [vmem:[%s369 + $0x28] sm:$0xff]
        %v838 = vld [vmem:[%s369 + $0x30] sm:$0xff]
        %v839 = vld [vmem:[%s369 + $0x38] sm:$0xff]
        %841 = vset.pattern.permute.xlu0 0
        %842 = vperm.xlu0 %841, %v832
        %v843 = vpop.permute.xlu0 %842
        %846 = vset.pattern.permute.xlu0 0
        %847 = vperm.xlu0 %846, %v833
        %v848 = vpop.permute.xlu0 %847
        %851 = vset.pattern.permute.xlu0 0
        %852 = vperm.xlu0 %851, %v834
        %v853 = vpop.permute.xlu0 %852
        %856 = vset.pattern.permute.xlu0 0
        %857 = vperm.xlu0 %856, %v835
        %v858 = vpop.permute.xlu0 %857
        %861 = vset.pattern.permute.xlu0 0
        %862 = vperm.xlu0 %861, %v836
        %v863 = vpop.permute.xlu0 %862
        %866 = vset.pattern.permute.xlu0 0
        %867 = vperm.xlu0 %866, %v837
        %v868 = vpop.permute.xlu0 %867
        %871 = vset.pattern.permute.xlu0 0
        %872 = vperm.xlu0 %871, %v838
        %v873 = vpop.permute.xlu0 %872
        %876 = vset.pattern.permute.xlu0 0
        %877 = vperm.xlu0 %876, %v839
        %v878 = vpop.permute.xlu0 %877
        %v880 = vmul.f32 %v784, %v843
        %v881 = vmul.f32 %v785, %v843
        %v882 = vmul.f32 %v786, %v843
        %v883 = vmul.f32 %v787, %v843
        %v884 = vmul.f32 %v788, %v843
        %v885 = vmul.f32 %v789, %v843
        %v886 = vmul.f32 %v790, %v848
        %v887 = vmul.f32 %v791, %v848
        %v888 = vmul.f32 %v792, %v848
        %v889 = vmul.f32 %v793, %v848
        %v890 = vmul.f32 %v794, %v848
        %v891 = vmul.f32 %v795, %v848
        %v892 = vmul.f32 %v796, %v853
        %v893 = vmul.f32 %v797, %v853
        %v894 = vmul.f32 %v798, %v853
        %v895 = vmul.f32 %v799, %v853
        %v896 = vmul.f32 %v800, %v853
        %v897 = vmul.f32 %v801, %v853
        %v898 = vmul.f32 %v802, %v858
        %v899 = vmul.f32 %v803, %v858
        %v900 = vmul.f32 %v804, %v858
        %v901 = vmul.f32 %v805, %v858
        %v902 = vmul.f32 %v806, %v858
        %v903 = vmul.f32 %v807, %v858
        %v904 = vmul.f32 %v808, %v863
        %v905 = vmul.f32 %v809, %v863
        %v906 = vmul.f32 %v810, %v863
        %v907 = vmul.f32 %v811, %v863
        %v908 = vmul.f32 %v812, %v863
        %v909 = vmul.f32 %v813, %v863
        %v910 = vmul.f32 %v814, %v868
        %v911 = vmul.f32 %v815, %v868
        %v912 = vmul.f32 %v816, %v868
        %v913 = vmul.f32 %v817, %v868
        %v914 = vmul.f32 %v818, %v868
        %v915 = vmul.f32 %v819, %v868
        %v916 = vmul.f32 %v820, %v873
        %v917 = vmul.f32 %v821, %v873
        %v918 = vmul.f32 %v822, %v873
        %v919 = vmul.f32 %v823, %v873
        %v920 = vmul.f32 %v824, %v873
        %v921 = vmul.f32 %v825, %v873
        %v922 = vmul.f32 %v826, %v878
        %v923 = vmul.f32 %v827, %v878
        %v924 = vmul.f32 %v828, %v878
        %v925 = vmul.f32 %v829, %v878
        %v926 = vmul.f32 %v830, %v878
        %v927 = vmul.f32 %v831, %v878
        %v928 = vpack.c.bf16 %v886, %v880
        %v929 = vpack.c.bf16 %v887, %v881
        %v930 = vpack.c.bf16 %v888, %v882
        %v931 = vpack.c.bf16 %v889, %v883
        %v932 = vpack.c.bf16 %v890, %v884
        %v933 = vpack.c.bf16 %v891, %v885
        %v934 = vpack.c.bf16 %v898, %v892
        %v935 = vpack.c.bf16 %v899, %v893
        %v936 = vpack.c.bf16 %v900, %v894
        %v937 = vpack.c.bf16 %v901, %v895
        %v938 = vpack.c.bf16 %v902, %v896
        %v939 = vpack.c.bf16 %v903, %v897
        %v940 = vpack.c.bf16 %v910, %v904
        %v941 = vpack.c.bf16 %v911, %v905
        %v942 = vpack.c.bf16 %v912, %v906
        %v943 = vpack.c.bf16 %v913, %v907
        %v944 = vpack.c.bf16 %v914, %v908
        %v945 = vpack.c.bf16 %v915, %v909
        %v946 = vpack.c.bf16 %v922, %v916
        %v947 = vpack.c.bf16 %v923, %v917
        %v948 = vpack.c.bf16 %v924, %v918
        %v949 = vpack.c.bf16 %v925, %v919
        %v950 = vpack.c.bf16 %v926, %v920
        %v951 = vpack.c.bf16 %v927, %v921
        %v952 = vld [vmem:[#allocation8] sm:$0xff]
        %v953 = vld [vmem:[#allocation8 + $0x8] sm:$0xff]
        %v954 = vld [vmem:[#allocation8 + $0x10] sm:$0xff]
        %v955 = vld [vmem:[#allocation8 + $0x18] sm:$0xff]
        %v956 = vld [vmem:[#allocation8 + $0x20] sm:$0xff]
        %v957 = vld [vmem:[#allocation8 + $0x28] sm:$0xff]
        %v958 = vld [vmem:[#allocation8 + $0x30] sm:$0xff]
        %v959 = vld [vmem:[#allocation8 + $0x38] sm:$0xff]
        %v960 = vld [vmem:[#allocation8 + $0x40] sm:$0xff]
        %v961 = vld [vmem:[#allocation8 + $0x48] sm:$0xff]
        %v962 = vld [vmem:[#allocation8 + $0x50] sm:$0xff]
        %v963 = vld [vmem:[#allocation8 + $0x58] sm:$0xff]
        %v964 = vld [vmem:[#allocation8 + $0x60] sm:$0xff]
        %v965 = vld [vmem:[#allocation8 + $0x68] sm:$0xff]
        %v966 = vld [vmem:[#allocation8 + $0x70] sm:$0xff]
        %v967 = vld [vmem:[#allocation8 + $0x78] sm:$0xff]
        %v968 = vld [vmem:[#allocation8 + $0x80] sm:$0xff]
        %v969 = vld [vmem:[#allocation8 + $0x88] sm:$0xff]
        %v970 = vld [vmem:[#allocation8 + $0x90] sm:$0xff]
        %v971 = vld [vmem:[#allocation8 + $0x98] sm:$0xff]
        %v972 = vld [vmem:[#allocation8 + $0xa0] sm:$0xff]
        %v973 = vld [vmem:[#allocation8 + $0xa8] sm:$0xff]
        %v974 = vld [vmem:[#allocation8 + $0xb0] sm:$0xff]
        %v975 = vld [vmem:[#allocation8 + $0xb8] sm:$0xff]
        %v976 = vld [vmem:[#allocation8 + $0xc0] sm:$0xff]
        %v977 = vld [vmem:[#allocation8 + $0xc8] sm:$0xff]
        %v978 = vld [vmem:[#allocation8 + $0xd0] sm:$0xff]
        %v979 = vld [vmem:[#allocation8 + $0xd8] sm:$0xff]
        %v980 = vld [vmem:[#allocation8 + $0xe0] sm:$0xff]
        %v981 = vld [vmem:[#allocation8 + $0xe8] sm:$0xff]
        %v982 = vld [vmem:[#allocation8 + $0xf0] sm:$0xff]
        %v983 = vld [vmem:[#allocation8 + $0xf8] sm:$0xff]
        %v984 = vld [vmem:[#allocation8 + $0x100] sm:$0xff]
        %v985 = vld [vmem:[#allocation8 + $0x108] sm:$0xff]
        %v986 = vld [vmem:[#allocation8 + $0x110] sm:$0xff]
        %v987 = vld [vmem:[#allocation8 + $0x118] sm:$0xff]
        %v988 = vld [vmem:[#allocation8 + $0x120] sm:$0xff]
        %v989 = vld [vmem:[#allocation8 + $0x128] sm:$0xff]
        %v990 = vld [vmem:[#allocation8 + $0x130] sm:$0xff]
        %v991 = vld [vmem:[#allocation8 + $0x138] sm:$0xff]
        %v992 = vld [vmem:[#allocation8 + $0x140] sm:$0xff]
        %v993 = vld [vmem:[#allocation8 + $0x148] sm:$0xff]
        %v994 = vld [vmem:[#allocation8 + $0x150] sm:$0xff]
        %v995 = vld [vmem:[#allocation8 + $0x158] sm:$0xff]
        %v996 = vld [vmem:[#allocation8 + $0x160] sm:$0xff]
        %v997 = vld [vmem:[#allocation8 + $0x168] sm:$0xff]
        %v998 = vld [vmem:[#allocation8 + $0x170] sm:$0xff]
        %v999 = vld [vmem:[#allocation8 + $0x178] sm:$0xff]
        %v1000 = vld [vmem:[#allocation8 + $0x180] sm:$0xff]
        %v1001 = vld [vmem:[#allocation8 + $0x188] sm:$0xff]
        %v1002 = vld [vmem:[#allocation8 + $0x190] sm:$0xff]
        %v1003 = vld [vmem:[#allocation8 + $0x198] sm:$0xff]
        %v1004 = vld [vmem:[#allocation8 + $0x1a0] sm:$0xff]
        %v1005 = vld [vmem:[#allocation8 + $0x1a8] sm:$0xff]
        %v1006 = vld [vmem:[#allocation8 + $0x1b0] sm:$0xff]
        %v1007 = vld [vmem:[#allocation8 + $0x1b8] sm:$0xff]
        %v1008 = vld [vmem:[#allocation8 + $0x1c0] sm:$0xff]
        %v1009 = vld [vmem:[#allocation8 + $0x1c8] sm:$0xff]
        %v1010 = vld [vmem:[#allocation8 + $0x1d0] sm:$0xff]
        %v1011 = vld [vmem:[#allocation8 + $0x1d8] sm:$0xff]
        %v1012 = vld [vmem:[#allocation8 + $0x1e0] sm:$0xff]
        %v1013 = vld [vmem:[#allocation8 + $0x1e8] sm:$0xff]
        %v1014 = vld [vmem:[#allocation8 + $0x1f0] sm:$0xff]
        %v1015 = vld [vmem:[#allocation8 + $0x1f8] sm:$0xff]
        %v1016 = vld [vmem:[#allocation8 + $0x200] sm:$0xff]
        %v1017 = vld [vmem:[#allocation8 + $0x208] sm:$0xff]
        %v1018 = vld [vmem:[#allocation8 + $0x210] sm:$0xff]
        %v1019 = vld [vmem:[#allocation8 + $0x218] sm:$0xff]
        %v1020 = vld [vmem:[#allocation8 + $0x220] sm:$0xff]
        %v1021 = vld [vmem:[#allocation8 + $0x228] sm:$0xff]
        %v1022 = vld [vmem:[#allocation8 + $0x230] sm:$0xff]
        %v1023 = vld [vmem:[#allocation8 + $0x238] sm:$0xff]
        %v1024 = vld [vmem:[#allocation8 + $0x240] sm:$0xff]
        %v1025 = vld [vmem:[#allocation8 + $0x248] sm:$0xff]
        %v1026 = vld [vmem:[#allocation8 + $0x250] sm:$0xff]
        %v1027 = vld [vmem:[#allocation8 + $0x258] sm:$0xff]
        %v1028 = vld [vmem:[#allocation8 + $0x260] sm:$0xff]
        %v1029 = vld [vmem:[#allocation8 + $0x268] sm:$0xff]
        %v1030 = vld [vmem:[#allocation8 + $0x270] sm:$0xff]
        %v1031 = vld [vmem:[#allocation8 + $0x278] sm:$0xff]
        %v1032 = vld [vmem:[#allocation8 + $0x280] sm:$0xff]
        %v1033 = vld [vmem:[#allocation8 + $0x288] sm:$0xff]
        %v1034 = vld [vmem:[#allocation8 + $0x290] sm:$0xff]
        %v1035 = vld [vmem:[#allocation8 + $0x298] sm:$0xff]
        %v1036 = vld [vmem:[#allocation8 + $0x2a0] sm:$0xff]
        %v1037 = vld [vmem:[#allocation8 + $0x2a8] sm:$0xff]
        %v1038 = vld [vmem:[#allocation8 + $0x2b0] sm:$0xff]
        %v1039 = vld [vmem:[#allocation8 + $0x2b8] sm:$0xff]
        %v1040 = vld [vmem:[#allocation8 + $0x2c0] sm:$0xff]
        %v1041 = vld [vmem:[#allocation8 + $0x2c8] sm:$0xff]
        %v1042 = vld [vmem:[#allocation8 + $0x2d0] sm:$0xff]
        %v1043 = vld [vmem:[#allocation8 + $0x2d8] sm:$0xff]
        %v1044 = vld [vmem:[#allocation8 + $0x2e0] sm:$0xff]
        %v1045 = vld [vmem:[#allocation8 + $0x2e8] sm:$0xff]
        %v1046 = vld [vmem:[#allocation8 + $0x2f0] sm:$0xff]
        %v1047 = vld [vmem:[#allocation8 + $0x2f8] sm:$0xff]
        %v1048 = vld [vmem:[#allocation8 + $0x300] sm:$0xff]
        %v1049 = vld [vmem:[#allocation8 + $0x308] sm:$0xff]
        %v1050 = vld [vmem:[#allocation8 + $0x310] sm:$0xff]
        %v1051 = vld [vmem:[#allocation8 + $0x318] sm:$0xff]
        %v1052 = vld [vmem:[#allocation8 + $0x320] sm:$0xff]
        %v1053 = vld [vmem:[#allocation8 + $0x328] sm:$0xff]
        %v1054 = vld [vmem:[#allocation8 + $0x330] sm:$0xff]
        %v1055 = vld [vmem:[#allocation8 + $0x338] sm:$0xff]
        %v1056 = vld [vmem:[#allocation8 + $0x340] sm:$0xff]
        %v1057 = vld [vmem:[#allocation8 + $0x348] sm:$0xff]
        %v1058 = vld [vmem:[#allocation8 + $0x350] sm:$0xff]
        %v1059 = vld [vmem:[#allocation8 + $0x358] sm:$0xff]
        %v1060 = vld [vmem:[#allocation8 + $0x360] sm:$0xff]
        %v1061 = vld [vmem:[#allocation8 + $0x368] sm:$0xff]
        %v1062 = vld [vmem:[#allocation8 + $0x370] sm:$0xff]
        %v1063 = vld [vmem:[#allocation8 + $0x378] sm:$0xff]
        %v1064 = vld [vmem:[#allocation8 + $0x380] sm:$0xff]
        %v1065 = vld [vmem:[#allocation8 + $0x388] sm:$0xff]
        %v1066 = vld [vmem:[#allocation8 + $0x390] sm:$0xff]
        %v1067 = vld [vmem:[#allocation8 + $0x398] sm:$0xff]
        %v1068 = vld [vmem:[#allocation8 + $0x3a0] sm:$0xff]
        %v1069 = vld [vmem:[#allocation8 + $0x3a8] sm:$0xff]
        %v1070 = vld [vmem:[#allocation8 + $0x3b0] sm:$0xff]
        %v1071 = vld [vmem:[#allocation8 + $0x3b8] sm:$0xff]
        %v1072 = vld [vmem:[#allocation8 + $0x3c0] sm:$0xff]
        %v1073 = vld [vmem:[#allocation8 + $0x3c8] sm:$0xff]
        %v1074 = vld [vmem:[#allocation8 + $0x3d0] sm:$0xff]
        %v1075 = vld [vmem:[#allocation8 + $0x3d8] sm:$0xff]
        %v1076 = vld [vmem:[#allocation8 + $0x3e0] sm:$0xff]
        %v1077 = vld [vmem:[#allocation8 + $0x3e8] sm:$0xff]
        %v1078 = vld [vmem:[#allocation8 + $0x3f0] sm:$0xff]
        %v1079 = vld [vmem:[#allocation8 + $0x3f8] sm:$0xff]
        %v1080 = vld [vmem:[#allocation8 + $0x400] sm:$0xff]
        %v1081 = vld [vmem:[#allocation8 + $0x408] sm:$0xff]
        %v1082 = vld [vmem:[#allocation8 + $0x410] sm:$0xff]
        %v1083 = vld [vmem:[#allocation8 + $0x418] sm:$0xff]
        %v1084 = vld [vmem:[#allocation8 + $0x420] sm:$0xff]
        %v1085 = vld [vmem:[#allocation8 + $0x428] sm:$0xff]
        %v1086 = vld [vmem:[#allocation8 + $0x430] sm:$0xff]
        %v1087 = vld [vmem:[#allocation8 + $0x438] sm:$0xff]
        %v1088 = vld [vmem:[#allocation8 + $0x440] sm:$0xff]
        %v1089 = vld [vmem:[#allocation8 + $0x448] sm:$0xff]
        %v1090 = vld [vmem:[#allocation8 + $0x450] sm:$0xff]
        %v1091 = vld [vmem:[#allocation8 + $0x458] sm:$0xff]
        %v1092 = vld [vmem:[#allocation8 + $0x460] sm:$0xff]
        %v1093 = vld [vmem:[#allocation8 + $0x468] sm:$0xff]
        %v1094 = vld [vmem:[#allocation8 + $0x470] sm:$0xff]
        %v1095 = vld [vmem:[#allocation8 + $0x478] sm:$0xff]
        %v1096 = vld [vmem:[#allocation8 + $0x480] sm:$0xff]
        %v1097 = vld [vmem:[#allocation8 + $0x488] sm:$0xff]
        %v1098 = vld [vmem:[#allocation8 + $0x490] sm:$0xff]
        %v1099 = vld [vmem:[#allocation8 + $0x498] sm:$0xff]
        %v1100 = vld [vmem:[#allocation8 + $0x4a0] sm:$0xff]
        %v1101 = vld [vmem:[#allocation8 + $0x4a8] sm:$0xff]
        %v1102 = vld [vmem:[#allocation8 + $0x4b0] sm:$0xff]
        %v1103 = vld [vmem:[#allocation8 + $0x4b8] sm:$0xff]
        %v1104 = vld [vmem:[#allocation8 + $0x4c0] sm:$0xff]
        %v1105 = vld [vmem:[#allocation8 + $0x4c8] sm:$0xff]
        %v1106 = vld [vmem:[#allocation8 + $0x4d0] sm:$0xff]
        %v1107 = vld [vmem:[#allocation8 + $0x4d8] sm:$0xff]
        %v1108 = vld [vmem:[#allocation8 + $0x4e0] sm:$0xff]
        %v1109 = vld [vmem:[#allocation8 + $0x4e8] sm:$0xff]
        %v1110 = vld [vmem:[#allocation8 + $0x4f0] sm:$0xff]
        %v1111 = vld [vmem:[#allocation8 + $0x4f8] sm:$0xff]
        %v1112 = vld [vmem:[#allocation8 + $0x500] sm:$0xff]
        %v1113 = vld [vmem:[#allocation8 + $0x508] sm:$0xff]
        %v1114 = vld [vmem:[#allocation8 + $0x510] sm:$0xff]
        %v1115 = vld [vmem:[#allocation8 + $0x518] sm:$0xff]
        %v1116 = vld [vmem:[#allocation8 + $0x520] sm:$0xff]
        %v1117 = vld [vmem:[#allocation8 + $0x528] sm:$0xff]
        %v1118 = vld [vmem:[#allocation8 + $0x530] sm:$0xff]
        %v1119 = vld [vmem:[#allocation8 + $0x538] sm:$0xff]
        %v1120 = vld [vmem:[#allocation8 + $0x540] sm:$0xff]
        %v1121 = vld [vmem:[#allocation8 + $0x548] sm:$0xff]
        %v1122 = vld [vmem:[#allocation8 + $0x550] sm:$0xff]
        %v1123 = vld [vmem:[#allocation8 + $0x558] sm:$0xff]
        %v1124 = vld [vmem:[#allocation8 + $0x560] sm:$0xff]
        %v1125 = vld [vmem:[#allocation8 + $0x568] sm:$0xff]
        %v1126 = vld [vmem:[#allocation8 + $0x570] sm:$0xff]
        %v1127 = vld [vmem:[#allocation8 + $0x578] sm:$0xff]
        %v1128 = vld [vmem:[#allocation8 + $0x580] sm:$0xff]
        %v1129 = vld [vmem:[#allocation8 + $0x588] sm:$0xff]
        %v1130 = vld [vmem:[#allocation8 + $0x590] sm:$0xff]
        %v1131 = vld [vmem:[#allocation8 + $0x598] sm:$0xff]
        %v1132 = vld [vmem:[#allocation8 + $0x5a0] sm:$0xff]
        %v1133 = vld [vmem:[#allocation8 + $0x5a8] sm:$0xff]
        %v1134 = vld [vmem:[#allocation8 + $0x5b0] sm:$0xff]
        %v1135 = vld [vmem:[#allocation8 + $0x5b8] sm:$0xff]
        %v1136 = vld [vmem:[#allocation8 + $0x5c0] sm:$0xff]
        %v1137 = vld [vmem:[#allocation8 + $0x5c8] sm:$0xff]
        %v1138 = vld [vmem:[#allocation8 + $0x5d0] sm:$0xff]
        %v1139 = vld [vmem:[#allocation8 + $0x5d8] sm:$0xff]
        %v1140 = vld [vmem:[#allocation8 + $0x5e0] sm:$0xff]
        %v1141 = vld [vmem:[#allocation8 + $0x5e8] sm:$0xff]
        %v1142 = vld [vmem:[#allocation8 + $0x5f0] sm:$0xff]
        %v1143 = vld [vmem:[#allocation8 + $0x5f8] sm:$0xff]
        %v1144 = vld [vmem:[#allocation8 + $0x600] sm:$0xff]
        %v1145 = vld [vmem:[#allocation8 + $0x608] sm:$0xff]
        %v1146 = vld [vmem:[#allocation8 + $0x610] sm:$0xff]
        %v1147 = vld [vmem:[#allocation8 + $0x618] sm:$0xff]
        %v1148 = vld [vmem:[#allocation8 + $0x620] sm:$0xff]
        %v1149 = vld [vmem:[#allocation8 + $0x628] sm:$0xff]
        %v1150 = vld [vmem:[#allocation8 + $0x630] sm:$0xff]
        %v1151 = vld [vmem:[#allocation8 + $0x638] sm:$0xff]
        %v1152 = vld [vmem:[#allocation8 + $0x640] sm:$0xff]
        %v1153 = vld [vmem:[#allocation8 + $0x648] sm:$0xff]
        %v1154 = vld [vmem:[#allocation8 + $0x650] sm:$0xff]
        %v1155 = vld [vmem:[#allocation8 + $0x658] sm:$0xff]
        %v1156 = vld [vmem:[#allocation8 + $0x660] sm:$0xff]
        %v1157 = vld [vmem:[#allocation8 + $0x668] sm:$0xff]
        %v1158 = vld [vmem:[#allocation8 + $0x670] sm:$0xff]
        %v1159 = vld [vmem:[#allocation8 + $0x678] sm:$0xff]
        %v1160 = vld [vmem:[#allocation8 + $0x680] sm:$0xff]
        %v1161 = vld [vmem:[#allocation8 + $0x688] sm:$0xff]
        %v1162 = vld [vmem:[#allocation8 + $0x690] sm:$0xff]
        %v1163 = vld [vmem:[#allocation8 + $0x698] sm:$0xff]
        %v1164 = vld [vmem:[#allocation8 + $0x6a0] sm:$0xff]
        %v1165 = vld [vmem:[#allocation8 + $0x6a8] sm:$0xff]
        %v1166 = vld [vmem:[#allocation8 + $0x6b0] sm:$0xff]
        %v1167 = vld [vmem:[#allocation8 + $0x6b8] sm:$0xff]
        %v1168 = vld [vmem:[#allocation8 + $0x6c0] sm:$0xff]
        %v1169 = vld [vmem:[#allocation8 + $0x6c8] sm:$0xff]
        %v1170 = vld [vmem:[#allocation8 + $0x6d0] sm:$0xff]
        %v1171 = vld [vmem:[#allocation8 + $0x6d8] sm:$0xff]
        %v1172 = vld [vmem:[#allocation8 + $0x6e0] sm:$0xff]
        %v1173 = vld [vmem:[#allocation8 + $0x6e8] sm:$0xff]
        %v1174 = vld [vmem:[#allocation8 + $0x6f0] sm:$0xff]
        %v1175 = vld [vmem:[#allocation8 + $0x6f8] sm:$0xff]
        %v1176 = vld [vmem:[#allocation8 + $0x700] sm:$0xff]
        %v1177 = vld [vmem:[#allocation8 + $0x708] sm:$0xff]
        %v1178 = vld [vmem:[#allocation8 + $0x710] sm:$0xff]
        %v1179 = vld [vmem:[#allocation8 + $0x718] sm:$0xff]
        %v1180 = vld [vmem:[#allocation8 + $0x720] sm:$0xff]
        %v1181 = vld [vmem:[#allocation8 + $0x728] sm:$0xff]
        %v1182 = vld [vmem:[#allocation8 + $0x730] sm:$0xff]
        %v1183 = vld [vmem:[#allocation8 + $0x738] sm:$0xff]
        %v1184 = vld [vmem:[#allocation8 + $0x740] sm:$0xff]
        %v1185 = vld [vmem:[#allocation8 + $0x748] sm:$0xff]
        %v1186 = vld [vmem:[#allocation8 + $0x750] sm:$0xff]
        %v1187 = vld [vmem:[#allocation8 + $0x758] sm:$0xff]
        %v1188 = vld [vmem:[#allocation8 + $0x760] sm:$0xff]
        %v1189 = vld [vmem:[#allocation8 + $0x768] sm:$0xff]
        %v1190 = vld [vmem:[#allocation8 + $0x770] sm:$0xff]
        %v1191 = vld [vmem:[#allocation8 + $0x778] sm:$0xff]
        %v1192 = vld [vmem:[#allocation8 + $0x780] sm:$0xff]
        %v1193 = vld [vmem:[#allocation8 + $0x788] sm:$0xff]
        %v1194 = vld [vmem:[#allocation8 + $0x790] sm:$0xff]
        %v1195 = vld [vmem:[#allocation8 + $0x798] sm:$0xff]
        %v1196 = vld [vmem:[#allocation8 + $0x7a0] sm:$0xff]
        %v1197 = vld [vmem:[#allocation8 + $0x7a8] sm:$0xff]
        %v1198 = vld [vmem:[#allocation8 + $0x7b0] sm:$0xff]
        %v1199 = vld [vmem:[#allocation8 + $0x7b8] sm:$0xff]
        %v1200 = vld [vmem:[#allocation8 + $0x7c0] sm:$0xff]
        %v1201 = vld [vmem:[#allocation8 + $0x7c8] sm:$0xff]
        %v1202 = vld [vmem:[#allocation8 + $0x7d0] sm:$0xff]
        %v1203 = vld [vmem:[#allocation8 + $0x7d8] sm:$0xff]
        %v1204 = vld [vmem:[#allocation8 + $0x7e0] sm:$0xff]
        %v1205 = vld [vmem:[#allocation8 + $0x7e8] sm:$0xff]
        %v1206 = vld [vmem:[#allocation8 + $0x7f0] sm:$0xff]
        %v1207 = vld [vmem:[#allocation8 + $0x7f8] sm:$0xff]
        %v1208 = vld [vmem:[#allocation8 + $0x800] sm:$0xff]
        %v1209 = vld [vmem:[#allocation8 + $0x808] sm:$0xff]
        %v1210 = vld [vmem:[#allocation8 + $0x810] sm:$0xff]
        %v1211 = vld [vmem:[#allocation8 + $0x818] sm:$0xff]
        %v1212 = vld [vmem:[#allocation8 + $0x820] sm:$0xff]
        %v1213 = vld [vmem:[#allocation8 + $0x828] sm:$0xff]
        %v1214 = vld [vmem:[#allocation8 + $0x830] sm:$0xff]
        %v1215 = vld [vmem:[#allocation8 + $0x838] sm:$0xff]
        %v1216 = vld [vmem:[#allocation8 + $0x840] sm:$0xff]
        %v1217 = vld [vmem:[#allocation8 + $0x848] sm:$0xff]
        %v1218 = vld [vmem:[#allocation8 + $0x850] sm:$0xff]
        %v1219 = vld [vmem:[#allocation8 + $0x858] sm:$0xff]
        %v1220 = vld [vmem:[#allocation8 + $0x860] sm:$0xff]
        %v1221 = vld [vmem:[#allocation8 + $0x868] sm:$0xff]
        %v1222 = vld [vmem:[#allocation8 + $0x870] sm:$0xff]
        %v1223 = vld [vmem:[#allocation8 + $0x878] sm:$0xff]
        %v1224 = vld [vmem:[#allocation8 + $0x880] sm:$0xff]
        %v1225 = vld [vmem:[#allocation8 + $0x888] sm:$0xff]
        %v1226 = vld [vmem:[#allocation8 + $0x890] sm:$0xff]
        %v1227 = vld [vmem:[#allocation8 + $0x898] sm:$0xff]
        %v1228 = vld [vmem:[#allocation8 + $0x8a0] sm:$0xff]
        %v1229 = vld [vmem:[#allocation8 + $0x8a8] sm:$0xff]
        %v1230 = vld [vmem:[#allocation8 + $0x8b0] sm:$0xff]
        %v1231 = vld [vmem:[#allocation8 + $0x8b8] sm:$0xff]
        %v1232 = vld [vmem:[#allocation8 + $0x8c0] sm:$0xff]
        %v1233 = vld [vmem:[#allocation8 + $0x8c8] sm:$0xff]
        %v1234 = vld [vmem:[#allocation8 + $0x8d0] sm:$0xff]
        %v1235 = vld [vmem:[#allocation8 + $0x8d8] sm:$0xff]
        %v1236 = vld [vmem:[#allocation8 + $0x8e0] sm:$0xff]
        %v1237 = vld [vmem:[#allocation8 + $0x8e8] sm:$0xff]
        %v1238 = vld [vmem:[#allocation8 + $0x8f0] sm:$0xff]
        %v1239 = vld [vmem:[#allocation8 + $0x8f8] sm:$0xff]
        %v1240 = vld [vmem:[#allocation10] sm:$0x3f]
        %v1242 = vlaneseq
        %v1243 = vshrl.u32 %v1242, 7
        %v1244 = vsub.s32 0, %v1243
        %v1245 = vrot.slane %v1240, %v1244
        %v1246 = vlaneseq
        %v1247 = vshrl.u32 %v1246, 7
        %v1248 = vsub.s32 1, %v1247
        %v1249 = vrot.slane %v1240, %v1248
        %v1250 = vlaneseq
        %v1251 = vshrl.u32 %v1250, 7
        %v1252 = vsub.s32 2, %v1251
        %v1253 = vrot.slane %v1240, %v1252
        %v1254 = vlaneseq
        %v1255 = vshrl.u32 %v1254, 7
        %v1256 = vsub.s32 3, %v1255
        %v1257 = vrot.slane %v1240, %v1256
        %v1258 = vlaneseq
        %v1259 = vshrl.u32 %v1258, 7
        %v1260 = vsub.s32 4, %v1259
        %v1261 = vrot.slane %v1240, %v1260
        %v1262 = vlaneseq
        %v1263 = vshrl.u32 %v1262, 7
        %v1264 = vsub.s32 5, %v1263
        %v1265 = vrot.slane %v1240, %v1264
        %v1560 = vunpack.c.l.b16 %v952
        %v1561 = vunpack.c.h.b16 %v952
        %v1562 = vunpack.c.l.b16 %v953
        %v1563 = vunpack.c.h.b16 %v953
        %v1564 = vunpack.c.l.b16 %v954
        %v1565 = vunpack.c.h.b16 %v954
        %v1566 = vunpack.c.l.b16 %v955
        %v1567 = vunpack.c.h.b16 %v955
        %v1568 = vunpack.c.l.b16 %v956
        %v1569 = vunpack.c.h.b16 %v956
        %v1570 = vunpack.c.l.b16 %v957
        %v1571 = vunpack.c.h.b16 %v957
        %v1572 = vunpack.c.l.b16 %v958
        %v1573 = vunpack.c.h.b16 %v958
        %v1574 = vunpack.c.l.b16 %v959
        %v1575 = vunpack.c.h.b16 %v959
        %v1576 = vunpack.c.l.b16 %v960
        %v1577 = vunpack.c.h.b16 %v960
        %v1578 = vunpack.c.l.b16 %v961
        %v1579 = vunpack.c.h.b16 %v961
        %v1580 = vunpack.c.l.b16 %v962
        %v1581 = vunpack.c.h.b16 %v962
        %v1582 = vunpack.c.l.b16 %v963
        %v1583 = vunpack.c.h.b16 %v963
        %v1584 = vunpack.c.l.b16 %v964
        %v1585 = vunpack.c.h.b16 %v964
        %v1586 = vunpack.c.l.b16 %v965
        %v1587 = vunpack.c.h.b16 %v965
        %v1588 = vunpack.c.l.b16 %v966
        %v1589 = vunpack.c.h.b16 %v966
        %v1590 = vunpack.c.l.b16 %v967
        %v1591 = vunpack.c.h.b16 %v967
        %v1592 = vunpack.c.l.b16 %v968
        %v1593 = vunpack.c.h.b16 %v968
        %v1594 = vunpack.c.l.b16 %v969
        %v1595 = vunpack.c.h.b16 %v969
        %v1596 = vunpack.c.l.b16 %v970
        %v1597 = vunpack.c.h.b16 %v970
        %v1598 = vunpack.c.l.b16 %v971
        %v1599 = vunpack.c.h.b16 %v971
        %v1600 = vunpack.c.l.b16 %v972
        %v1601 = vunpack.c.h.b16 %v972
        %v1602 = vunpack.c.l.b16 %v973
        %v1603 = vunpack.c.h.b16 %v973
        %v1604 = vunpack.c.l.b16 %v974
        %v1605 = vunpack.c.h.b16 %v974
        %v1606 = vunpack.c.l.b16 %v975
        %v1607 = vunpack.c.h.b16 %v975
        %v1608 = vunpack.c.l.b16 %v976
        %v1609 = vunpack.c.h.b16 %v976
        %v1610 = vunpack.c.l.b16 %v977
        %v1611 = vunpack.c.h.b16 %v977
        %v1612 = vunpack.c.l.b16 %v978
        %v1613 = vunpack.c.h.b16 %v978
        %v1614 = vunpack.c.l.b16 %v979
        %v1615 = vunpack.c.h.b16 %v979
        %v1616 = vunpack.c.l.b16 %v980
        %v1617 = vunpack.c.h.b16 %v980
        %v1618 = vunpack.c.l.b16 %v981
        %v1619 = vunpack.c.h.b16 %v981
        %v1620 = vunpack.c.l.b16 %v982
        %v1621 = vunpack.c.h.b16 %v982
        %v1622 = vunpack.c.l.b16 %v983
        %v1623 = vunpack.c.h.b16 %v983
        %v1624 = vunpack.c.l.b16 %v984
        %v1625 = vunpack.c.h.b16 %v984
        %v1626 = vunpack.c.l.b16 %v985
        %v1627 = vunpack.c.h.b16 %v985
        %v1628 = vunpack.c.l.b16 %v986
        %v1629 = vunpack.c.h.b16 %v986
        %v1630 = vunpack.c.l.b16 %v987
        %v1631 = vunpack.c.h.b16 %v987
        %v1632 = vunpack.c.l.b16 %v988
        %v1633 = vunpack.c.h.b16 %v988
        %v1634 = vunpack.c.l.b16 %v989
        %v1635 = vunpack.c.h.b16 %v989
        %v1636 = vunpack.c.l.b16 %v990
        %v1637 = vunpack.c.h.b16 %v990
        %v1638 = vunpack.c.l.b16 %v991
        %v1639 = vunpack.c.h.b16 %v991
        %v1640 = vunpack.c.l.b16 %v992
        %v1641 = vunpack.c.h.b16 %v992
        %v1642 = vunpack.c.l.b16 %v993
        %v1643 = vunpack.c.h.b16 %v993
        %v1644 = vunpack.c.l.b16 %v994
        %v1645 = vunpack.c.h.b16 %v994
        %v1646 = vunpack.c.l.b16 %v995
        %v1647 = vunpack.c.h.b16 %v995
        %v1648 = vunpack.c.l.b16 %v996
        %v1649 = vunpack.c.h.b16 %v996
        %v1650 = vunpack.c.l.b16 %v997
        %v1651 = vunpack.c.h.b16 %v997
        %v1652 = vunpack.c.l.b16 %v998
        %v1653 = vunpack.c.h.b16 %v998
        %v1654 = vunpack.c.l.b16 %v999
        %v1655 = vunpack.c.h.b16 %v999
        %v1656 = vunpack.c.l.b16 %v1000
        %v1657 = vunpack.c.h.b16 %v1000
        %v1658 = vunpack.c.l.b16 %v1001
        %v1659 = vunpack.c.h.b16 %v1001
        %v1660 = vunpack.c.l.b16 %v1002
        %v1661 = vunpack.c.h.b16 %v1002
        %v1662 = vunpack.c.l.b16 %v1003
        %v1663 = vunpack.c.h.b16 %v1003
        %v1664 = vunpack.c.l.b16 %v1004
        %v1665 = vunpack.c.h.b16 %v1004
        %v1666 = vunpack.c.l.b16 %v1005
        %v1667 = vunpack.c.h.b16 %v1005
        %v1668 = vunpack.c.l.b16 %v1006
        %v1669 = vunpack.c.h.b16 %v1006
        %v1670 = vunpack.c.l.b16 %v1007
        %v1671 = vunpack.c.h.b16 %v1007
        %v1672 = vunpack.c.l.b16 %v1008
        %v1673 = vunpack.c.h.b16 %v1008
        %v1674 = vunpack.c.l.b16 %v1009
        %v1675 = vunpack.c.h.b16 %v1009
        %v1676 = vunpack.c.l.b16 %v1010
        %v1677 = vunpack.c.h.b16 %v1010
        %v1678 = vunpack.c.l.b16 %v1011
        %v1679 = vunpack.c.h.b16 %v1011
        %v1680 = vunpack.c.l.b16 %v1012
        %v1681 = vunpack.c.h.b16 %v1012
        %v1682 = vunpack.c.l.b16 %v1013
        %v1683 = vunpack.c.h.b16 %v1013
        %v1684 = vunpack.c.l.b16 %v1014
        %v1685 = vunpack.c.h.b16 %v1014
        %v1686 = vunpack.c.l.b16 %v1015
        %v1687 = vunpack.c.h.b16 %v1015
        %v1688 = vunpack.c.l.b16 %v1016
        %v1689 = vunpack.c.h.b16 %v1016
        %v1690 = vunpack.c.l.b16 %v1017
        %v1691 = vunpack.c.h.b16 %v1017
        %v1692 = vunpack.c.l.b16 %v1018
        %v1693 = vunpack.c.h.b16 %v1018
        %v1694 = vunpack.c.l.b16 %v1019
        %v1695 = vunpack.c.h.b16 %v1019
        %v1696 = vunpack.c.l.b16 %v1020
        %v1697 = vunpack.c.h.b16 %v1020
        %v1698 = vunpack.c.l.b16 %v1021
        %v1699 = vunpack.c.h.b16 %v1021
        %v1700 = vunpack.c.l.b16 %v1022
        %v1701 = vunpack.c.h.b16 %v1022
        %v1702 = vunpack.c.l.b16 %v1023
        %v1703 = vunpack.c.h.b16 %v1023
        %v1704 = vunpack.c.l.b16 %v1024
        %v1705 = vunpack.c.h.b16 %v1024
        %v1706 = vunpack.c.l.b16 %v1025
        %v1707 = vunpack.c.h.b16 %v1025
        %v1708 = vunpack.c.l.b16 %v1026
        %v1709 = vunpack.c.h.b16 %v1026
        %v1710 = vunpack.c.l.b16 %v1027
        %v1711 = vunpack.c.h.b16 %v1027
        %v1712 = vunpack.c.l.b16 %v1028
        %v1713 = vunpack.c.h.b16 %v1028
        %v1714 = vunpack.c.l.b16 %v1029
        %v1715 = vunpack.c.h.b16 %v1029
        %v1716 = vunpack.c.l.b16 %v1030
        %v1717 = vunpack.c.h.b16 %v1030
        %v1718 = vunpack.c.l.b16 %v1031
        %v1719 = vunpack.c.h.b16 %v1031
        %v1720 = vunpack.c.l.b16 %v1032
        %v1721 = vunpack.c.h.b16 %v1032
        %v1722 = vunpack.c.l.b16 %v1033
        %v1723 = vunpack.c.h.b16 %v1033
        %v1724 = vunpack.c.l.b16 %v1034
        %v1725 = vunpack.c.h.b16 %v1034
        %v1726 = vunpack.c.l.b16 %v1035
        %v1727 = vunpack.c.h.b16 %v1035
        %v1728 = vunpack.c.l.b16 %v1036
        %v1729 = vunpack.c.h.b16 %v1036
        %v1730 = vunpack.c.l.b16 %v1037
        %v1731 = vunpack.c.h.b16 %v1037
        %v1732 = vunpack.c.l.b16 %v1038
        %v1733 = vunpack.c.h.b16 %v1038
        %v1734 = vunpack.c.l.b16 %v1039
        %v1735 = vunpack.c.h.b16 %v1039
        %v1736 = vunpack.c.l.b16 %v1040
        %v1737 = vunpack.c.h.b16 %v1040
        %v1738 = vunpack.c.l.b16 %v1041
        %v1739 = vunpack.c.h.b16 %v1041
        %v1740 = vunpack.c.l.b16 %v1042
        %v1741 = vunpack.c.h.b16 %v1042
        %v1742 = vunpack.c.l.b16 %v1043
        %v1743 = vunpack.c.h.b16 %v1043
        %v1744 = vunpack.c.l.b16 %v1044
        %v1745 = vunpack.c.h.b16 %v1044
        %v1746 = vunpack.c.l.b16 %v1045
        %v1747 = vunpack.c.h.b16 %v1045
        %v1748 = vunpack.c.l.b16 %v1046
        %v1749 = vunpack.c.h.b16 %v1046
        %v1750 = vunpack.c.l.b16 %v1047
        %v1751 = vunpack.c.h.b16 %v1047
        %v1752 = vunpack.c.l.b16 %v1048
        %v1753 = vunpack.c.h.b16 %v1048
        %v1754 = vunpack.c.l.b16 %v1049
        %v1755 = vunpack.c.h.b16 %v1049
        %v1756 = vunpack.c.l.b16 %v1050
        %v1757 = vunpack.c.h.b16 %v1050
        %v1758 = vunpack.c.l.b16 %v1051
        %v1759 = vunpack.c.h.b16 %v1051
        %v1760 = vunpack.c.l.b16 %v1052
        %v1761 = vunpack.c.h.b16 %v1052
        %v1762 = vunpack.c.l.b16 %v1053
        %v1763 = vunpack.c.h.b16 %v1053
        %v1764 = vunpack.c.l.b16 %v1054
        %v1765 = vunpack.c.h.b16 %v1054
        %v1766 = vunpack.c.l.b16 %v1055
        %v1767 = vunpack.c.h.b16 %v1055
        %v1768 = vunpack.c.l.b16 %v1056
        %v1769 = vunpack.c.h.b16 %v1056
        %v1770 = vunpack.c.l.b16 %v1057
        %v1771 = vunpack.c.h.b16 %v1057
        %v1772 = vunpack.c.l.b16 %v1058
        %v1773 = vunpack.c.h.b16 %v1058
        %v1774 = vunpack.c.l.b16 %v1059
        %v1775 = vunpack.c.h.b16 %v1059
        %v1776 = vunpack.c.l.b16 %v1060
        %v1777 = vunpack.c.h.b16 %v1060
        %v1778 = vunpack.c.l.b16 %v1061
        %v1779 = vunpack.c.h.b16 %v1061
        %v1780 = vunpack.c.l.b16 %v1062
        %v1781 = vunpack.c.h.b16 %v1062
        %v1782 = vunpack.c.l.b16 %v1063
        %v1783 = vunpack.c.h.b16 %v1063
        %v1784 = vunpack.c.l.b16 %v1064
        %v1785 = vunpack.c.h.b16 %v1064
        %v1786 = vunpack.c.l.b16 %v1065
        %v1787 = vunpack.c.h.b16 %v1065
        %v1788 = vunpack.c.l.b16 %v1066
        %v1789 = vunpack.c.h.b16 %v1066
        %v1790 = vunpack.c.l.b16 %v1067
        %v1791 = vunpack.c.h.b16 %v1067
        %v1792 = vunpack.c.l.b16 %v1068
        %v1793 = vunpack.c.h.b16 %v1068
        %v1794 = vunpack.c.l.b16 %v1069
        %v1795 = vunpack.c.h.b16 %v1069
        %v1796 = vunpack.c.l.b16 %v1070
        %v1797 = vunpack.c.h.b16 %v1070
        %v1798 = vunpack.c.l.b16 %v1071
        %v1799 = vunpack.c.h.b16 %v1071
        %v1800 = vunpack.c.l.b16 %v1072
        %v1801 = vunpack.c.h.b16 %v1072
        %v1802 = vunpack.c.l.b16 %v1073
        %v1803 = vunpack.c.h.b16 %v1073
        %v1804 = vunpack.c.l.b16 %v1074
        %v1805 = vunpack.c.h.b16 %v1074
        %v1806 = vunpack.c.l.b16 %v1075
        %v1807 = vunpack.c.h.b16 %v1075
        %v1808 = vunpack.c.l.b16 %v1076
        %v1809 = vunpack.c.h.b16 %v1076
        %v1810 = vunpack.c.l.b16 %v1077
        %v1811 = vunpack.c.h.b16 %v1077
        %v1812 = vunpack.c.l.b16 %v1078
        %v1813 = vunpack.c.h.b16 %v1078
        %v1814 = vunpack.c.l.b16 %v1079
        %v1815 = vunpack.c.h.b16 %v1079
        %v1816 = vunpack.c.l.b16 %v1080
        %v1817 = vunpack.c.h.b16 %v1080
        %v1818 = vunpack.c.l.b16 %v1081
        %v1819 = vunpack.c.h.b16 %v1081
        %v1820 = vunpack.c.l.b16 %v1082
        %v1821 = vunpack.c.h.b16 %v1082
        %v1822 = vunpack.c.l.b16 %v1083
        %v1823 = vunpack.c.h.b16 %v1083
        %v1824 = vunpack.c.l.b16 %v1084
        %v1825 = vunpack.c.h.b16 %v1084
        %v1826 = vunpack.c.l.b16 %v1085
        %v1827 = vunpack.c.h.b16 %v1085
        %v1828 = vunpack.c.l.b16 %v1086
        %v1829 = vunpack.c.h.b16 %v1086
        %v1830 = vunpack.c.l.b16 %v1087
        %v1831 = vunpack.c.h.b16 %v1087
        %v1832 = vunpack.c.l.b16 %v1088
        %v1833 = vunpack.c.h.b16 %v1088
        %v1834 = vunpack.c.l.b16 %v1089
        %v1835 = vunpack.c.h.b16 %v1089
        %v1836 = vunpack.c.l.b16 %v1090
        %v1837 = vunpack.c.h.b16 %v1090
        %v1838 = vunpack.c.l.b16 %v1091
        %v1839 = vunpack.c.h.b16 %v1091
        %v1840 = vunpack.c.l.b16 %v1092
        %v1841 = vunpack.c.h.b16 %v1092
        %v1842 = vunpack.c.l.b16 %v1093
        %v1843 = vunpack.c.h.b16 %v1093
        %v1844 = vunpack.c.l.b16 %v1094
        %v1845 = vunpack.c.h.b16 %v1094
        %v1846 = vunpack.c.l.b16 %v1095
        %v1847 = vunpack.c.h.b16 %v1095
        %v1848 = vunpack.c.l.b16 %v1096
        %v1849 = vunpack.c.h.b16 %v1096
        %v1850 = vunpack.c.l.b16 %v1097
        %v1851 = vunpack.c.h.b16 %v1097
        %v1852 = vunpack.c.l.b16 %v1098
        %v1853 = vunpack.c.h.b16 %v1098
        %v1854 = vunpack.c.l.b16 %v1099
        %v1855 = vunpack.c.h.b16 %v1099
        %v1856 = vunpack.c.l.b16 %v1100
        %v1857 = vunpack.c.h.b16 %v1100
        %v1858 = vunpack.c.l.b16 %v1101
        %v1859 = vunpack.c.h.b16 %v1101
        %v1860 = vunpack.c.l.b16 %v1102
        %v1861 = vunpack.c.h.b16 %v1102
        %v1862 = vunpack.c.l.b16 %v1103
        %v1863 = vunpack.c.h.b16 %v1103
        %v1864 = vunpack.c.l.b16 %v1104
        %v1865 = vunpack.c.h.b16 %v1104
        %v1866 = vunpack.c.l.b16 %v1105
        %v1867 = vunpack.c.h.b16 %v1105
        %v1868 = vunpack.c.l.b16 %v1106
        %v1869 = vunpack.c.h.b16 %v1106
        %v1870 = vunpack.c.l.b16 %v1107
        %v1871 = vunpack.c.h.b16 %v1107
        %v1872 = vunpack.c.l.b16 %v1108
        %v1873 = vunpack.c.h.b16 %v1108
        %v1874 = vunpack.c.l.b16 %v1109
        %v1875 = vunpack.c.h.b16 %v1109
        %v1876 = vunpack.c.l.b16 %v1110
        %v1877 = vunpack.c.h.b16 %v1110
        %v1878 = vunpack.c.l.b16 %v1111
        %v1879 = vunpack.c.h.b16 %v1111
        %v1880 = vunpack.c.l.b16 %v1112
        %v1881 = vunpack.c.h.b16 %v1112
        %v1882 = vunpack.c.l.b16 %v1113
        %v1883 = vunpack.c.h.b16 %v1113
        %v1884 = vunpack.c.l.b16 %v1114
        %v1885 = vunpack.c.h.b16 %v1114
        %v1886 = vunpack.c.l.b16 %v1115
        %v1887 = vunpack.c.h.b16 %v1115
        %v1888 = vunpack.c.l.b16 %v1116
        %v1889 = vunpack.c.h.b16 %v1116
        %v1890 = vunpack.c.l.b16 %v1117
        %v1891 = vunpack.c.h.b16 %v1117
        %v1892 = vunpack.c.l.b16 %v1118
        %v1893 = vunpack.c.h.b16 %v1118
        %v1894 = vunpack.c.l.b16 %v1119
        %v1895 = vunpack.c.h.b16 %v1119
        %v1896 = vunpack.c.l.b16 %v1120
        %v1897 = vunpack.c.h.b16 %v1120
        %v1898 = vunpack.c.l.b16 %v1121
        %v1899 = vunpack.c.h.b16 %v1121
        %v1900 = vunpack.c.l.b16 %v1122
        %v1901 = vunpack.c.h.b16 %v1122
        %v1902 = vunpack.c.l.b16 %v1123
        %v1903 = vunpack.c.h.b16 %v1123
        %v1904 = vunpack.c.l.b16 %v1124
        %v1905 = vunpack.c.h.b16 %v1124
        %v1906 = vunpack.c.l.b16 %v1125
        %v1907 = vunpack.c.h.b16 %v1125
        %v1908 = vunpack.c.l.b16 %v1126
        %v1909 = vunpack.c.h.b16 %v1126
        %v1910 = vunpack.c.l.b16 %v1127
        %v1911 = vunpack.c.h.b16 %v1127
        %v1912 = vunpack.c.l.b16 %v1128
        %v1913 = vunpack.c.h.b16 %v1128
        %v1914 = vunpack.c.l.b16 %v1129
        %v1915 = vunpack.c.h.b16 %v1129
        %v1916 = vunpack.c.l.b16 %v1130
        %v1917 = vunpack.c.h.b16 %v1130
        %v1918 = vunpack.c.l.b16 %v1131
        %v1919 = vunpack.c.h.b16 %v1131
        %v1920 = vunpack.c.l.b16 %v1132
        %v1921 = vunpack.c.h.b16 %v1132
        %v1922 = vunpack.c.l.b16 %v1133
        %v1923 = vunpack.c.h.b16 %v1133
        %v1924 = vunpack.c.l.b16 %v1134
        %v1925 = vunpack.c.h.b16 %v1134
        %v1926 = vunpack.c.l.b16 %v1135
        %v1927 = vunpack.c.h.b16 %v1135
        %v1928 = vunpack.c.l.b16 %v1136
        %v1929 = vunpack.c.h.b16 %v1136
        %v1930 = vunpack.c.l.b16 %v1137
        %v1931 = vunpack.c.h.b16 %v1137
        %v1932 = vunpack.c.l.b16 %v1138
        %v1933 = vunpack.c.h.b16 %v1138
        %v1934 = vunpack.c.l.b16 %v1139
        %v1935 = vunpack.c.h.b16 %v1139
        %v1936 = vunpack.c.l.b16 %v1140
        %v1937 = vunpack.c.h.b16 %v1140
        %v1938 = vunpack.c.l.b16 %v1141
        %v1939 = vunpack.c.h.b16 %v1141
        %v1940 = vunpack.c.l.b16 %v1142
        %v1941 = vunpack.c.h.b16 %v1142
        %v1942 = vunpack.c.l.b16 %v1143
        %v1943 = vunpack.c.h.b16 %v1143
        %v1944 = vunpack.c.l.b16 %v1144
        %v1945 = vunpack.c.h.b16 %v1144
        %v1946 = vunpack.c.l.b16 %v1145
        %v1947 = vunpack.c.h.b16 %v1145
        %v1948 = vunpack.c.l.b16 %v1146
        %v1949 = vunpack.c.h.b16 %v1146
        %v1950 = vunpack.c.l.b16 %v1147
        %v1951 = vunpack.c.h.b16 %v1147
        %v1952 = vunpack.c.l.b16 %v1148
        %v1953 = vunpack.c.h.b16 %v1148
        %v1954 = vunpack.c.l.b16 %v1149
        %v1955 = vunpack.c.h.b16 %v1149
        %v1956 = vunpack.c.l.b16 %v1150
        %v1957 = vunpack.c.h.b16 %v1150
        %v1958 = vunpack.c.l.b16 %v1151
        %v1959 = vunpack.c.h.b16 %v1151
        %v1960 = vunpack.c.l.b16 %v1152
        %v1961 = vunpack.c.h.b16 %v1152
        %v1962 = vunpack.c.l.b16 %v1153
        %v1963 = vunpack.c.h.b16 %v1153
        %v1964 = vunpack.c.l.b16 %v1154
        %v1965 = vunpack.c.h.b16 %v1154
        %v1966 = vunpack.c.l.b16 %v1155
        %v1967 = vunpack.c.h.b16 %v1155
        %v1968 = vunpack.c.l.b16 %v1156
        %v1969 = vunpack.c.h.b16 %v1156
        %v1970 = vunpack.c.l.b16 %v1157
        %v1971 = vunpack.c.h.b16 %v1157
        %v1972 = vunpack.c.l.b16 %v1158
        %v1973 = vunpack.c.h.b16 %v1158
        %v1974 = vunpack.c.l.b16 %v1159
        %v1975 = vunpack.c.h.b16 %v1159
        %v1976 = vunpack.c.l.b16 %v1160
        %v1977 = vunpack.c.h.b16 %v1160
        %v1978 = vunpack.c.l.b16 %v1161
        %v1979 = vunpack.c.h.b16 %v1161
        %v1980 = vunpack.c.l.b16 %v1162
        %v1981 = vunpack.c.h.b16 %v1162
        %v1982 = vunpack.c.l.b16 %v1163
        %v1983 = vunpack.c.h.b16 %v1163
        %v1984 = vunpack.c.l.b16 %v1164
        %v1985 = vunpack.c.h.b16 %v1164
        %v1986 = vunpack.c.l.b16 %v1165
        %v1987 = vunpack.c.h.b16 %v1165
        %v1988 = vunpack.c.l.b16 %v1166
        %v1989 = vunpack.c.h.b16 %v1166
        %v1990 = vunpack.c.l.b16 %v1167
        %v1991 = vunpack.c.h.b16 %v1167
        %v1992 = vunpack.c.l.b16 %v1168
        %v1993 = vunpack.c.h.b16 %v1168
        %v1994 = vunpack.c.l.b16 %v1169
        %v1995 = vunpack.c.h.b16 %v1169
        %v1996 = vunpack.c.l.b16 %v1170
        %v1997 = vunpack.c.h.b16 %v1170
        %v1998 = vunpack.c.l.b16 %v1171
        %v1999 = vunpack.c.h.b16 %v1171
        %v2000 = vunpack.c.l.b16 %v1172
        %v2001 = vunpack.c.h.b16 %v1172
        %v2002 = vunpack.c.l.b16 %v1173
        %v2003 = vunpack.c.h.b16 %v1173
        %v2004 = vunpack.c.l.b16 %v1174
        %v2005 = vunpack.c.h.b16 %v1174
        %v2006 = vunpack.c.l.b16 %v1175
        %v2007 = vunpack.c.h.b16 %v1175
        %v2008 = vunpack.c.l.b16 %v1176
        %v2009 = vunpack.c.h.b16 %v1176
        %v2010 = vunpack.c.l.b16 %v1177
        %v2011 = vunpack.c.h.b16 %v1177
        %v2012 = vunpack.c.l.b16 %v1178
        %v2013 = vunpack.c.h.b16 %v1178
        %v2014 = vunpack.c.l.b16 %v1179
        %v2015 = vunpack.c.h.b16 %v1179
        %v2016 = vunpack.c.l.b16 %v1180
        %v2017 = vunpack.c.h.b16 %v1180
        %v2018 = vunpack.c.l.b16 %v1181
        %v2019 = vunpack.c.h.b16 %v1181
        %v2020 = vunpack.c.l.b16 %v1182
        %v2021 = vunpack.c.h.b16 %v1182
        %v2022 = vunpack.c.l.b16 %v1183
        %v2023 = vunpack.c.h.b16 %v1183
        %v2024 = vunpack.c.l.b16 %v1184
        %v2025 = vunpack.c.h.b16 %v1184
        %v2026 = vunpack.c.l.b16 %v1185
        %v2027 = vunpack.c.h.b16 %v1185
        %v2028 = vunpack.c.l.b16 %v1186
        %v2029 = vunpack.c.h.b16 %v1186
        %v2030 = vunpack.c.l.b16 %v1187
        %v2031 = vunpack.c.h.b16 %v1187
        %v2032 = vunpack.c.l.b16 %v1188
        %v2033 = vunpack.c.h.b16 %v1188
        %v2034 = vunpack.c.l.b16 %v1189
        %v2035 = vunpack.c.h.b16 %v1189
        %v2036 = vunpack.c.l.b16 %v1190
        %v2037 = vunpack.c.h.b16 %v1190
        %v2038 = vunpack.c.l.b16 %v1191
        %v2039 = vunpack.c.h.b16 %v1191
        %v2040 = vunpack.c.l.b16 %v1192
        %v2041 = vunpack.c.h.b16 %v1192
        %v2042 = vunpack.c.l.b16 %v1193
        %v2043 = vunpack.c.h.b16 %v1193
        %v2044 = vunpack.c.l.b16 %v1194
        %v2045 = vunpack.c.h.b16 %v1194
        %v2046 = vunpack.c.l.b16 %v1195
        %v2047 = vunpack.c.h.b16 %v1195
        %v2048 = vunpack.c.l.b16 %v1196
        %v2049 = vunpack.c.h.b16 %v1196
        %v2050 = vunpack.c.l.b16 %v1197
        %v2051 = vunpack.c.h.b16 %v1197
        %v2052 = vunpack.c.l.b16 %v1198
        %v2053 = vunpack.c.h.b16 %v1198
        %v2054 = vunpack.c.l.b16 %v1199
        %v2055 = vunpack.c.h.b16 %v1199
        %v2056 = vunpack.c.l.b16 %v1200
        %v2057 = vunpack.c.h.b16 %v1200
        %v2058 = vunpack.c.l.b16 %v1201
        %v2059 = vunpack.c.h.b16 %v1201
        %v2060 = vunpack.c.l.b16 %v1202
        %v2061 = vunpack.c.h.b16 %v1202
        %v2062 = vunpack.c.l.b16 %v1203
        %v2063 = vunpack.c.h.b16 %v1203
        %v2064 = vunpack.c.l.b16 %v1204
        %v2065 = vunpack.c.h.b16 %v1204
        %v2066 = vunpack.c.l.b16 %v1205
        %v2067 = vunpack.c.h.b16 %v1205
        %v2068 = vunpack.c.l.b16 %v1206
        %v2069 = vunpack.c.h.b16 %v1206
        %v2070 = vunpack.c.l.b16 %v1207
        %v2071 = vunpack.c.h.b16 %v1207
        %v2072 = vunpack.c.l.b16 %v1208
        %v2073 = vunpack.c.h.b16 %v1208
        %v2074 = vunpack.c.l.b16 %v1209
        %v2075 = vunpack.c.h.b16 %v1209
        %v2076 = vunpack.c.l.b16 %v1210
        %v2077 = vunpack.c.h.b16 %v1210
        %v2078 = vunpack.c.l.b16 %v1211
        %v2079 = vunpack.c.h.b16 %v1211
        %v2080 = vunpack.c.l.b16 %v1212
        %v2081 = vunpack.c.h.b16 %v1212
        %v2082 = vunpack.c.l.b16 %v1213
        %v2083 = vunpack.c.h.b16 %v1213
        %v2084 = vunpack.c.l.b16 %v1214
        %v2085 = vunpack.c.h.b16 %v1214
        %v2086 = vunpack.c.l.b16 %v1215
        %v2087 = vunpack.c.h.b16 %v1215
        %v2088 = vunpack.c.l.b16 %v1216
        %v2089 = vunpack.c.h.b16 %v1216
        %v2090 = vunpack.c.l.b16 %v1217
        %v2091 = vunpack.c.h.b16 %v1217
        %v2092 = vunpack.c.l.b16 %v1218
        %v2093 = vunpack.c.h.b16 %v1218
        %v2094 = vunpack.c.l.b16 %v1219
        %v2095 = vunpack.c.h.b16 %v1219
        %v2096 = vunpack.c.l.b16 %v1220
        %v2097 = vunpack.c.h.b16 %v1220
        %v2098 = vunpack.c.l.b16 %v1221
        %v2099 = vunpack.c.h.b16 %v1221
        %v2100 = vunpack.c.l.b16 %v1222
        %v2101 = vunpack.c.h.b16 %v1222
        %v2102 = vunpack.c.l.b16 %v1223
        %v2103 = vunpack.c.h.b16 %v1223
        %v2104 = vunpack.c.l.b16 %v1224
        %v2105 = vunpack.c.h.b16 %v1224
        %v2106 = vunpack.c.l.b16 %v1225
        %v2107 = vunpack.c.h.b16 %v1225
        %v2108 = vunpack.c.l.b16 %v1226
        %v2109 = vunpack.c.h.b16 %v1226
        %v2110 = vunpack.c.l.b16 %v1227
        %v2111 = vunpack.c.h.b16 %v1227
        %v2112 = vunpack.c.l.b16 %v1228
        %v2113 = vunpack.c.h.b16 %v1228
        %v2114 = vunpack.c.l.b16 %v1229
        %v2115 = vunpack.c.h.b16 %v1229
        %v2116 = vunpack.c.l.b16 %v1230
        %v2117 = vunpack.c.h.b16 %v1230
        %v2118 = vunpack.c.l.b16 %v1231
        %v2119 = vunpack.c.h.b16 %v1231
        %v2120 = vunpack.c.l.b16 %v1232
        %v2121 = vunpack.c.h.b16 %v1232
        %v2122 = vunpack.c.l.b16 %v1233
        %v2123 = vunpack.c.h.b16 %v1233
        %v2124 = vunpack.c.l.b16 %v1234
        %v2125 = vunpack.c.h.b16 %v1234
        %v2126 = vunpack.c.l.b16 %v1235
        %v2127 = vunpack.c.h.b16 %v1235
        %v2128 = vunpack.c.l.b16 %v1236
        %v2129 = vunpack.c.h.b16 %v1236
        %v2130 = vunpack.c.l.b16 %v1237
        %v2131 = vunpack.c.h.b16 %v1237
        %v2132 = vunpack.c.l.b16 %v1238
        %v2133 = vunpack.c.h.b16 %v1238
        %v2134 = vunpack.c.l.b16 %v1239
        %v2135 = vunpack.c.h.b16 %v1239
        %v2136 = vpack.c.b16 %v1566, %v1560
        %v2137 = vpack.c.b16 %v1567, %v1561
        %v2138 = vpack.c.b16 %v1568, %v1562
        %v2139 = vpack.c.b16 %v1569, %v1563
        %v2140 = vpack.c.b16 %v1570, %v1564
        %v2141 = vpack.c.b16 %v1571, %v1565
        %v2142 = vpack.c.b16 %v1578, %v1572
        %v2143 = vpack.c.b16 %v1579, %v1573
        %v2144 = vpack.c.b16 %v1580, %v1574
        %v2145 = vpack.c.b16 %v1581, %v1575
        %v2146 = vpack.c.b16 %v1582, %v1576
        %v2147 = vpack.c.b16 %v1583, %v1577
        %v2148 = vpack.c.b16 %v1590, %v1584
        %v2149 = vpack.c.b16 %v1591, %v1585
        %v2150 = vpack.c.b16 %v1592, %v1586
        %v2151 = vpack.c.b16 %v1593, %v1587
        %v2152 = vpack.c.b16 %v1594, %v1588
        %v2153 = vpack.c.b16 %v1595, %v1589
        %v2154 = vpack.c.b16 %v1602, %v1596
        %v2155 = vpack.c.b16 %v1603, %v1597
        %v2156 = vpack.c.b16 %v1604, %v1598
        %v2157 = vpack.c.b16 %v1605, %v1599
        %v2158 = vpack.c.b16 %v1606, %v1600
        %v2159 = vpack.c.b16 %v1607, %v1601
        %v2160 = vpack.c.b16 %v1614, %v1608
        %v2161 = vpack.c.b16 %v1615, %v1609
        %v2162 = vpack.c.b16 %v1616, %v1610
        %v2163 = vpack.c.b16 %v1617, %v1611
        %v2164 = vpack.c.b16 %v1618, %v1612
        %v2165 = vpack.c.b16 %v1619, %v1613
        %v2166 = vpack.c.b16 %v1626, %v1620
        %v2167 = vpack.c.b16 %v1627, %v1621
        %v2168 = vpack.c.b16 %v1628, %v1622
        %v2169 = vpack.c.b16 %v1629, %v1623
        %v2170 = vpack.c.b16 %v1630, %v1624
        %v2171 = vpack.c.b16 %v1631, %v1625
        %v2172 = vpack.c.b16 %v1638, %v1632
        %v2173 = vpack.c.b16 %v1639, %v1633
        %v2174 = vpack.c.b16 %v1640, %v1634
        %v2175 = vpack.c.b16 %v1641, %v1635
        %v2176 = vpack.c.b16 %v1642, %v1636
        %v2177 = vpack.c.b16 %v1643, %v1637
        %v2178 = vpack.c.b16 %v1650, %v1644
        %v2179 = vpack.c.b16 %v1651, %v1645
        %v2180 = vpack.c.b16 %v1652, %v1646
        %v2181 = vpack.c.b16 %v1653, %v1647
        %v2182 = vpack.c.b16 %v1654, %v1648
        %v2183 = vpack.c.b16 %v1655, %v1649
        %v2184 = vpack.c.b16 %v1662, %v1656
        %v2185 = vpack.c.b16 %v1663, %v1657
        %v2186 = vpack.c.b16 %v1664, %v1658
        %v2187 = vpack.c.b16 %v1665, %v1659
        %v2188 = vpack.c.b16 %v1666, %v1660
        %v2189 = vpack.c.b16 %v1667, %v1661
        %v2190 = vpack.c.b16 %v1674, %v1668
        %v2191 = vpack.c.b16 %v1675, %v1669
        %v2192 = vpack.c.b16 %v1676, %v1670
        %v2193 = vpack.c.b16 %v1677, %v1671
        %v2194 = vpack.c.b16 %v1678, %v1672
        %v2195 = vpack.c.b16 %v1679, %v1673
        %v2196 = vpack.c.b16 %v1686, %v1680
        %v2197 = vpack.c.b16 %v1687, %v1681
        %v2198 = vpack.c.b16 %v1688, %v1682
        %v2199 = vpack.c.b16 %v1689, %v1683
        %v2200 = vpack.c.b16 %v1690, %v1684
        %v2201 = vpack.c.b16 %v1691, %v1685
        %v2202 = vpack.c.b16 %v1698, %v1692
        %v2203 = vpack.c.b16 %v1699, %v1693
        %v2204 = vpack.c.b16 %v1700, %v1694
        %v2205 = vpack.c.b16 %v1701, %v1695
        %v2206 = vpack.c.b16 %v1702, %v1696
        %v2207 = vpack.c.b16 %v1703, %v1697
        %v2208 = vpack.c.b16 %v1710, %v1704
        %v2209 = vpack.c.b16 %v1711, %v1705
        %v2210 = vpack.c.b16 %v1712, %v1706
        %v2211 = vpack.c.b16 %v1713, %v1707
        %v2212 = vpack.c.b16 %v1714, %v1708
        %v2213 = vpack.c.b16 %v1715, %v1709
        %v2214 = vpack.c.b16 %v1722, %v1716
        %v2215 = vpack.c.b16 %v1723, %v1717
        %v2216 = vpack.c.b16 %v1724, %v1718
        %v2217 = vpack.c.b16 %v1725, %v1719
        %v2218 = vpack.c.b16 %v1726, %v1720
        %v2219 = vpack.c.b16 %v1727, %v1721
        %v2220 = vpack.c.b16 %v1734, %v1728
        %v2221 = vpack.c.b16 %v1735, %v1729
        %v2222 = vpack.c.b16 %v1736, %v1730
        %v2223 = vpack.c.b16 %v1737, %v1731
        %v2224 = vpack.c.b16 %v1738, %v1732
        %v2225 = vpack.c.b16 %v1739, %v1733
        %v2226 = vpack.c.b16 %v1746, %v1740
        %v2227 = vpack.c.b16 %v1747, %v1741
        %v2228 = vpack.c.b16 %v1748, %v1742
        %v2229 = vpack.c.b16 %v1749, %v1743
        %v2230 = vpack.c.b16 %v1750, %v1744
        %v2231 = vpack.c.b16 %v1751, %v1745
        %v2232 = vpack.c.b16 %v1758, %v1752
        %v2233 = vpack.c.b16 %v1759, %v1753
        %v2234 = vpack.c.b16 %v1760, %v1754
        %v2235 = vpack.c.b16 %v1761, %v1755
        %v2236 = vpack.c.b16 %v1762, %v1756
        %v2237 = vpack.c.b16 %v1763, %v1757
        %v2238 = vpack.c.b16 %v1770, %v1764
        %v2239 = vpack.c.b16 %v1771, %v1765
        %v2240 = vpack.c.b16 %v1772, %v1766
        %v2241 = vpack.c.b16 %v1773, %v1767
        %v2242 = vpack.c.b16 %v1774, %v1768
        %v2243 = vpack.c.b16 %v1775, %v1769
        %v2244 = vpack.c.b16 %v1782, %v1776
        %v2245 = vpack.c.b16 %v1783, %v1777
        %v2246 = vpack.c.b16 %v1784, %v1778
        %v2247 = vpack.c.b16 %v1785, %v1779
        %v2248 = vpack.c.b16 %v1786, %v1780
        %v2249 = vpack.c.b16 %v1787, %v1781
        %v2250 = vpack.c.b16 %v1794, %v1788
        %v2251 = vpack.c.b16 %v1795, %v1789
        %v2252 = vpack.c.b16 %v1796, %v1790
        %v2253 = vpack.c.b16 %v1797, %v1791
        %v2254 = vpack.c.b16 %v1798, %v1792
        %v2255 = vpack.c.b16 %v1799, %v1793
        %v2256 = vpack.c.b16 %v1806, %v1800
        %v2257 = vpack.c.b16 %v1807, %v1801
        %v2258 = vpack.c.b16 %v1808, %v1802
        %v2259 = vpack.c.b16 %v1809, %v1803
        %v2260 = vpack.c.b16 %v1810, %v1804
        %v2261 = vpack.c.b16 %v1811, %v1805
        %v2262 = vpack.c.b16 %v1818, %v1812
        %v2263 = vpack.c.b16 %v1819, %v1813
        %v2264 = vpack.c.b16 %v1820, %v1814
        %v2265 = vpack.c.b16 %v1821, %v1815
        %v2266 = vpack.c.b16 %v1822, %v1816
        %v2267 = vpack.c.b16 %v1823, %v1817
        %v2268 = vpack.c.b16 %v1830, %v1824
        %v2269 = vpack.c.b16 %v1831, %v1825
        %v2270 = vpack.c.b16 %v1832, %v1826
        %v2271 = vpack.c.b16 %v1833, %v1827
        %v2272 = vpack.c.b16 %v1834, %v1828
        %v2273 = vpack.c.b16 %v1835, %v1829
        %v2274 = vpack.c.b16 %v1842, %v1836
        %v2275 = vpack.c.b16 %v1843, %v1837
        %v2276 = vpack.c.b16 %v1844, %v1838
        %v2277 = vpack.c.b16 %v1845, %v1839
        %v2278 = vpack.c.b16 %v1846, %v1840
        %v2279 = vpack.c.b16 %v1847, %v1841
        %v2280 = vpack.c.b16 %v1854, %v1848
        %v2281 = vpack.c.b16 %v1855, %v1849
        %v2282 = vpack.c.b16 %v1856, %v1850
        %v2283 = vpack.c.b16 %v1857, %v1851
        %v2284 = vpack.c.b16 %v1858, %v1852
        %v2285 = vpack.c.b16 %v1859, %v1853
        %v2286 = vpack.c.b16 %v1866, %v1860
        %v2287 = vpack.c.b16 %v1867, %v1861
        %v2288 = vpack.c.b16 %v1868, %v1862
        %v2289 = vpack.c.b16 %v1869, %v1863
        %v2290 = vpack.c.b16 %v1870, %v1864
        %v2291 = vpack.c.b16 %v1871, %v1865
        %v2292 = vpack.c.b16 %v1878, %v1872
        %v2293 = vpack.c.b16 %v1879, %v1873
        %v2294 = vpack.c.b16 %v1880, %v1874
        %v2295 = vpack.c.b16 %v1881, %v1875
        %v2296 = vpack.c.b16 %v1882, %v1876
        %v2297 = vpack.c.b16 %v1883, %v1877
        %v2298 = vpack.c.b16 %v1890, %v1884
        %v2299 = vpack.c.b16 %v1891, %v1885
        %v2300 = vpack.c.b16 %v1892, %v1886
        %v2301 = vpack.c.b16 %v1893, %v1887
        %v2302 = vpack.c.b16 %v1894, %v1888
        %v2303 = vpack.c.b16 %v1895, %v1889
        %v2304 = vpack.c.b16 %v1902, %v1896
        %v2305 = vpack.c.b16 %v1903, %v1897
        %v2306 = vpack.c.b16 %v1904, %v1898
        %v2307 = vpack.c.b16 %v1905, %v1899
        %v2308 = vpack.c.b16 %v1906, %v1900
        %v2309 = vpack.c.b16 %v1907, %v1901
        %v2310 = vpack.c.b16 %v1914, %v1908
        %v2311 = vpack.c.b16 %v1915, %v1909
        %v2312 = vpack.c.b16 %v1916, %v1910
        %v2313 = vpack.c.b16 %v1917, %v1911
        %v2314 = vpack.c.b16 %v1918, %v1912
        %v2315 = vpack.c.b16 %v1919, %v1913
        %v2316 = vpack.c.b16 %v1926, %v1920
        %v2317 = vpack.c.b16 %v1927, %v1921
        %v2318 = vpack.c.b16 %v1928, %v1922
        %v2319 = vpack.c.b16 %v1929, %v1923
        %v2320 = vpack.c.b16 %v1930, %v1924
        %v2321 = vpack.c.b16 %v1931, %v1925
        %v2322 = vpack.c.b16 %v1938, %v1932
        %v2323 = vpack.c.b16 %v1939, %v1933
        %v2324 = vpack.c.b16 %v1940, %v1934
        %v2325 = vpack.c.b16 %v1941, %v1935
        %v2326 = vpack.c.b16 %v1942, %v1936
        %v2327 = vpack.c.b16 %v1943, %v1937
        %v2328 = vpack.c.b16 %v1950, %v1944
        %v2329 = vpack.c.b16 %v1951, %v1945
        %v2330 = vpack.c.b16 %v1952, %v1946
        %v2331 = vpack.c.b16 %v1953, %v1947
        %v2332 = vpack.c.b16 %v1954, %v1948
        %v2333 = vpack.c.b16 %v1955, %v1949
        %v2334 = vpack.c.b16 %v1962, %v1956
        %v2335 = vpack.c.b16 %v1963, %v1957
        %v2336 = vpack.c.b16 %v1964, %v1958
        %v2337 = vpack.c.b16 %v1965, %v1959
        %v2338 = vpack.c.b16 %v1966, %v1960
        %v2339 = vpack.c.b16 %v1967, %v1961
        %v2340 = vpack.c.b16 %v1974, %v1968
        %v2341 = vpack.c.b16 %v1975, %v1969
        %v2342 = vpack.c.b16 %v1976, %v1970
        %v2343 = vpack.c.b16 %v1977, %v1971
        %v2344 = vpack.c.b16 %v1978, %v1972
        %v2345 = vpack.c.b16 %v1979, %v1973
        %v2346 = vpack.c.b16 %v1986, %v1980
        %v2347 = vpack.c.b16 %v1987, %v1981
        %v2348 = vpack.c.b16 %v1988, %v1982
        %v2349 = vpack.c.b16 %v1989, %v1983
        %v2350 = vpack.c.b16 %v1990, %v1984
        %v2351 = vpack.c.b16 %v1991, %v1985
        %v2352 = vpack.c.b16 %v1998, %v1992
        %v2353 = vpack.c.b16 %v1999, %v1993
        %v2354 = vpack.c.b16 %v2000, %v1994
        %v2355 = vpack.c.b16 %v2001, %v1995
        %v2356 = vpack.c.b16 %v2002, %v1996
        %v2357 = vpack.c.b16 %v2003, %v1997
        %v2358 = vpack.c.b16 %v2010, %v2004
        %v2359 = vpack.c.b16 %v2011, %v2005
        %v2360 = vpack.c.b16 %v2012, %v2006
        %v2361 = vpack.c.b16 %v2013, %v2007
        %v2362 = vpack.c.b16 %v2014, %v2008
        %v2363 = vpack.c.b16 %v2015, %v2009
        %v2364 = vpack.c.b16 %v2022, %v2016
        %v2365 = vpack.c.b16 %v2023, %v2017
        %v2366 = vpack.c.b16 %v2024, %v2018
        %v2367 = vpack.c.b16 %v2025, %v2019
        %v2368 = vpack.c.b16 %v2026, %v2020
        %v2369 = vpack.c.b16 %v2027, %v2021
        %v2370 = vpack.c.b16 %v2034, %v2028
        %v2371 = vpack.c.b16 %v2035, %v2029
        %v2372 = vpack.c.b16 %v2036, %v2030
        %v2373 = vpack.c.b16 %v2037, %v2031
        %v2374 = vpack.c.b16 %v2038, %v2032
        %v2375 = vpack.c.b16 %v2039, %v2033
        %v2376 = vpack.c.b16 %v2046, %v2040
        %v2377 = vpack.c.b16 %v2047, %v2041
        %v2378 = vpack.c.b16 %v2048, %v2042
        %v2379 = vpack.c.b16 %v2049, %v2043
        %v2380 = vpack.c.b16 %v2050, %v2044
        %v2381 = vpack.c.b16 %v2051, %v2045
        %v2382 = vpack.c.b16 %v2058, %v2052
        %v2383 = vpack.c.b16 %v2059, %v2053
        %v2384 = vpack.c.b16 %v2060, %v2054
        %v2385 = vpack.c.b16 %v2061, %v2055
        %v2386 = vpack.c.b16 %v2062, %v2056
        %v2387 = vpack.c.b16 %v2063, %v2057
        %v2388 = vpack.c.b16 %v2070, %v2064
        %v2389 = vpack.c.b16 %v2071, %v2065
        %v2390 = vpack.c.b16 %v2072, %v2066
        %v2391 = vpack.c.b16 %v2073, %v2067
        %v2392 = vpack.c.b16 %v2074, %v2068
        %v2393 = vpack.c.b16 %v2075, %v2069
        %v2394 = vpack.c.b16 %v2082, %v2076
        %v2395 = vpack.c.b16 %v2083, %v2077
        %v2396 = vpack.c.b16 %v2084, %v2078
        %v2397 = vpack.c.b16 %v2085, %v2079
        %v2398 = vpack.c.b16 %v2086, %v2080
        %v2399 = vpack.c.b16 %v2087, %v2081
        %v2400 = vpack.c.b16 %v2094, %v2088
        %v2401 = vpack.c.b16 %v2095, %v2089
        %v2402 = vpack.c.b16 %v2096, %v2090
        %v2403 = vpack.c.b16 %v2097, %v2091
        %v2404 = vpack.c.b16 %v2098, %v2092
        %v2405 = vpack.c.b16 %v2099, %v2093
        %v2406 = vpack.c.b16 %v2106, %v2100
        %v2407 = vpack.c.b16 %v2107, %v2101
        %v2408 = vpack.c.b16 %v2108, %v2102
        %v2409 = vpack.c.b16 %v2109, %v2103
        %v2410 = vpack.c.b16 %v2110, %v2104
        %v2411 = vpack.c.b16 %v2111, %v2105
        %v2412 = vpack.c.b16 %v2118, %v2112
        %v2413 = vpack.c.b16 %v2119, %v2113
        %v2414 = vpack.c.b16 %v2120, %v2114
        %v2415 = vpack.c.b16 %v2121, %v2115
        %v2416 = vpack.c.b16 %v2122, %v2116
        %v2417 = vpack.c.b16 %v2123, %v2117
        %v2418 = vpack.c.b16 %v2130, %v2124
        %v2419 = vpack.c.b16 %v2131, %v2125
        %v2420 = vpack.c.b16 %v2132, %v2126
        %v2421 = vpack.c.b16 %v2133, %v2127
        %v2422 = vpack.c.b16 %v2134, %v2128
        %v2423 = vpack.c.b16 %v2135, %v2129
        %2712 = vmatprep.subr.bf16.mxu0 %v2137
        %2713 = vmatpush1.bf16.msra.mxu0 %v2136
        %2714 = vmatprep.subr.bf16.mxu0 %v2143
        %2715 = vmatpush1.bf16.msra.mxu0 %v2142
        %2716 = vmatprep.subr.bf16.mxu0 %v2149
        %2717 = vmatpush1.bf16.msra.mxu0 %v2148
        %2718 = vmatprep.subr.bf16.mxu0 %v2155
        %2719 = vmatpush1.bf16.msra.mxu0 %v2154
        %2720 = vmatprep.subr.bf16.mxu0 %v2161
        %2721 = vmatpush1.bf16.msra.mxu0 %v2160
        %2722 = vmatprep.subr.bf16.mxu0 %v2167
        %2723 = vmatpush1.bf16.msra.mxu0 %v2166
        %2724 = vmatprep.subr.bf16.mxu0 %v2173
        %2725 = vmatpush1.bf16.msra.mxu0 %v2172
        %2726 = vmatprep.subr.bf16.mxu0 %v2179
        %2727 = vmatpush1.bf16.msra.mxu0 %v2178
        %2728 = vmatprep.subr.bf16.mxu0 %v2185
        %2729 = vmatpush1.bf16.msra.mxu0 %v2184
        %2730 = vmatprep.subr.bf16.mxu0 %v2191
        %2731 = vmatpush1.bf16.msra.mxu0 %v2190
        %2732 = vmatprep.subr.bf16.mxu0 %v2197
        %2733 = vmatpush1.bf16.msra.mxu0 %v2196
        %2734 = vmatprep.subr.bf16.mxu0 %v2203
        %2735 = vmatpush1.bf16.msra.mxu0 %v2202
        %2736 = vmatprep.subr.bf16.mxu0 %v2209
        %2737 = vmatpush1.bf16.msra.mxu0 %v2208
        %2738 = vmatprep.subr.bf16.mxu0 %v2215
        %2739 = vmatpush1.bf16.msra.mxu0 %v2214
        %2740 = vmatprep.subr.bf16.mxu0 %v2221
        %2741 = vmatpush1.bf16.msra.mxu0 %v2220
        %2742 = vmatprep.subr.bf16.mxu0 %v2227
        %2743 = vmatpush1.bf16.msra.mxu0 %v2226
        %2744 = vmatprep.mubr.bf16.mxu0 %v929
        %2745 = vmatmul.mubr.bf16.gmra.mrb[0].mxu0 %v928
        %v2746 = vpop.f32.mrb[0].mxu0
        %v2747 = vadd.f32 %v1245, %v2746
        %v2748 = vpop.f32.mrb[0].mxu0
        %v2749 = vadd.f32 %v1249, %v2748
        %v2750 = vpop.f32.mrb[0].mxu0
        %v2751 = vadd.f32 %v1245, %v2750
        %v2752 = vpop.f32.mrb[0].mxu0
        %v2753 = vadd.f32 %v1249, %v2752
        %2754 = vmatprep.mubr.bf16.mxu0 %v935
        %2755 = vmatmul.mubr.bf16.gmra.mrb[0].mxu0 %v934
        %v2756 = vpop.f32.mrb[0].mxu0
        %v2757 = vadd.f32 %v1245, %v2756
        %v2758 = vpop.f32.mrb[0].mxu0
        %v2759 = vadd.f32 %v1249, %v2758
        %v2760 = vpop.f32.mrb[0].mxu0
        %v2761 = vadd.f32 %v1245, %v2760
        %v2762 = vpop.f32.mrb[0].mxu0
        %v2763 = vadd.f32 %v1249, %v2762
        %2764 = vmatprep.mubr.bf16.mxu0 %v941
        %2765 = vmatmul.mubr.bf16.gmra.mrb[0].mxu0 %v940
        %v2766 = vpop.f32.mrb[0].mxu0
        %v2767 = vadd.f32 %v1245, %v2766
        %v2768 = vpop.f32.mrb[0].mxu0
        %v2769 = vadd.f32 %v1249, %v2768
        %v2770 = vpop.f32.mrb[0].mxu0
        %v2771 = vadd.f32 %v1245, %v2770
        %v2772 = vpop.f32.mrb[0].mxu0
        %v2773 = vadd.f32 %v1249, %v2772
        %2774 = vmatprep.mubr.bf16.mxu0 %v947
        %2775 = vmatmul.mubr.bf16.gmra.mrb[0].mxu0 %v946
        %v2776 = vpop.f32.mrb[0].mxu0
        %v2777 = vadd.f32 %v1245, %v2776
        %v2778 = vpop.f32.mrb[0].mxu0
        %v2779 = vadd.f32 %v1249, %v2778
        %v2780 = vpop.f32.mrb[0].mxu0
        %v2781 = vadd.f32 %v1245, %v2780
        %v2782 = vpop.f32.mrb[0].mxu0
        %v2783 = vadd.f32 %v1249, %v2782
        %2784 = vdwg.mxu0
        %2785 = vmatprep.subr.bf16.mxu0 %v2233
        %2786 = vmatpush1.bf16.msra.mxu0 %v2232
        %2787 = vmatprep.subr.bf16.mxu0 %v2239
        %2788 = vmatpush1.bf16.msra.mxu0 %v2238
        %2789 = vmatprep.subr.bf16.mxu0 %v2245
        %2790 = vmatpush1.bf16.msra.mxu0 %v2244
        %2791 = vmatprep.subr.bf16.mxu0 %v2251
        %2792 = vmatpush1.bf16.msra.mxu0 %v2250
        %2793 = vmatprep.subr.bf16.mxu0 %v2257
        %2794 = vmatpush1.bf16.msra.mxu0 %v2256
        %2795 = vmatprep.subr.bf16.mxu0 %v2263
        %2796 = vmatpush1.bf16.msra.mxu0 %v2262
        %2797 = vmatprep.subr.bf16.mxu0 %v2269
        %2798 = vmatpush1.bf16.msra.mxu0 %v2268
        %2799 = vmatprep.subr.bf16.mxu0 %v2275
        %2800 = vmatpush1.bf16.msra.mxu0 %v2274
        %2801 = vmatprep.subr.bf16.mxu0 %v2281
        %2802 = vmatpush1.bf16.msra.mxu0 %v2280
        %2803 = vmatprep.subr.bf16.mxu0 %v2287
        %2804 = vmatpush1.bf16.msra.mxu0 %v2286
        %2805 = vmatprep.subr.bf16.mxu0 %v2293
        %2806 = vmatpush1.bf16.msra.mxu0 %v2292
        %2807 = vmatprep.subr.bf16.mxu0 %v2299
        %2808 = vmatpush1.bf16.msra.mxu0 %v2298
        %2809 = vmatprep.subr.bf16.mxu0 %v2305
        %2810 = vmatpush1.bf16.msra.mxu0 %v2304
        %2811 = vmatprep.subr.bf16.mxu0 %v2311
        %2812 = vmatpush1.bf16.msra.mxu0 %v2310
        %2813 = vmatprep.subr.bf16.mxu0 %v2317
        %2814 = vmatpush1.bf16.msra.mxu0 %v2316
        %2815 = vmatprep.subr.bf16.mxu0 %v2323
        %2816 = vmatpush1.bf16.msra.mxu0 %v2322
        %2817 = vmatprep.mubr.bf16.mxu0 %v931
        %2818 = vmatmul.mubr.bf16.gmra.mrb[0].mxu0 %v930
        %v2819 = vpop.f32.mrb[0].mxu0
        %v2820 = vadd.f32 %v2747, %v2819
        %v2821 = vpop.f32.mrb[0].mxu0
        %v2822 = vadd.f32 %v2749, %v2821
        %v2823 = vpop.f32.mrb[0].mxu0
        %v2824 = vadd.f32 %v2751, %v2823
        %v2825 = vpop.f32.mrb[0].mxu0
        %v2826 = vadd.f32 %v2753, %v2825
        %2827 = vmatprep.mubr.bf16.mxu0 %v937
        %2828 = vmatmul.mubr.bf16.gmra.mrb[0].mxu0 %v936
        %v2829 = vpop.f32.mrb[0].mxu0
        %v2830 = vadd.f32 %v2757, %v2829
        %v2831 = vpop.f32.mrb[0].mxu0
        %v2832 = vadd.f32 %v2759, %v2831
        %v2833 = vpop.f32.mrb[0].mxu0
        %v2834 = vadd.f32 %v2761, %v2833
        %v2835 = vpop.f32.mrb[0].mxu0
        %v2836 = vadd.f32 %v2763, %v2835
        %2837 = vmatprep.mubr.bf16.mxu0 %v943
        %2838 = vmatmul.mubr.bf16.gmra.mrb[0].mxu0 %v942
        %v2839 = vpop.f32.mrb[0].mxu0
        %v2840 = vadd.f32 %v2767, %v2839
        %v2841 = vpop.f32.mrb[0].mxu0
        %v2842 = vadd.f32 %v2769, %v2841
        %v2843 = vpop.f32.mrb[0].mxu0
        %v2844 = vadd.f32 %v2771, %v2843
        %v2845 = vpop.f32.mrb[0].mxu0
        %v2846 = vadd.f32 %v2773, %v2845
        %2847 = vmatprep.mubr.bf16.mxu0 %v949
        %2848 = vmatmul.mubr.bf16.gmra.mrb[0].mxu0 %v948
        %v2849 = vpop.f32.mrb[0].mxu0
        %v2850 = vadd.f32 %v2777, %v2849
        %v2851 = vpop.f32.mrb[0].mxu0
        %v2852 = vadd.f32 %v2779, %v2851
        %v2853 = vpop.f32.mrb[0].mxu0
        %v2854 = vadd.f32 %v2781, %v2853
        %v2855 = vpop.f32.mrb[0].mxu0
        %v2856 = vadd.f32 %v2783, %v2855
        %2857 = vdwg.mxu0
        %2858 = vmatprep.subr.bf16.mxu0 %v2329
        %2859 = vmatpush1.bf16.msra.mxu0 %v2328
        %2860 = vmatprep.subr.bf16.mxu0 %v2335
        %2861 = vmatpush1.bf16.msra.mxu0 %v2334
        %2862 = vmatprep.subr.bf16.mxu0 %v2341
        %2863 = vmatpush1.bf16.msra.mxu0 %v2340
        %2864 = vmatprep.subr.bf16.mxu0 %v2347
        %2865 = vmatpush1.bf16.msra.mxu0 %v2346
        %2866 = vmatprep.subr.bf16.mxu0 %v2353
        %2867 = vmatpush1.bf16.msra.mxu0 %v2352
        %2868 = vmatprep.subr.bf16.mxu0 %v2359
        %2869 = vmatpush1.bf16.msra.mxu0 %v2358
        %2870 = vmatprep.subr.bf16.mxu0 %v2365
        %2871 = vmatpush1.bf16.msra.mxu0 %v2364
        %2872 = vmatprep.subr.bf16.mxu0 %v2371
        %2873 = vmatpush1.bf16.msra.mxu0 %v2370
        %2874 = vmatprep.subr.bf16.mxu0 %v2377
        %2875 = vmatpush1.bf16.msra.mxu0 %v2376
        %2876 = vmatprep.subr.bf16.mxu0 %v2383
        %2877 = vmatpush1.bf16.msra.mxu0 %v2382
        %2878 = vmatprep.subr.bf16.mxu0 %v2389
        %2879 = vmatpush1.bf16.msra.mxu0 %v2388
        %2880 = vmatprep.subr.bf16.mxu0 %v2395
        %2881 = vmatpush1.bf16.msra.mxu0 %v2394
        %2882 = vmatprep.subr.bf16.mxu0 %v2401
        %2883 = vmatpush1.bf16.msra.mxu0 %v2400
        %2884 = vmatprep.subr.bf16.mxu0 %v2407
        %2885 = vmatpush1.bf16.msra.mxu0 %v2406
        %2886 = vmatprep.subr.bf16.mxu0 %v2413
        %2887 = vmatpush1.bf16.msra.mxu0 %v2412
        %2888 = vmatprep.subr.bf16.mxu0 %v2419
        %2889 = vmatpush1.bf16.msra.mxu0 %v2418
        %2890 = vmatprep.mubr.bf16.mxu0 %v933
        %2891 = vmatmul.mubr.bf16.gmra.mrb[0].mxu0 %v932
        %v2892 = vpop.f32.mrb[0].mxu0
        %v2893 = vadd.f32 %v2820, %v2892
        %v2894 = vpop.f32.mrb[0].mxu0
        %v2895 = vadd.f32 %v2822, %v2894
        %v2896 = vpop.f32.mrb[0].mxu0
        %v2897 = vadd.f32 %v2824, %v2896
        %v2898 = vpop.f32.mrb[0].mxu0
        %v2899 = vadd.f32 %v2826, %v2898
        %2900 = vmatprep.mubr.bf16.mxu0 %v939
        %2901 = vmatmul.mubr.bf16.gmra.mrb[0].mxu0 %v938
        %v2902 = vpop.f32.mrb[0].mxu0
        %v2903 = vadd.f32 %v2830, %v2902
        %v2904 = vpop.f32.mrb[0].mxu0
        %v2905 = vadd.f32 %v2832, %v2904
        %v2906 = vpop.f32.mrb[0].mxu0
        %v2907 = vadd.f32 %v2834, %v2906
        %v2908 = vpop.f32.mrb[0].mxu0
        %v2909 = vadd.f32 %v2836, %v2908
        %2910 = vmatprep.mubr.bf16.mxu0 %v945
        %2911 = vmatmul.mubr.bf16.gmra.mrb[0].mxu0 %v944
        %v2912 = vpop.f32.mrb[0].mxu0
        %v2913 = vadd.f32 %v2840, %v2912
        %v2914 = vpop.f32.mrb[0].mxu0
        %v2915 = vadd.f32 %v2842, %v2914
        %v2916 = vpop.f32.mrb[0].mxu0
        %v2917 = vadd.f32 %v2844, %v2916
        %v2918 = vpop.f32.mrb[0].mxu0
        %v2919 = vadd.f32 %v2846, %v2918
        %2920 = vmatprep.mubr.bf16.mxu0 %v951
        %2921 = vmatmul.mubr.bf16.gmra.mrb[0].mxu0 %v950
        %v2922 = vpop.f32.mrb[0].mxu0
        %v2923 = vadd.f32 %v2850, %v2922
        %v2924 = vpop.f32.mrb[0].mxu0
        %v2925 = vadd.f32 %v2852, %v2924
        %v2926 = vpop.f32.mrb[0].mxu0
        %v2927 = vadd.f32 %v2854, %v2926
        %v2928 = vpop.f32.mrb[0].mxu0
        %v2929 = vadd.f32 %v2856, %v2928
        %2930 = vdwg.mxu0
        %2931 = vmatprep.subr.bf16.mxu0 %v2139
        %2932 = vmatpush1.bf16.msra.mxu0 %v2138
        %2933 = vmatprep.subr.bf16.mxu0 %v2145
        %2934 = vmatpush1.bf16.msra.mxu0 %v2144
        %2935 = vmatprep.subr.bf16.mxu0 %v2151
        %2936 = vmatpush1.bf16.msra.mxu0 %v2150
        %2937 = vmatprep.subr.bf16.mxu0 %v2157
        %2938 = vmatpush1.bf16.msra.mxu0 %v2156
        %2939 = vmatprep.subr.bf16.mxu0 %v2163
        %2940 = vmatpush1.bf16.msra.mxu0 %v2162
        %2941 = vmatprep.subr.bf16.mxu0 %v2169
        %2942 = vmatpush1.bf16.msra.mxu0 %v2168
        %2943 = vmatprep.subr.bf16.mxu0 %v2175
        %2944 = vmatpush1.bf16.msra.mxu0 %v2174
        %2945 = vmatprep.subr.bf16.mxu0 %v2181
        %2946 = vmatpush1.bf16.msra.mxu0 %v2180
        %2947 = vmatprep.subr.bf16.mxu0 %v2187
        %2948 = vmatpush1.bf16.msra.mxu0 %v2186
        %2949 = vmatprep.subr.bf16.mxu0 %v2193
        %2950 = vmatpush1.bf16.msra.mxu0 %v2192
        %2951 = vmatprep.subr.bf16.mxu0 %v2199
        %2952 = vmatpush1.bf16.msra.mxu0 %v2198
        %2953 = vmatprep.subr.bf16.mxu0 %v2205
        %2954 = vmatpush1.bf16.msra.mxu0 %v2204
        %2955 = vmatprep.subr.bf16.mxu0 %v2211
        %2956 = vmatpush1.bf16.msra.mxu0 %v2210
        %2957 = vmatprep.subr.bf16.mxu0 %v2217
        %2958 = vmatpush1.bf16.msra.mxu0 %v2216
        %2959 = vmatprep.subr.bf16.mxu0 %v2223
        %2960 = vmatpush1.bf16.msra.mxu0 %v2222
        %2961 = vmatprep.subr.bf16.mxu0 %v2229
        %2962 = vmatpush1.bf16.msra.mxu0 %v2228
        %2963 = vmatprep.mubr.bf16.mxu0 %v929
        %2964 = vmatmul.mubr.bf16.gmra.mrb[0].mxu0 %v928
        %v2965 = vpop.f32.mrb[0].mxu0
        %v2966 = vadd.f32 %v1253, %v2965
        %v2967 = vpop.f32.mrb[0].mxu0
        %v2968 = vadd.f32 %v1257, %v2967
        %v2969 = vpop.f32.mrb[0].mxu0
        %v2970 = vadd.f32 %v1253, %v2969
        %v2971 = vpop.f32.mrb[0].mxu0
        %v2972 = vadd.f32 %v1257, %v2971
        %2973 = vmatprep.mubr.bf16.mxu0 %v935
        %2974 = vmatmul.mubr.bf16.gmra.mrb[0].mxu0 %v934
        %v2975 = vpop.f32.mrb[0].mxu0
        %v2976 = vadd.f32 %v1253, %v2975
        %v2977 = vpop.f32.mrb[0].mxu0
        %v2978 = vadd.f32 %v1257, %v2977
        %v2979 = vpop.f32.mrb[0].mxu0
        %v2980 = vadd.f32 %v1253, %v2979
        %v2981 = vpop.f32.mrb[0].mxu0
        %v2982 = vadd.f32 %v1257, %v2981
        %2983 = vmatprep.mubr.bf16.mxu0 %v941
        %2984 = vmatmul.mubr.bf16.gmra.mrb[0].mxu0 %v940
        %v2985 = vpop.f32.mrb[0].mxu0
        %v2986 = vadd.f32 %v1253, %v2985
        %v2987 = vpop.f32.mrb[0].mxu0
        %v2988 = vadd.f32 %v1257, %v2987
        %v2989 = vpop.f32.mrb[0].mxu0
        %v2990 = vadd.f32 %v1253, %v2989
        %v2991 = vpop.f32.mrb[0].mxu0
        %v2992 = vadd.f32 %v1257, %v2991
        %2993 = vmatprep.mubr.bf16.mxu0 %v947
        %2994 = vmatmul.mubr.bf16.gmra.mrb[0].mxu0 %v946
        %v2995 = vpop.f32.mrb[0].mxu0
        %v2996 = vadd.f32 %v1253, %v2995
        %v2997 = vpop.f32.mrb[0].mxu0
        %v2998 = vadd.f32 %v1257, %v2997
        %v2999 = vpop.f32.mrb[0].mxu0
        %v3000 = vadd.f32 %v1253, %v2999
        %v3001 = vpop.f32.mrb[0].mxu0
        %v3002 = vadd.f32 %v1257, %v3001
        %3003 = vdwg.mxu0
        %3004 = vmatprep.subr.bf16.mxu0 %v2235
        %3005 = vmatpush1.bf16.msra.mxu0 %v2234
        %3006 = vmatprep.subr.bf16.mxu0 %v2241
        %3007 = vmatpush1.bf16.msra.mxu0 %v2240
        %3008 = vmatprep.subr.bf16.mxu0 %v2247
        %3009 = vmatpush1.bf16.msra.mxu0 %v2246
        %3010 = vmatprep.subr.bf16.mxu0 %v2253
        %3011 = vmatpush1.bf16.msra.mxu0 %v2252
        %3012 = vmatprep.subr.bf16.mxu0 %v2259
        %3013 = vmatpush1.bf16.msra.mxu0 %v2258
        %3014 = vmatprep.subr.bf16.mxu0 %v2265
        %3015 = vmatpush1.bf16.msra.mxu0 %v2264
        %3016 = vmatprep.subr.bf16.mxu0 %v2271
        %3017 = vmatpush1.bf16.msra.mxu0 %v2270
        %3018 = vmatprep.subr.bf16.mxu0 %v2277
        %3019 = vmatpush1.bf16.msra.mxu0 %v2276
        %3020 = vmatprep.subr.bf16.mxu0 %v2283
        %3021 = vmatpush1.bf16.msra.mxu0 %v2282
        %3022 = vmatprep.subr.bf16.mxu0 %v2289
        %3023 = vmatpush1.bf16.msra.mxu0 %v2288
        %3024 = vmatprep.subr.bf16.mxu0 %v2295
        %3025 = vmatpush1.bf16.msra.mxu0 %v2294
        %3026 = vmatprep.subr.bf16.mxu0 %v2301
        %3027 = vmatpush1.bf16.msra.mxu0 %v2300
        %3028 = vmatprep.subr.bf16.mxu0 %v2307
        %3029 = vmatpush1.bf16.msra.mxu0 %v2306
        %3030 = vmatprep.subr.bf16.mxu0 %v2313
        %3031 = vmatpush1.bf16.msra.mxu0 %v2312
        %3032 = vmatprep.subr.bf16.mxu0 %v2319
        %3033 = vmatpush1.bf16.msra.mxu0 %v2318
        %3034 = vmatprep.subr.bf16.mxu0 %v2325
        %3035 = vmatpush1.bf16.msra.mxu0 %v2324
        %3036 = vmatprep.mubr.bf16.mxu0 %v931
        %3037 = vmatmul.mubr.bf16.gmra.mrb[0].mxu0 %v930
        %v3038 = vpop.f32.mrb[0].mxu0
        %v3039 = vadd.f32 %v2966, %v3038
        %v3040 = vpop.f32.mrb[0].mxu0
        %v3041 = vadd.f32 %v2968, %v3040
        %v3042 = vpop.f32.mrb[0].mxu0
        %v3043 = vadd.f32 %v2970, %v3042
        %v3044 = vpop.f32.mrb[0].mxu0
        %v3045 = vadd.f32 %v2972, %v3044
        %3046 = vmatprep.mubr.bf16.mxu0 %v937
        %3047 = vmatmul.mubr.bf16.gmra.mrb[0].mxu0 %v936
        %v3048 = vpop.f32.mrb[0].mxu0
        %v3049 = vadd.f32 %v2976, %v3048
        %v3050 = vpop.f32.mrb[0].mxu0
        %v3051 = vadd.f32 %v2978, %v3050
        %v3052 = vpop.f32.mrb[0].mxu0
        %v3053 = vadd.f32 %v2980, %v3052
        %v3054 = vpop.f32.mrb[0].mxu0
        %v3055 = vadd.f32 %v2982, %v3054
        %3056 = vmatprep.mubr.bf16.mxu0 %v943
        %3057 = vmatmul.mubr.bf16.gmra.mrb[0].mxu0 %v942
        %v3058 = vpop.f32.mrb[0].mxu0
        %v3059 = vadd.f32 %v2986, %v3058
        %v3060 = vpop.f32.mrb[0].mxu0
        %v3061 = vadd.f32 %v2988, %v3060
        %v3062 = vpop.f32.mrb[0].mxu0
        %v3063 = vadd.f32 %v2990, %v3062
        %v3064 = vpop.f32.mrb[0].mxu0
        %v3065 = vadd.f32 %v2992, %v3064
        %3066 = vmatprep.mubr.bf16.mxu0 %v949
        %3067 = vmatmul.mubr.bf16.gmra.mrb[0].mxu0 %v948
        %v3068 = vpop.f32.mrb[0].mxu0
        %v3069 = vadd.f32 %v2996, %v3068
        %v3070 = vpop.f32.mrb[0].mxu0
        %v3071 = vadd.f32 %v2998, %v3070
        %v3072 = vpop.f32.mrb[0].mxu0
        %v3073 = vadd.f32 %v3000, %v3072
        %v3074 = vpop.f32.mrb[0].mxu0
        %v3075 = vadd.f32 %v3002, %v3074
        %3076 = vdwg.mxu0
        %3077 = vmatprep.subr.bf16.mxu0 %v2331
        %3078 = vmatpush1.bf16.msra.mxu0 %v2330
        %3079 = vmatprep.subr.bf16.mxu0 %v2337
        %3080 = vmatpush1.bf16.msra.mxu0 %v2336
        %3081 = vmatprep.subr.bf16.mxu0 %v2343
        %3082 = vmatpush1.bf16.msra.mxu0 %v2342
        %3083 = vmatprep.subr.bf16.mxu0 %v2349
        %3084 = vmatpush1.bf16.msra.mxu0 %v2348
        %3085 = vmatprep.subr.bf16.mxu0 %v2355
        %3086 = vmatpush1.bf16.msra.mxu0 %v2354
        %3087 = vmatprep.subr.bf16.mxu0 %v2361
        %3088 = vmatpush1.bf16.msra.mxu0 %v2360
        %3089 = vmatprep.subr.bf16.mxu0 %v2367
        %3090 = vmatpush1.bf16.msra.mxu0 %v2366
        %3091 = vmatprep.subr.bf16.mxu0 %v2373
        %3092 = vmatpush1.bf16.msra.mxu0 %v2372
        %3093 = vmatprep.subr.bf16.mxu0 %v2379
        %3094 = vmatpush1.bf16.msra.mxu0 %v2378
        %3095 = vmatprep.subr.bf16.mxu0 %v2385
        %3096 = vmatpush1.bf16.msra.mxu0 %v2384
        %3097 = vmatprep.subr.bf16.mxu0 %v2391
        %3098 = vmatpush1.bf16.msra.mxu0 %v2390
        %3099 = vmatprep.subr.bf16.mxu0 %v2397
        %3100 = vmatpush1.bf16.msra.mxu0 %v2396
        %3101 = vmatprep.subr.bf16.mxu0 %v2403
        %3102 = vmatpush1.bf16.msra.mxu0 %v2402
        %3103 = vmatprep.subr.bf16.mxu0 %v2409
        %3104 = vmatpush1.bf16.msra.mxu0 %v2408
        %3105 = vmatprep.subr.bf16.mxu0 %v2415
        %3106 = vmatpush1.bf16.msra.mxu0 %v2414
        %3107 = vmatprep.subr.bf16.mxu0 %v2421
        %3108 = vmatpush1.bf16.msra.mxu0 %v2420
        %3109 = vmatprep.mubr.bf16.mxu0 %v933
        %3110 = vmatmul.mubr.bf16.gmra.mrb[0].mxu0 %v932
        %v3111 = vpop.f32.mrb[0].mxu0
        %v3112 = vadd.f32 %v3039, %v3111
        %v3113 = vpop.f32.mrb[0].mxu0
        %v3114 = vadd.f32 %v3041, %v3113
        %v3115 = vpop.f32.mrb[0].mxu0
        %v3116 = vadd.f32 %v3043, %v3115
        %v3117 = vpop.f32.mrb[0].mxu0
        %v3118 = vadd.f32 %v3045, %v3117
        %3119 = vmatprep.mubr.bf16.mxu0 %v939
        %3120 = vmatmul.mubr.bf16.gmra.mrb[0].mxu0 %v938
        %v3121 = vpop.f32.mrb[0].mxu0
        %v3122 = vadd.f32 %v3049, %v3121
        %v3123 = vpop.f32.mrb[0].mxu0
        %v3124 = vadd.f32 %v3051, %v3123
        %v3125 = vpop.f32.mrb[0].mxu0
        %v3126 = vadd.f32 %v3053, %v3125
        %v3127 = vpop.f32.mrb[0].mxu0
        %v3128 = vadd.f32 %v3055, %v3127
        %3129 = vmatprep.mubr.bf16.mxu0 %v945
        %3130 = vmatmul.mubr.bf16.gmra.mrb[0].mxu0 %v944
        %v3131 = vpop.f32.mrb[0].mxu0
        %v3132 = vadd.f32 %v3059, %v3131
        %v3133 = vpop.f32.mrb[0].mxu0
        %v3134 = vadd.f32 %v3061, %v3133
        %v3135 = vpop.f32.mrb[0].mxu0
        %v3136 = vadd.f32 %v3063, %v3135
        %v3137 = vpop.f32.mrb[0].mxu0
        %v3138 = vadd.f32 %v3065, %v3137
        %3139 = vmatprep.mubr.bf16.mxu0 %v951
        %3140 = vmatmul.mubr.bf16.gmra.mrb[0].mxu0 %v950
        %v3141 = vpop.f32.mrb[0].mxu0
        %v3142 = vadd.f32 %v3069, %v3141
        %v3143 = vpop.f32.mrb[0].mxu0
        %v3144 = vadd.f32 %v3071, %v3143
        %v3145 = vpop.f32.mrb[0].mxu0
        %v3146 = vadd.f32 %v3073, %v3145
        %v3147 = vpop.f32.mrb[0].mxu0
        %v3148 = vadd.f32 %v3075, %v3147
        %3149 = vdwg.mxu0
        %3150 = vmatprep.subr.bf16.mxu0 %v2141
        %3151 = vmatpush1.bf16.msra.mxu0 %v2140
        %3152 = vmatprep.subr.bf16.mxu0 %v2147
        %3153 = vmatpush1.bf16.msra.mxu0 %v2146
        %3154 = vmatprep.subr.bf16.mxu0 %v2153
        %3155 = vmatpush1.bf16.msra.mxu0 %v2152
        %3156 = vmatprep.subr.bf16.mxu0 %v2159
        %3157 = vmatpush1.bf16.msra.mxu0 %v2158
        %3158 = vmatprep.subr.bf16.mxu0 %v2165
        %3159 = vmatpush1.bf16.msra.mxu0 %v2164
        %3160 = vmatprep.subr.bf16.mxu0 %v2171
        %3161 = vmatpush1.bf16.msra.mxu0 %v2170
        %3162 = vmatprep.subr.bf16.mxu0 %v2177
        %3163 = vmatpush1.bf16.msra.mxu0 %v2176
        %3164 = vmatprep.subr.bf16.mxu0 %v2183
        %3165 = vmatpush1.bf16.msra.mxu0 %v2182
        %3166 = vmatprep.subr.bf16.mxu0 %v2189
        %3167 = vmatpush1.bf16.msra.mxu0 %v2188
        %3168 = vmatprep.subr.bf16.mxu0 %v2195
        %3169 = vmatpush1.bf16.msra.mxu0 %v2194
        %3170 = vmatprep.subr.bf16.mxu0 %v2201
        %3171 = vmatpush1.bf16.msra.mxu0 %v2200
        %3172 = vmatprep.subr.bf16.mxu0 %v2207
        %3173 = vmatpush1.bf16.msra.mxu0 %v2206
        %3174 = vmatprep.subr.bf16.mxu0 %v2213
        %3175 = vmatpush1.bf16.msra.mxu0 %v2212
        %3176 = vmatprep.subr.bf16.mxu0 %v2219
        %3177 = vmatpush1.bf16.msra.mxu0 %v2218
        %3178 = vmatprep.subr.bf16.mxu0 %v2225
        %3179 = vmatpush1.bf16.msra.mxu0 %v2224
        %3180 = vmatprep.subr.bf16.mxu0 %v2231
        %3181 = vmatpush1.bf16.msra.mxu0 %v2230
        %3182 = vmatprep.mubr.bf16.mxu0 %v929
        %3183 = vmatmul.mubr.bf16.gmra.mrb[0].mxu0 %v928
        %v3184 = vpop.f32.mrb[0].mxu0
        %v3185 = vadd.f32 %v1261, %v3184
        %v3186 = vpop.f32.mrb[0].mxu0
        %v3187 = vadd.f32 %v1265, %v3186
        %v3188 = vpop.f32.mrb[0].mxu0
        %v3189 = vadd.f32 %v1261, %v3188
        %v3190 = vpop.f32.mrb[0].mxu0
        %v3191 = vadd.f32 %v1265, %v3190
        %3192 = vmatprep.mubr.bf16.mxu0 %v935
        %3193 = vmatmul.mubr.bf16.gmra.mrb[0].mxu0 %v934
        %v3194 = vpop.f32.mrb[0].mxu0
        %v3195 = vadd.f32 %v1261, %v3194
        %v3196 = vpop.f32.mrb[0].mxu0
        %v3197 = vadd.f32 %v1265, %v3196
        %v3198 = vpop.f32.mrb[0].mxu0
        %v3199 = vadd.f32 %v1261, %v3198
        %v3200 = vpop.f32.mrb[0].mxu0
        %v3201 = vadd.f32 %v1265, %v3200
        %3202 = vmatprep.mubr.bf16.mxu0 %v941
        %3203 = vmatmul.mubr.bf16.gmra.mrb[0].mxu0 %v940
        %v3204 = vpop.f32.mrb[0].mxu0
        %v3205 = vadd.f32 %v1261, %v3204
        %v3206 = vpop.f32.mrb[0].mxu0
        %v3207 = vadd.f32 %v1265, %v3206
        %v3208 = vpop.f32.mrb[0].mxu0
        %v3209 = vadd.f32 %v1261, %v3208
        %v3210 = vpop.f32.mrb[0].mxu0
        %v3211 = vadd.f32 %v1265, %v3210
        %3212 = vmatprep.mubr.bf16.mxu0 %v947
        %3213 = vmatmul.mubr.bf16.gmra.mrb[0].mxu0 %v946
        %v3214 = vpop.f32.mrb[0].mxu0
        %v3215 = vadd.f32 %v1261, %v3214
        %v3216 = vpop.f32.mrb[0].mxu0
        %v3217 = vadd.f32 %v1265, %v3216
        %v3218 = vpop.f32.mrb[0].mxu0
        %v3219 = vadd.f32 %v1261, %v3218
        %v3220 = vpop.f32.mrb[0].mxu0
        %v3221 = vadd.f32 %v1265, %v3220
        %3222 = vdwg.mxu0
        %3223 = vmatprep.subr.bf16.mxu0 %v2237
        %3224 = vmatpush1.bf16.msra.mxu0 %v2236
        %3225 = vmatprep.subr.bf16.mxu0 %v2243
        %3226 = vmatpush1.bf16.msra.mxu0 %v2242
        %3227 = vmatprep.subr.bf16.mxu0 %v2249
        %3228 = vmatpush1.bf16.msra.mxu0 %v2248
        %3229 = vmatprep.subr.bf16.mxu0 %v2255
        %3230 = vmatpush1.bf16.msra.mxu0 %v2254
        %3231 = vmatprep.subr.bf16.mxu0 %v2261
        %3232 = vmatpush1.bf16.msra.mxu0 %v2260
        %3233 = vmatprep.subr.bf16.mxu0 %v2267
        %3234 = vmatpush1.bf16.msra.mxu0 %v2266
        %3235 = vmatprep.subr.bf16.mxu0 %v2273
        %3236 = vmatpush1.bf16.msra.mxu0 %v2272
        %3237 = vmatprep.subr.bf16.mxu0 %v2279
        %3238 = vmatpush1.bf16.msra.mxu0 %v2278
        %3239 = vmatprep.subr.bf16.mxu0 %v2285
        %3240 = vmatpush1.bf16.msra.mxu0 %v2284
        %3241 = vmatprep.subr.bf16.mxu0 %v2291
        %3242 = vmatpush1.bf16.msra.mxu0 %v2290
        %3243 = vmatprep.subr.bf16.mxu0 %v2297
        %3244 = vmatpush1.bf16.msra.mxu0 %v2296
        %3245 = vmatprep.subr.bf16.mxu0 %v2303
        %3246 = vmatpush1.bf16.msra.mxu0 %v2302
        %3247 = vmatprep.subr.bf16.mxu0 %v2309
        %3248 = vmatpush1.bf16.msra.mxu0 %v2308
        %3249 = vmatprep.subr.bf16.mxu0 %v2315
        %3250 = vmatpush1.bf16.msra.mxu0 %v2314
        %3251 = vmatprep.subr.bf16.mxu0 %v2321
        %3252 = vmatpush1.bf16.msra.mxu0 %v2320
        %3253 = vmatprep.subr.bf16.mxu0 %v2327
        %3254 = vmatpush1.bf16.msra.mxu0 %v2326
        %3255 = vmatprep.mubr.bf16.mxu0 %v931
        %3256 = vmatmul.mubr.bf16.gmra.mrb[0].mxu0 %v930
        %v3257 = vpop.f32.mrb[0].mxu0
        %v3258 = vadd.f32 %v3185, %v3257
        %v3259 = vpop.f32.mrb[0].mxu0
        %v3260 = vadd.f32 %v3187, %v3259
        %v3261 = vpop.f32.mrb[0].mxu0
        %v3262 = vadd.f32 %v3189, %v3261
        %v3263 = vpop.f32.mrb[0].mxu0
        %v3264 = vadd.f32 %v3191, %v3263
        %3265 = vmatprep.mubr.bf16.mxu0 %v937
        %3266 = vmatmul.mubr.bf16.gmra.mrb[0].mxu0 %v936
        %v3267 = vpop.f32.mrb[0].mxu0
        %v3268 = vadd.f32 %v3195, %v3267
        %v3269 = vpop.f32.mrb[0].mxu0
        %v3270 = vadd.f32 %v3197, %v3269
        %v3271 = vpop.f32.mrb[0].mxu0
        %v3272 = vadd.f32 %v3199, %v3271
        %v3273 = vpop.f32.mrb[0].mxu0
        %v3274 = vadd.f32 %v3201, %v3273
        %3275 = vmatprep.mubr.bf16.mxu0 %v943
        %3276 = vmatmul.mubr.bf16.gmra.mrb[0].mxu0 %v942
        %v3277 = vpop.f32.mrb[0].mxu0
        %v3278 = vadd.f32 %v3205, %v3277
        %v3279 = vpop.f32.mrb[0].mxu0
        %v3280 = vadd.f32 %v3207, %v3279
        %v3281 = vpop.f32.mrb[0].mxu0
        %v3282 = vadd.f32 %v3209, %v3281
        %v3283 = vpop.f32.mrb[0].mxu0
        %v3284 = vadd.f32 %v3211, %v3283
        %3285 = vmatprep.mubr.bf16.mxu0 %v949
        %3286 = vmatmul.mubr.bf16.gmra.mrb[0].mxu0 %v948
        %v3287 = vpop.f32.mrb[0].mxu0
        %v3288 = vadd.f32 %v3215, %v3287
        %v3289 = vpop.f32.mrb[0].mxu0
        %v3290 = vadd.f32 %v3217, %v3289
        %v3291 = vpop.f32.mrb[0].mxu0
        %v3292 = vadd.f32 %v3219, %v3291
        %v3293 = vpop.f32.mrb[0].mxu0
        %v3294 = vadd.f32 %v3221, %v3293
        %3295 = vdwg.mxu0
        %3296 = vmatprep.subr.bf16.mxu0 %v2333
        %3297 = vmatpush1.bf16.msra.mxu0 %v2332
        %3298 = vmatprep.subr.bf16.mxu0 %v2339
        %3299 = vmatpush1.bf16.msra.mxu0 %v2338
        %3300 = vmatprep.subr.bf16.mxu0 %v2345
        %3301 = vmatpush1.bf16.msra.mxu0 %v2344
        %3302 = vmatprep.subr.bf16.mxu0 %v2351
        %3303 = vmatpush1.bf16.msra.mxu0 %v2350
        %3304 = vmatprep.subr.bf16.mxu0 %v2357
        %3305 = vmatpush1.bf16.msra.mxu0 %v2356
        %3306 = vmatprep.subr.bf16.mxu0 %v2363
        %3307 = vmatpush1.bf16.msra.mxu0 %v2362
        %3308 = vmatprep.subr.bf16.mxu0 %v2369
        %3309 = vmatpush1.bf16.msra.mxu0 %v2368
        %3310 = vmatprep.subr.bf16.mxu0 %v2375
        %3311 = vmatpush1.bf16.msra.mxu0 %v2374
        %3312 = vmatprep.subr.bf16.mxu0 %v2381
        %3313 = vmatpush1.bf16.msra.mxu0 %v2380
        %3314 = vmatprep.subr.bf16.mxu0 %v2387
        %3315 = vmatpush1.bf16.msra.mxu0 %v2386
        %3316 = vmatprep.subr.bf16.mxu0 %v2393
        %3317 = vmatpush1.bf16.msra.mxu0 %v2392
        %3318 = vmatprep.subr.bf16.mxu0 %v2399
        %3319 = vmatpush1.bf16.msra.mxu0 %v2398
        %3320 = vmatprep.subr.bf16.mxu0 %v2405
        %3321 = vmatpush1.bf16.msra.mxu0 %v2404
        %3322 = vmatprep.subr.bf16.mxu0 %v2411
        %3323 = vmatpush1.bf16.msra.mxu0 %v2410
        %3324 = vmatprep.subr.bf16.mxu0 %v2417
        %3325 = vmatpush1.bf16.msra.mxu0 %v2416
        %3326 = vmatprep.subr.bf16.mxu0 %v2423
        %3327 = vmatpush1.bf16.msra.mxu0 %v2422
        %3328 = vmatprep.mubr.bf16.mxu0 %v933
        %3329 = vmatmul.mubr.bf16.gmra.mrb[0].mxu0 %v932
        %v3330 = vpop.f32.mrb[0].mxu0
        %v3331 = vadd.f32 %v3258, %v3330
        %v3332 = vpop.f32.mrb[0].mxu0
        %v3333 = vadd.f32 %v3260, %v3332
        %v3334 = vpop.f32.mrb[0].mxu0
        %v3335 = vadd.f32 %v3262, %v3334
        %v3336 = vpop.f32.mrb[0].mxu0
        %v3337 = vadd.f32 %v3264, %v3336
        %3338 = vmatprep.mubr.bf16.mxu0 %v939
        %3339 = vmatmul.mubr.bf16.gmra.mrb[0].mxu0 %v938
        %v3340 = vpop.f32.mrb[0].mxu0
        %v3341 = vadd.f32 %v3268, %v3340
        %v3342 = vpop.f32.mrb[0].mxu0
        %v3343 = vadd.f32 %v3270, %v3342
        %v3344 = vpop.f32.mrb[0].mxu0
        %v3345 = vadd.f32 %v3272, %v3344
        %v3346 = vpop.f32.mrb[0].mxu0
        %v3347 = vadd.f32 %v3274, %v3346
        %3348 = vmatprep.mubr.bf16.mxu0 %v945
        %3349 = vmatmul.mubr.bf16.gmra.mrb[0].mxu0 %v944
        %v3350 = vpop.f32.mrb[0].mxu0
        %v3351 = vadd.f32 %v3278, %v3350
        %v3352 = vpop.f32.mrb[0].mxu0
        %v3353 = vadd.f32 %v3280, %v3352
        %v3354 = vpop.f32.mrb[0].mxu0
        %v3355 = vadd.f32 %v3282, %v3354
        %v3356 = vpop.f32.mrb[0].mxu0
        %v3357 = vadd.f32 %v3284, %v3356
        %3358 = vmatprep.mubr.bf16.mxu0 %v951
        %3359 = vmatmul.mubr.bf16.gmra.mrb[0].mxu0 %v950
        %v3360 = vpop.f32.mrb[0].mxu0
        %v3361 = vadd.f32 %v3288, %v3360
        %v3362 = vpop.f32.mrb[0].mxu0
        %v3363 = vadd.f32 %v3290, %v3362
        %v3364 = vpop.f32.mrb[0].mxu0
        %v3365 = vadd.f32 %v3292, %v3364
        %v3366 = vpop.f32.mrb[0].mxu0
        %v3367 = vadd.f32 %v3294, %v3366
        %3368 = vdwg.mxu0
        %v3369 = vtanh.pop %v2893
        %v3370 = vtanh.pop %v2895
        %v3371 = vtanh.pop %v3112
        %v3372 = vtanh.pop %v3114
        %v3373 = vtanh.pop %v3331
        %v3374 = vtanh.pop %v3333
        %v3375 = vtanh.pop %v2897
        %v3376 = vtanh.pop %v2899
        %v3377 = vtanh.pop %v3116
        %v3378 = vtanh.pop %v3118
        %v3379 = vtanh.pop %v3335
        %v3380 = vtanh.pop %v3337
        %v3381 = vtanh.pop %v2903
        %v3382 = vtanh.pop %v2905
        %v3383 = vtanh.pop %v3122
        %v3384 = vtanh.pop %v3124
        %v3385 = vtanh.pop %v3341
        %v3386 = vtanh.pop %v3343
        %v3387 = vtanh.pop %v2907
        %v3388 = vtanh.pop %v2909
        %v3389 = vtanh.pop %v3126
        %v3390 = vtanh.pop %v3128
        %v3391 = vtanh.pop %v3345
        %v3392 = vtanh.pop %v3347
        %v3393 = vtanh.pop %v2913
        %v3394 = vtanh.pop %v2915
        %v3395 = vtanh.pop %v3132
        %v3396 = vtanh.pop %v3134
        %v3397 = vtanh.pop %v3351
        %v3398 = vtanh.pop %v3353
        %v3399 = vtanh.pop %v2917
        %v3400 = vtanh.pop %v2919
        %v3401 = vtanh.pop %v3136
        %v3402 = vtanh.pop %v3138
        %v3403 = vtanh.pop %v3355
        %v3404 = vtanh.pop %v3357
        %v3405 = vtanh.pop %v2923
        %v3406 = vtanh.pop %v2925
        %v3407 = vtanh.pop %v3142
        %v3408 = vtanh.pop %v3144
        %v3409 = vtanh.pop %v3361
        %v3410 = vtanh.pop %v3363
        %v3411 = vtanh.pop %v2927
        %v3412 = vtanh.pop %v2929
        %v3413 = vtanh.pop %v3146
        %v3414 = vtanh.pop %v3148
        %v3415 = vtanh.pop %v3365
        %v3416 = vtanh.pop %v3367
        %v3417 = vpack.c.bf16 %v3375, %v3369
        %v3418 = vpack.c.bf16 %v3376, %v3370
        %v3419 = vpack.c.bf16 %v3377, %v3371
        %v3420 = vpack.c.bf16 %v3378, %v3372
        %v3421 = vpack.c.bf16 %v3379, %v3373
        %v3422 = vpack.c.bf16 %v3380, %v3374
        %v3423 = vpack.c.bf16 %v3387, %v3381
        %v3424 = vpack.c.bf16 %v3388, %v3382
        %v3425 = vpack.c.bf16 %v3389, %v3383
        %v3426 = vpack.c.bf16 %v3390, %v3384
        %v3427 = vpack.c.bf16 %v3391, %v3385
        %v3428 = vpack.c.bf16 %v3392, %v3386
        %v3429 = vpack.c.bf16 %v3399, %v3393
        %v3430 = vpack.c.bf16 %v3400, %v3394
        %v3431 = vpack.c.bf16 %v3401, %v3395
        %v3432 = vpack.c.bf16 %v3402, %v3396
        %v3433 = vpack.c.bf16 %v3403, %v3397
        %v3434 = vpack.c.bf16 %v3404, %v3398
        %v3435 = vpack.c.bf16 %v3411, %v3405
        %v3436 = vpack.c.bf16 %v3412, %v3406
        %v3437 = vpack.c.bf16 %v3413, %v3407
        %v3438 = vpack.c.bf16 %v3414, %v3408
        %v3439 = vpack.c.bf16 %v3415, %v3409
        %v3440 = vpack.c.bf16 %v3416, %v3410
        %v3441 = vld [vmem:[#allocation12] sm:$0xff]
        %v3442 = vld [vmem:[#allocation12 + $0x8] sm:$0xff]
        %v3443 = vld [vmem:[#allocation12 + $0x10] sm:$0xff]
        %v3444 = vld [vmem:[#allocation12 + $0x18] sm:$0xff]
        %v3445 = vld [vmem:[#allocation12 + $0x20] sm:$0xff]
        %v3446 = vld [vmem:[#allocation12 + $0x28] sm:$0xff]
        %v3447 = vld [vmem:[#allocation12 + $0x30] sm:$0xff]
        %v3448 = vld [vmem:[#allocation12 + $0x38] sm:$0xff]
        %v3449 = vld [vmem:[#allocation12 + $0x40] sm:$0xff]
        %v3450 = vld [vmem:[#allocation12 + $0x48] sm:$0xff]
        %v3451 = vld [vmem:[#allocation12 + $0x50] sm:$0xff]
        %v3452 = vld [vmem:[#allocation12 + $0x58] sm:$0xff]
        %v3453 = vld [vmem:[#allocation12 + $0x60] sm:$0xff]
        %v3454 = vld [vmem:[#allocation12 + $0x68] sm:$0xff]
        %v3455 = vld [vmem:[#allocation12 + $0x70] sm:$0xff]
        %v3456 = vld [vmem:[#allocation12 + $0x78] sm:$0xff]
        %v3457 = vld [vmem:[#allocation12 + $0x80] sm:$0xff]
        %v3458 = vld [vmem:[#allocation12 + $0x88] sm:$0xff]
        %v3459 = vld [vmem:[#allocation12 + $0x90] sm:$0xff]
        %v3460 = vld [vmem:[#allocation12 + $0x98] sm:$0xff]
        %v3461 = vld [vmem:[#allocation12 + $0xa0] sm:$0xff]
        %v3462 = vld [vmem:[#allocation12 + $0xa8] sm:$0xff]
        %v3463 = vld [vmem:[#allocation12 + $0xb0] sm:$0xff]
        %v3464 = vld [vmem:[#allocation12 + $0xb8] sm:$0xff]
        %v3465 = vld [vmem:[#allocation12 + $0xc0] sm:$0xff]
        %v3466 = vld [vmem:[#allocation12 + $0xc8] sm:$0xff]
        %v3467 = vld [vmem:[#allocation12 + $0xd0] sm:$0xff]
        %v3468 = vld [vmem:[#allocation12 + $0xd8] sm:$0xff]
        %v3469 = vld [vmem:[#allocation12 + $0xe0] sm:$0xff]
        %v3470 = vld [vmem:[#allocation12 + $0xe8] sm:$0xff]
        %v3471 = vld [vmem:[#allocation12 + $0xf0] sm:$0xff]
        %v3472 = vld [vmem:[#allocation12 + $0xf8] sm:$0xff]
        %v3473 = vld [vmem:[#allocation12 + $0x100] sm:$0xff]
        %v3474 = vld [vmem:[#allocation12 + $0x108] sm:$0xff]
        %v3475 = vld [vmem:[#allocation12 + $0x110] sm:$0xff]
        %v3476 = vld [vmem:[#allocation12 + $0x118] sm:$0xff]
        %v3477 = vld [vmem:[#allocation12 + $0x120] sm:$0xff]
        %v3478 = vld [vmem:[#allocation12 + $0x128] sm:$0xff]
        %v3479 = vld [vmem:[#allocation12 + $0x130] sm:$0xff]
        %v3480 = vld [vmem:[#allocation12 + $0x138] sm:$0xff]
        %v3481 = vld [vmem:[#allocation12 + $0x140] sm:$0xff]
        %v3482 = vld [vmem:[#allocation12 + $0x148] sm:$0xff]
        %v3483 = vld [vmem:[#allocation12 + $0x150] sm:$0xff]
        %v3484 = vld [vmem:[#allocation12 + $0x158] sm:$0xff]
        %v3485 = vld [vmem:[#allocation12 + $0x160] sm:$0xff]
        %v3486 = vld [vmem:[#allocation12 + $0x168] sm:$0xff]
        %v3487 = vld [vmem:[#allocation12 + $0x170] sm:$0xff]
        %v3488 = vld [vmem:[#allocation12 + $0x178] sm:$0xff]
        %v3489 = vld [vmem:[#allocation12 + $0x180] sm:$0xff]
        %v3490 = vld [vmem:[#allocation12 + $0x188] sm:$0xff]
        %v3491 = vld [vmem:[#allocation12 + $0x190] sm:$0xff]
        %v3492 = vld [vmem:[#allocation12 + $0x198] sm:$0xff]
        %v3493 = vld [vmem:[#allocation12 + $0x1a0] sm:$0xff]
        %v3494 = vld [vmem:[#allocation12 + $0x1a8] sm:$0xff]
        %v3495 = vld [vmem:[#allocation12 + $0x1b0] sm:$0xff]
        %v3496 = vld [vmem:[#allocation12 + $0x1b8] sm:$0xff]
        %v3497 = vld [vmem:[#allocation12 + $0x1c0] sm:$0xff]
        %v3498 = vld [vmem:[#allocation12 + $0x1c8] sm:$0xff]
        %v3499 = vld [vmem:[#allocation12 + $0x1d0] sm:$0xff]
        %v3500 = vld [vmem:[#allocation12 + $0x1d8] sm:$0xff]
        %v3501 = vld [vmem:[#allocation12 + $0x1e0] sm:$0xff]
        %v3502 = vld [vmem:[#allocation12 + $0x1e8] sm:$0xff]
        %v3503 = vld [vmem:[#allocation12 + $0x1f0] sm:$0xff]
        %v3504 = vld [vmem:[#allocation12 + $0x1f8] sm:$0xff]
        %v3505 = vld [vmem:[#allocation12 + $0x200] sm:$0xff]
        %v3506 = vld [vmem:[#allocation12 + $0x208] sm:$0xff]
        %v3507 = vld [vmem:[#allocation12 + $0x210] sm:$0xff]
        %v3508 = vld [vmem:[#allocation12 + $0x218] sm:$0xff]
        %v3509 = vld [vmem:[#allocation12 + $0x220] sm:$0xff]
        %v3510 = vld [vmem:[#allocation12 + $0x228] sm:$0xff]
        %v3511 = vld [vmem:[#allocation12 + $0x230] sm:$0xff]
        %v3512 = vld [vmem:[#allocation12 + $0x238] sm:$0xff]
        %v3513 = vld [vmem:[#allocation12 + $0x240] sm:$0xff]
        %v3514 = vld [vmem:[#allocation12 + $0x248] sm:$0xff]
        %v3515 = vld [vmem:[#allocation12 + $0x250] sm:$0xff]
        %v3516 = vld [vmem:[#allocation12 + $0x258] sm:$0xff]
        %v3517 = vld [vmem:[#allocation12 + $0x260] sm:$0xff]
        %v3518 = vld [vmem:[#allocation12 + $0x268] sm:$0xff]
        %v3519 = vld [vmem:[#allocation12 + $0x270] sm:$0xff]
        %v3520 = vld [vmem:[#allocation12 + $0x278] sm:$0xff]
        %v3521 = vld [vmem:[#allocation12 + $0x280] sm:$0xff]
        %v3522 = vld [vmem:[#allocation12 + $0x288] sm:$0xff]
        %v3523 = vld [vmem:[#allocation12 + $0x290] sm:$0xff]
        %v3524 = vld [vmem:[#allocation12 + $0x298] sm:$0xff]
        %v3525 = vld [vmem:[#allocation12 + $0x2a0] sm:$0xff]
        %v3526 = vld [vmem:[#allocation12 + $0x2a8] sm:$0xff]
        %v3527 = vld [vmem:[#allocation12 + $0x2b0] sm:$0xff]
        %v3528 = vld [vmem:[#allocation12 + $0x2b8] sm:$0xff]
        %v3529 = vld [vmem:[#allocation12 + $0x2c0] sm:$0xff]
        %v3530 = vld [vmem:[#allocation12 + $0x2c8] sm:$0xff]
        %v3531 = vld [vmem:[#allocation12 + $0x2d0] sm:$0xff]
        %v3532 = vld [vmem:[#allocation12 + $0x2d8] sm:$0xff]
        %v3533 = vld [vmem:[#allocation12 + $0x2e0] sm:$0xff]
        %v3534 = vld [vmem:[#allocation12 + $0x2e8] sm:$0xff]
        %v3535 = vld [vmem:[#allocation12 + $0x2f0] sm:$0xff]
        %v3536 = vld [vmem:[#allocation12 + $0x2f8] sm:$0xff]
        %v3537 = vld [vmem:[#allocation12 + $0x300] sm:$0xff]
        %v3538 = vld [vmem:[#allocation12 + $0x308] sm:$0xff]
        %v3539 = vld [vmem:[#allocation12 + $0x310] sm:$0xff]
        %v3540 = vld [vmem:[#allocation12 + $0x318] sm:$0xff]
        %v3541 = vld [vmem:[#allocation12 + $0x320] sm:$0xff]
        %v3542 = vld [vmem:[#allocation12 + $0x328] sm:$0xff]
        %v3543 = vld [vmem:[#allocation12 + $0x330] sm:$0xff]
        %v3544 = vld [vmem:[#allocation12 + $0x338] sm:$0xff]
        %v3545 = vld [vmem:[#allocation12 + $0x340] sm:$0xff]
        %v3546 = vld [vmem:[#allocation12 + $0x348] sm:$0xff]
        %v3547 = vld [vmem:[#allocation12 + $0x350] sm:$0xff]
        %v3548 = vld [vmem:[#allocation12 + $0x358] sm:$0xff]
        %v3549 = vld [vmem:[#allocation12 + $0x360] sm:$0xff]
        %v3550 = vld [vmem:[#allocation12 + $0x368] sm:$0xff]
        %v3551 = vld [vmem:[#allocation12 + $0x370] sm:$0xff]
        %v3552 = vld [vmem:[#allocation12 + $0x378] sm:$0xff]
        %v3553 = vld [vmem:[#allocation12 + $0x380] sm:$0xff]
        %v3554 = vld [vmem:[#allocation12 + $0x388] sm:$0xff]
        %v3555 = vld [vmem:[#allocation12 + $0x390] sm:$0xff]
        %v3556 = vld [vmem:[#allocation12 + $0x398] sm:$0xff]
        %v3557 = vld [vmem:[#allocation12 + $0x3a0] sm:$0xff]
        %v3558 = vld [vmem:[#allocation12 + $0x3a8] sm:$0xff]
        %v3559 = vld [vmem:[#allocation12 + $0x3b0] sm:$0xff]
        %v3560 = vld [vmem:[#allocation12 + $0x3b8] sm:$0xff]
        %v3561 = vld [vmem:[#allocation12 + $0x3c0] sm:$0xff]
        %v3562 = vld [vmem:[#allocation12 + $0x3c8] sm:$0xff]
        %v3563 = vld [vmem:[#allocation12 + $0x3d0] sm:$0xff]
        %v3564 = vld [vmem:[#allocation12 + $0x3d8] sm:$0xff]
        %v3565 = vld [vmem:[#allocation12 + $0x3e0] sm:$0xff]
        %v3566 = vld [vmem:[#allocation12 + $0x3e8] sm:$0xff]
        %v3567 = vld [vmem:[#allocation12 + $0x3f0] sm:$0xff]
        %v3568 = vld [vmem:[#allocation12 + $0x3f8] sm:$0xff]
        %v3569 = vld [vmem:[#allocation12 + $0x400] sm:$0xff]
        %v3570 = vld [vmem:[#allocation12 + $0x408] sm:$0xff]
        %v3571 = vld [vmem:[#allocation12 + $0x410] sm:$0xff]
        %v3572 = vld [vmem:[#allocation12 + $0x418] sm:$0xff]
        %v3573 = vld [vmem:[#allocation12 + $0x420] sm:$0xff]
        %v3574 = vld [vmem:[#allocation12 + $0x428] sm:$0xff]
        %v3575 = vld [vmem:[#allocation12 + $0x430] sm:$0xff]
        %v3576 = vld [vmem:[#allocation12 + $0x438] sm:$0xff]
        %v3577 = vld [vmem:[#allocation12 + $0x440] sm:$0xff]
        %v3578 = vld [vmem:[#allocation12 + $0x448] sm:$0xff]
        %v3579 = vld [vmem:[#allocation12 + $0x450] sm:$0xff]
        %v3580 = vld [vmem:[#allocation12 + $0x458] sm:$0xff]
        %v3581 = vld [vmem:[#allocation12 + $0x460] sm:$0xff]
        %v3582 = vld [vmem:[#allocation12 + $0x468] sm:$0xff]
        %v3583 = vld [vmem:[#allocation12 + $0x470] sm:$0xff]
        %v3584 = vld [vmem:[#allocation12 + $0x478] sm:$0xff]
        %v3585 = vld [vmem:[#allocation12 + $0x480] sm:$0xff]
        %v3586 = vld [vmem:[#allocation12 + $0x488] sm:$0xff]
        %v3587 = vld [vmem:[#allocation12 + $0x490] sm:$0xff]
        %v3588 = vld [vmem:[#allocation12 + $0x498] sm:$0xff]
        %v3589 = vld [vmem:[#allocation12 + $0x4a0] sm:$0xff]
        %v3590 = vld [vmem:[#allocation12 + $0x4a8] sm:$0xff]
        %v3591 = vld [vmem:[#allocation12 + $0x4b0] sm:$0xff]
        %v3592 = vld [vmem:[#allocation12 + $0x4b8] sm:$0xff]
        %v3593 = vld [vmem:[#allocation12 + $0x4c0] sm:$0xff]
        %v3594 = vld [vmem:[#allocation12 + $0x4c8] sm:$0xff]
        %v3595 = vld [vmem:[#allocation12 + $0x4d0] sm:$0xff]
        %v3596 = vld [vmem:[#allocation12 + $0x4d8] sm:$0xff]
        %v3597 = vld [vmem:[#allocation12 + $0x4e0] sm:$0xff]
        %v3598 = vld [vmem:[#allocation12 + $0x4e8] sm:$0xff]
        %v3599 = vld [vmem:[#allocation12 + $0x4f0] sm:$0xff]
        %v3600 = vld [vmem:[#allocation12 + $0x4f8] sm:$0xff]
        %v3601 = vld [vmem:[#allocation12 + $0x500] sm:$0xff]
        %v3602 = vld [vmem:[#allocation12 + $0x508] sm:$0xff]
        %v3603 = vld [vmem:[#allocation12 + $0x510] sm:$0xff]
        %v3604 = vld [vmem:[#allocation12 + $0x518] sm:$0xff]
        %v3605 = vld [vmem:[#allocation12 + $0x520] sm:$0xff]
        %v3606 = vld [vmem:[#allocation12 + $0x528] sm:$0xff]
        %v3607 = vld [vmem:[#allocation12 + $0x530] sm:$0xff]
        %v3608 = vld [vmem:[#allocation12 + $0x538] sm:$0xff]
        %v3609 = vld [vmem:[#allocation12 + $0x540] sm:$0xff]
        %v3610 = vld [vmem:[#allocation12 + $0x548] sm:$0xff]
        %v3611 = vld [vmem:[#allocation12 + $0x550] sm:$0xff]
        %v3612 = vld [vmem:[#allocation12 + $0x558] sm:$0xff]
        %v3613 = vld [vmem:[#allocation12 + $0x560] sm:$0xff]
        %v3614 = vld [vmem:[#allocation12 + $0x568] sm:$0xff]
        %v3615 = vld [vmem:[#allocation12 + $0x570] sm:$0xff]
        %v3616 = vld [vmem:[#allocation12 + $0x578] sm:$0xff]
        %v3617 = vld [vmem:[#allocation12 + $0x580] sm:$0xff]
        %v3618 = vld [vmem:[#allocation12 + $0x588] sm:$0xff]
        %v3619 = vld [vmem:[#allocation12 + $0x590] sm:$0xff]
        %v3620 = vld [vmem:[#allocation12 + $0x598] sm:$0xff]
        %v3621 = vld [vmem:[#allocation12 + $0x5a0] sm:$0xff]
        %v3622 = vld [vmem:[#allocation12 + $0x5a8] sm:$0xff]
        %v3623 = vld [vmem:[#allocation12 + $0x5b0] sm:$0xff]
        %v3624 = vld [vmem:[#allocation12 + $0x5b8] sm:$0xff]
        %v3625 = vld [vmem:[#allocation12 + $0x5c0] sm:$0xff]
        %v3626 = vld [vmem:[#allocation12 + $0x5c8] sm:$0xff]
        %v3627 = vld [vmem:[#allocation12 + $0x5d0] sm:$0xff]
        %v3628 = vld [vmem:[#allocation12 + $0x5d8] sm:$0xff]
        %v3629 = vld [vmem:[#allocation12 + $0x5e0] sm:$0xff]
        %v3630 = vld [vmem:[#allocation12 + $0x5e8] sm:$0xff]
        %v3631 = vld [vmem:[#allocation12 + $0x5f0] sm:$0xff]
        %v3632 = vld [vmem:[#allocation12 + $0x5f8] sm:$0xff]
        %v3633 = vld [vmem:[#allocation13] sm:$0xf]
        %v3635 = vlaneseq
        %v3636 = vshrl.u32 %v3635, 7
        %v3637 = vsub.s32 0, %v3636
        %v3638 = vrot.slane %v3633, %v3637
        %v3639 = vlaneseq
        %v3640 = vshrl.u32 %v3639, 7
        %v3641 = vsub.s32 1, %v3640
        %v3642 = vrot.slane %v3633, %v3641
        %v3643 = vlaneseq
        %v3644 = vshrl.u32 %v3643, 7
        %v3645 = vsub.s32 2, %v3644
        %v3646 = vrot.slane %v3633, %v3645
        %v3647 = vlaneseq
        %v3648 = vshrl.u32 %v3647, 7
        %v3649 = vsub.s32 3, %v3648
        %v3650 = vrot.slane %v3633, %v3649
        %v3847 = vunpack.c.l.b16 %v3441
        %v3848 = vunpack.c.h.b16 %v3441
        %v3849 = vunpack.c.l.b16 %v3442
        %v3850 = vunpack.c.h.b16 %v3442
        %v3851 = vunpack.c.l.b16 %v3443
        %v3852 = vunpack.c.h.b16 %v3443
        %v3853 = vunpack.c.l.b16 %v3444
        %v3854 = vunpack.c.h.b16 %v3444
        %v3855 = vunpack.c.l.b16 %v3445
        %v3856 = vunpack.c.h.b16 %v3445
        %v3857 = vunpack.c.l.b16 %v3446
        %v3858 = vunpack.c.h.b16 %v3446
        %v3859 = vunpack.c.l.b16 %v3447
        %v3860 = vunpack.c.h.b16 %v3447
        %v3861 = vunpack.c.l.b16 %v3448
        %v3862 = vunpack.c.h.b16 %v3448
        %v3863 = vunpack.c.l.b16 %v3449
        %v3864 = vunpack.c.h.b16 %v3449
        %v3865 = vunpack.c.l.b16 %v3450
        %v3866 = vunpack.c.h.b16 %v3450
        %v3867 = vunpack.c.l.b16 %v3451
        %v3868 = vunpack.c.h.b16 %v3451
        %v3869 = vunpack.c.l.b16 %v3452
        %v3870 = vunpack.c.h.b16 %v3452
        %v3871 = vunpack.c.l.b16 %v3453
        %v3872 = vunpack.c.h.b16 %v3453
        %v3873 = vunpack.c.l.b16 %v3454
        %v3874 = vunpack.c.h.b16 %v3454
        %v3875 = vunpack.c.l.b16 %v3455
        %v3876 = vunpack.c.h.b16 %v3455
        %v3877 = vunpack.c.l.b16 %v3456
        %v3878 = vunpack.c.h.b16 %v3456
        %v3879 = vunpack.c.l.b16 %v3457
        %v3880 = vunpack.c.h.b16 %v3457
        %v3881 = vunpack.c.l.b16 %v3458
        %v3882 = vunpack.c.h.b16 %v3458
        %v3883 = vunpack.c.l.b16 %v3459
        %v3884 = vunpack.c.h.b16 %v3459
        %v3885 = vunpack.c.l.b16 %v3460
        %v3886 = vunpack.c.h.b16 %v3460
        %v3887 = vunpack.c.l.b16 %v3461
        %v3888 = vunpack.c.h.b16 %v3461
        %v3889 = vunpack.c.l.b16 %v3462
        %v3890 = vunpack.c.h.b16 %v3462
        %v3891 = vunpack.c.l.b16 %v3463
        %v3892 = vunpack.c.h.b16 %v3463
        %v3893 = vunpack.c.l.b16 %v3464
        %v3894 = vunpack.c.h.b16 %v3464
        %v3895 = vunpack.c.l.b16 %v3465
        %v3896 = vunpack.c.h.b16 %v3465
        %v3897 = vunpack.c.l.b16 %v3466
        %v3898 = vunpack.c.h.b16 %v3466
        %v3899 = vunpack.c.l.b16 %v3467
        %v3900 = vunpack.c.h.b16 %v3467
        %v3901 = vunpack.c.l.b16 %v3468
        %v3902 = vunpack.c.h.b16 %v3468
        %v3903 = vunpack.c.l.b16 %v3469
        %v3904 = vunpack.c.h.b16 %v3469
        %v3905 = vunpack.c.l.b16 %v3470
        %v3906 = vunpack.c.h.b16 %v3470
        %v3907 = vunpack.c.l.b16 %v3471
        %v3908 = vunpack.c.h.b16 %v3471
        %v3909 = vunpack.c.l.b16 %v3472
        %v3910 = vunpack.c.h.b16 %v3472
        %v3911 = vunpack.c.l.b16 %v3473
        %v3912 = vunpack.c.h.b16 %v3473
        %v3913 = vunpack.c.l.b16 %v3474
        %v3914 = vunpack.c.h.b16 %v3474
        %v3915 = vunpack.c.l.b16 %v3475
        %v3916 = vunpack.c.h.b16 %v3475
        %v3917 = vunpack.c.l.b16 %v3476
        %v3918 = vunpack.c.h.b16 %v3476
        %v3919 = vunpack.c.l.b16 %v3477
        %v3920 = vunpack.c.h.b16 %v3477
        %v3921 = vunpack.c.l.b16 %v3478
        %v3922 = vunpack.c.h.b16 %v3478
        %v3923 = vunpack.c.l.b16 %v3479
        %v3924 = vunpack.c.h.b16 %v3479
        %v3925 = vunpack.c.l.b16 %v3480
        %v3926 = vunpack.c.h.b16 %v3480
        %v3927 = vunpack.c.l.b16 %v3481
        %v3928 = vunpack.c.h.b16 %v3481
        %v3929 = vunpack.c.l.b16 %v3482
        %v3930 = vunpack.c.h.b16 %v3482
        %v3931 = vunpack.c.l.b16 %v3483
        %v3932 = vunpack.c.h.b16 %v3483
        %v3933 = vunpack.c.l.b16 %v3484
        %v3934 = vunpack.c.h.b16 %v3484
        %v3935 = vunpack.c.l.b16 %v3485
        %v3936 = vunpack.c.h.b16 %v3485
        %v3937 = vunpack.c.l.b16 %v3486
        %v3938 = vunpack.c.h.b16 %v3486
        %v3939 = vunpack.c.l.b16 %v3487
        %v3940 = vunpack.c.h.b16 %v3487
        %v3941 = vunpack.c.l.b16 %v3488
        %v3942 = vunpack.c.h.b16 %v3488
        %v3943 = vunpack.c.l.b16 %v3489
        %v3944 = vunpack.c.h.b16 %v3489
        %v3945 = vunpack.c.l.b16 %v3490
        %v3946 = vunpack.c.h.b16 %v3490
        %v3947 = vunpack.c.l.b16 %v3491
        %v3948 = vunpack.c.h.b16 %v3491
        %v3949 = vunpack.c.l.b16 %v3492
        %v3950 = vunpack.c.h.b16 %v3492
        %v3951 = vunpack.c.l.b16 %v3493
        %v3952 = vunpack.c.h.b16 %v3493
        %v3953 = vunpack.c.l.b16 %v3494
        %v3954 = vunpack.c.h.b16 %v3494
        %v3955 = vunpack.c.l.b16 %v3495
        %v3956 = vunpack.c.h.b16 %v3495
        %v3957 = vunpack.c.l.b16 %v3496
        %v3958 = vunpack.c.h.b16 %v3496
        %v3959 = vunpack.c.l.b16 %v3497
        %v3960 = vunpack.c.h.b16 %v3497
        %v3961 = vunpack.c.l.b16 %v3498
        %v3962 = vunpack.c.h.b16 %v3498
        %v3963 = vunpack.c.l.b16 %v3499
        %v3964 = vunpack.c.h.b16 %v3499
        %v3965 = vunpack.c.l.b16 %v3500
        %v3966 = vunpack.c.h.b16 %v3500
        %v3967 = vunpack.c.l.b16 %v3501
        %v3968 = vunpack.c.h.b16 %v3501
        %v3969 = vunpack.c.l.b16 %v3502
        %v3970 = vunpack.c.h.b16 %v3502
        %v3971 = vunpack.c.l.b16 %v3503
        %v3972 = vunpack.c.h.b16 %v3503
        %v3973 = vunpack.c.l.b16 %v3504
        %v3974 = vunpack.c.h.b16 %v3504
        %v3975 = vunpack.c.l.b16 %v3505
        %v3976 = vunpack.c.h.b16 %v3505
        %v3977 = vunpack.c.l.b16 %v3506
        %v3978 = vunpack.c.h.b16 %v3506
        %v3979 = vunpack.c.l.b16 %v3507
        %v3980 = vunpack.c.h.b16 %v3507
        %v3981 = vunpack.c.l.b16 %v3508
        %v3982 = vunpack.c.h.b16 %v3508
        %v3983 = vunpack.c.l.b16 %v3509
        %v3984 = vunpack.c.h.b16 %v3509
        %v3985 = vunpack.c.l.b16 %v3510
        %v3986 = vunpack.c.h.b16 %v3510
        %v3987 = vunpack.c.l.b16 %v3511
        %v3988 = vunpack.c.h.b16 %v3511
        %v3989 = vunpack.c.l.b16 %v3512
        %v3990 = vunpack.c.h.b16 %v3512
        %v3991 = vunpack.c.l.b16 %v3513
        %v3992 = vunpack.c.h.b16 %v3513
        %v3993 = vunpack.c.l.b16 %v3514
        %v3994 = vunpack.c.h.b16 %v3514
        %v3995 = vunpack.c.l.b16 %v3515
        %v3996 = vunpack.c.h.b16 %v3515
        %v3997 = vunpack.c.l.b16 %v3516
        %v3998 = vunpack.c.h.b16 %v3516
        %v3999 = vunpack.c.l.b16 %v3517
        %v4000 = vunpack.c.h.b16 %v3517
        %v4001 = vunpack.c.l.b16 %v3518
        %v4002 = vunpack.c.h.b16 %v3518
        %v4003 = vunpack.c.l.b16 %v3519
        %v4004 = vunpack.c.h.b16 %v3519
        %v4005 = vunpack.c.l.b16 %v3520
        %v4006 = vunpack.c.h.b16 %v3520
        %v4007 = vunpack.c.l.b16 %v3521
        %v4008 = vunpack.c.h.b16 %v3521
        %v4009 = vunpack.c.l.b16 %v3522
        %v4010 = vunpack.c.h.b16 %v3522
        %v4011 = vunpack.c.l.b16 %v3523
        %v4012 = vunpack.c.h.b16 %v3523
        %v4013 = vunpack.c.l.b16 %v3524
        %v4014 = vunpack.c.h.b16 %v3524
        %v4015 = vunpack.c.l.b16 %v3525
        %v4016 = vunpack.c.h.b16 %v3525
        %v4017 = vunpack.c.l.b16 %v3526
        %v4018 = vunpack.c.h.b16 %v3526
        %v4019 = vunpack.c.l.b16 %v3527
        %v4020 = vunpack.c.h.b16 %v3527
        %v4021 = vunpack.c.l.b16 %v3528
        %v4022 = vunpack.c.h.b16 %v3528
        %v4023 = vunpack.c.l.b16 %v3529
        %v4024 = vunpack.c.h.b16 %v3529
        %v4025 = vunpack.c.l.b16 %v3530
        %v4026 = vunpack.c.h.b16 %v3530
        %v4027 = vunpack.c.l.b16 %v3531
        %v4028 = vunpack.c.h.b16 %v3531
        %v4029 = vunpack.c.l.b16 %v3532
        %v4030 = vunpack.c.h.b16 %v3532
        %v4031 = vunpack.c.l.b16 %v3533
        %v4032 = vunpack.c.h.b16 %v3533
        %v4033 = vunpack.c.l.b16 %v3534
        %v4034 = vunpack.c.h.b16 %v3534
        %v4035 = vunpack.c.l.b16 %v3535
        %v4036 = vunpack.c.h.b16 %v3535
        %v4037 = vunpack.c.l.b16 %v3536
        %v4038 = vunpack.c.h.b16 %v3536
        %v4039 = vunpack.c.l.b16 %v3537
        %v4040 = vunpack.c.h.b16 %v3537
        %v4041 = vunpack.c.l.b16 %v3538
        %v4042 = vunpack.c.h.b16 %v3538
        %v4043 = vunpack.c.l.b16 %v3539
        %v4044 = vunpack.c.h.b16 %v3539
        %v4045 = vunpack.c.l.b16 %v3540
        %v4046 = vunpack.c.h.b16 %v3540
        %v4047 = vunpack.c.l.b16 %v3541
        %v4048 = vunpack.c.h.b16 %v3541
        %v4049 = vunpack.c.l.b16 %v3542
        %v4050 = vunpack.c.h.b16 %v3542
        %v4051 = vunpack.c.l.b16 %v3543
        %v4052 = vunpack.c.h.b16 %v3543
        %v4053 = vunpack.c.l.b16 %v3544
        %v4054 = vunpack.c.h.b16 %v3544
        %v4055 = vunpack.c.l.b16 %v3545
        %v4056 = vunpack.c.h.b16 %v3545
        %v4057 = vunpack.c.l.b16 %v3546
        %v4058 = vunpack.c.h.b16 %v3546
        %v4059 = vunpack.c.l.b16 %v3547
        %v4060 = vunpack.c.h.b16 %v3547
        %v4061 = vunpack.c.l.b16 %v3548
        %v4062 = vunpack.c.h.b16 %v3548
        %v4063 = vunpack.c.l.b16 %v3549
        %v4064 = vunpack.c.h.b16 %v3549
        %v4065 = vunpack.c.l.b16 %v3550
        %v4066 = vunpack.c.h.b16 %v3550
        %v4067 = vunpack.c.l.b16 %v3551
        %v4068 = vunpack.c.h.b16 %v3551
        %v4069 = vunpack.c.l.b16 %v3552
        %v4070 = vunpack.c.h.b16 %v3552
        %v4071 = vunpack.c.l.b16 %v3553
        %v4072 = vunpack.c.h.b16 %v3553
        %v4073 = vunpack.c.l.b16 %v3554
        %v4074 = vunpack.c.h.b16 %v3554
        %v4075 = vunpack.c.l.b16 %v3555
        %v4076 = vunpack.c.h.b16 %v3555
        %v4077 = vunpack.c.l.b16 %v3556
        %v4078 = vunpack.c.h.b16 %v3556
        %v4079 = vunpack.c.l.b16 %v3557
        %v4080 = vunpack.c.h.b16 %v3557
        %v4081 = vunpack.c.l.b16 %v3558
        %v4082 = vunpack.c.h.b16 %v3558
        %v4083 = vunpack.c.l.b16 %v3559
        %v4084 = vunpack.c.h.b16 %v3559
        %v4085 = vunpack.c.l.b16 %v3560
        %v4086 = vunpack.c.h.b16 %v3560
        %v4087 = vunpack.c.l.b16 %v3561
        %v4088 = vunpack.c.h.b16 %v3561
        %v4089 = vunpack.c.l.b16 %v3562
        %v4090 = vunpack.c.h.b16 %v3562
        %v4091 = vunpack.c.l.b16 %v3563
        %v4092 = vunpack.c.h.b16 %v3563
        %v4093 = vunpack.c.l.b16 %v3564
        %v4094 = vunpack.c.h.b16 %v3564
        %v4095 = vunpack.c.l.b16 %v3565
        %v4096 = vunpack.c.h.b16 %v3565
        %v4097 = vunpack.c.l.b16 %v3566
        %v4098 = vunpack.c.h.b16 %v3566
        %v4099 = vunpack.c.l.b16 %v3567
        %v4100 = vunpack.c.h.b16 %v3567
        %v4101 = vunpack.c.l.b16 %v3568
        %v4102 = vunpack.c.h.b16 %v3568
        %v4103 = vunpack.c.l.b16 %v3569
        %v4104 = vunpack.c.h.b16 %v3569
        %v4105 = vunpack.c.l.b16 %v3570
        %v4106 = vunpack.c.h.b16 %v3570
        %v4107 = vunpack.c.l.b16 %v3571
        %v4108 = vunpack.c.h.b16 %v3571
        %v4109 = vunpack.c.l.b16 %v3572
        %v4110 = vunpack.c.h.b16 %v3572
        %v4111 = vunpack.c.l.b16 %v3573
        %v4112 = vunpack.c.h.b16 %v3573
        %v4113 = vunpack.c.l.b16 %v3574
        %v4114 = vunpack.c.h.b16 %v3574
        %v4115 = vunpack.c.l.b16 %v3575
        %v4116 = vunpack.c.h.b16 %v3575
        %v4117 = vunpack.c.l.b16 %v3576
        %v4118 = vunpack.c.h.b16 %v3576
        %v4119 = vunpack.c.l.b16 %v3577
        %v4120 = vunpack.c.h.b16 %v3577
        %v4121 = vunpack.c.l.b16 %v3578
        %v4122 = vunpack.c.h.b16 %v3578
        %v4123 = vunpack.c.l.b16 %v3579
        %v4124 = vunpack.c.h.b16 %v3579
        %v4125 = vunpack.c.l.b16 %v3580
        %v4126 = vunpack.c.h.b16 %v3580
        %v4127 = vunpack.c.l.b16 %v3581
        %v4128 = vunpack.c.h.b16 %v3581
        %v4129 = vunpack.c.l.b16 %v3582
        %v4130 = vunpack.c.h.b16 %v3582
        %v4131 = vunpack.c.l.b16 %v3583
        %v4132 = vunpack.c.h.b16 %v3583
        %v4133 = vunpack.c.l.b16 %v3584
        %v4134 = vunpack.c.h.b16 %v3584
        %v4135 = vunpack.c.l.b16 %v3585
        %v4136 = vunpack.c.h.b16 %v3585
        %v4137 = vunpack.c.l.b16 %v3586
        %v4138 = vunpack.c.h.b16 %v3586
        %v4139 = vunpack.c.l.b16 %v3587
        %v4140 = vunpack.c.h.b16 %v3587
        %v4141 = vunpack.c.l.b16 %v3588
        %v4142 = vunpack.c.h.b16 %v3588
        %v4143 = vunpack.c.l.b16 %v3589
        %v4144 = vunpack.c.h.b16 %v3589
        %v4145 = vunpack.c.l.b16 %v3590
        %v4146 = vunpack.c.h.b16 %v3590
        %v4147 = vunpack.c.l.b16 %v3591
        %v4148 = vunpack.c.h.b16 %v3591
        %v4149 = vunpack.c.l.b16 %v3592
        %v4150 = vunpack.c.h.b16 %v3592
        %v4151 = vunpack.c.l.b16 %v3593
        %v4152 = vunpack.c.h.b16 %v3593
        %v4153 = vunpack.c.l.b16 %v3594
        %v4154 = vunpack.c.h.b16 %v3594
        %v4155 = vunpack.c.l.b16 %v3595
        %v4156 = vunpack.c.h.b16 %v3595
        %v4157 = vunpack.c.l.b16 %v3596
        %v4158 = vunpack.c.h.b16 %v3596
        %v4159 = vunpack.c.l.b16 %v3597
        %v4160 = vunpack.c.h.b16 %v3597
        %v4161 = vunpack.c.l.b16 %v3598
        %v4162 = vunpack.c.h.b16 %v3598
        %v4163 = vunpack.c.l.b16 %v3599
        %v4164 = vunpack.c.h.b16 %v3599
        %v4165 = vunpack.c.l.b16 %v3600
        %v4166 = vunpack.c.h.b16 %v3600
        %v4167 = vunpack.c.l.b16 %v3601
        %v4168 = vunpack.c.h.b16 %v3601
        %v4169 = vunpack.c.l.b16 %v3602
        %v4170 = vunpack.c.h.b16 %v3602
        %v4171 = vunpack.c.l.b16 %v3603
        %v4172 = vunpack.c.h.b16 %v3603
        %v4173 = vunpack.c.l.b16 %v3604
        %v4174 = vunpack.c.h.b16 %v3604
        %v4175 = vunpack.c.l.b16 %v3605
        %v4176 = vunpack.c.h.b16 %v3605
        %v4177 = vunpack.c.l.b16 %v3606
        %v4178 = vunpack.c.h.b16 %v3606
        %v4179 = vunpack.c.l.b16 %v3607
        %v4180 = vunpack.c.h.b16 %v3607
        %v4181 = vunpack.c.l.b16 %v3608
        %v4182 = vunpack.c.h.b16 %v3608
        %v4183 = vunpack.c.l.b16 %v3609
        %v4184 = vunpack.c.h.b16 %v3609
        %v4185 = vunpack.c.l.b16 %v3610
        %v4186 = vunpack.c.h.b16 %v3610
        %v4187 = vunpack.c.l.b16 %v3611
        %v4188 = vunpack.c.h.b16 %v3611
        %v4189 = vunpack.c.l.b16 %v3612
        %v4190 = vunpack.c.h.b16 %v3612
        %v4191 = vunpack.c.l.b16 %v3613
        %v4192 = vunpack.c.h.b16 %v3613
        %v4193 = vunpack.c.l.b16 %v3614
        %v4194 = vunpack.c.h.b16 %v3614
        %v4195 = vunpack.c.l.b16 %v3615
        %v4196 = vunpack.c.h.b16 %v3615
        %v4197 = vunpack.c.l.b16 %v3616
        %v4198 = vunpack.c.h.b16 %v3616
        %v4199 = vunpack.c.l.b16 %v3617
        %v4200 = vunpack.c.h.b16 %v3617
        %v4201 = vunpack.c.l.b16 %v3618
        %v4202 = vunpack.c.h.b16 %v3618
        %v4203 = vunpack.c.l.b16 %v3619
        %v4204 = vunpack.c.h.b16 %v3619
        %v4205 = vunpack.c.l.b16 %v3620
        %v4206 = vunpack.c.h.b16 %v3620
        %v4207 = vunpack.c.l.b16 %v3621
        %v4208 = vunpack.c.h.b16 %v3621
        %v4209 = vunpack.c.l.b16 %v3622
        %v4210 = vunpack.c.h.b16 %v3622
        %v4211 = vunpack.c.l.b16 %v3623
        %v4212 = vunpack.c.h.b16 %v3623
        %v4213 = vunpack.c.l.b16 %v3624
        %v4214 = vunpack.c.h.b16 %v3624
        %v4215 = vunpack.c.l.b16 %v3625
        %v4216 = vunpack.c.h.b16 %v3625
        %v4217 = vunpack.c.l.b16 %v3626
        %v4218 = vunpack.c.h.b16 %v3626
        %v4219 = vunpack.c.l.b16 %v3627
        %v4220 = vunpack.c.h.b16 %v3627
        %v4221 = vunpack.c.l.b16 %v3628
        %v4222 = vunpack.c.h.b16 %v3628
        %v4223 = vunpack.c.l.b16 %v3629
        %v4224 = vunpack.c.h.b16 %v3629
        %v4225 = vunpack.c.l.b16 %v3630
        %v4226 = vunpack.c.h.b16 %v3630
        %v4227 = vunpack.c.l.b16 %v3631
        %v4228 = vunpack.c.h.b16 %v3631
        %v4229 = vunpack.c.l.b16 %v3632
        %v4230 = vunpack.c.h.b16 %v3632
        %v4231 = vpack.c.b16 %v3851, %v3847
        %v4232 = vpack.c.b16 %v3852, %v3848
        %v4233 = vpack.c.b16 %v3853, %v3849
        %v4234 = vpack.c.b16 %v3854, %v3850
        %v4235 = vpack.c.b16 %v3859, %v3855
        %v4236 = vpack.c.b16 %v3860, %v3856
        %v4237 = vpack.c.b16 %v3861, %v3857
        %v4238 = vpack.c.b16 %v3862, %v3858
        %v4239 = vpack.c.b16 %v3867, %v3863
        %v4240 = vpack.c.b16 %v3868, %v3864
        %v4241 = vpack.c.b16 %v3869, %v3865
        %v4242 = vpack.c.b16 %v3870, %v3866
        %v4243 = vpack.c.b16 %v3875, %v3871
        %v4244 = vpack.c.b16 %v3876, %v3872
        %v4245 = vpack.c.b16 %v3877, %v3873
        %v4246 = vpack.c.b16 %v3878, %v3874
        %v4247 = vpack.c.b16 %v3883, %v3879
        %v4248 = vpack.c.b16 %v3884, %v3880
        %v4249 = vpack.c.b16 %v3885, %v3881
        %v4250 = vpack.c.b16 %v3886, %v3882
        %v4251 = vpack.c.b16 %v3891, %v3887
        %v4252 = vpack.c.b16 %v3892, %v3888
        %v4253 = vpack.c.b16 %v3893, %v3889
        %v4254 = vpack.c.b16 %v3894, %v3890
        %v4255 = vpack.c.b16 %v3899, %v3895
        %v4256 = vpack.c.b16 %v3900, %v3896
        %v4257 = vpack.c.b16 %v3901, %v3897
        %v4258 = vpack.c.b16 %v3902, %v3898
        %v4259 = vpack.c.b16 %v3907, %v3903
        %v4260 = vpack.c.b16 %v3908, %v3904
        %v4261 = vpack.c.b16 %v3909, %v3905
        %v4262 = vpack.c.b16 %v3910, %v3906
        %v4263 = vpack.c.b16 %v3915, %v3911
        %v4264 = vpack.c.b16 %v3916, %v3912
        %v4265 = vpack.c.b16 %v3917, %v3913
        %v4266 = vpack.c.b16 %v3918, %v3914
        %v4267 = vpack.c.b16 %v3923, %v3919
        %v4268 = vpack.c.b16 %v3924, %v3920
        %v4269 = vpack.c.b16 %v3925, %v3921
        %v4270 = vpack.c.b16 %v3926, %v3922
        %v4271 = vpack.c.b16 %v3931, %v3927
        %v4272 = vpack.c.b16 %v3932, %v3928
        %v4273 = vpack.c.b16 %v3933, %v3929
        %v4274 = vpack.c.b16 %v3934, %v3930
        %v4275 = vpack.c.b16 %v3939, %v3935
        %v4276 = vpack.c.b16 %v3940, %v3936
        %v4277 = vpack.c.b16 %v3941, %v3937
        %v4278 = vpack.c.b16 %v3942, %v3938
        %v4279 = vpack.c.b16 %v3947, %v3943
        %v4280 = vpack.c.b16 %v3948, %v3944
        %v4281 = vpack.c.b16 %v3949, %v3945
        %v4282 = vpack.c.b16 %v3950, %v3946
        %v4283 = vpack.c.b16 %v3955, %v3951
        %v4284 = vpack.c.b16 %v3956, %v3952
        %v4285 = vpack.c.b16 %v3957, %v3953
        %v4286 = vpack.c.b16 %v3958, %v3954
        %v4287 = vpack.c.b16 %v3963, %v3959
        %v4288 = vpack.c.b16 %v3964, %v3960
        %v4289 = vpack.c.b16 %v3965, %v3961
        %v4290 = vpack.c.b16 %v3966, %v3962
        %v4291 = vpack.c.b16 %v3971, %v3967
        %v4292 = vpack.c.b16 %v3972, %v3968
        %v4293 = vpack.c.b16 %v3973, %v3969
        %v4294 = vpack.c.b16 %v3974, %v3970
        %v4295 = vpack.c.b16 %v3979, %v3975
        %v4296 = vpack.c.b16 %v3980, %v3976
        %v4297 = vpack.c.b16 %v3981, %v3977
        %v4298 = vpack.c.b16 %v3982, %v3978
        %v4299 = vpack.c.b16 %v3987, %v3983
        %v4300 = vpack.c.b16 %v3988, %v3984
        %v4301 = vpack.c.b16 %v3989, %v3985
        %v4302 = vpack.c.b16 %v3990, %v3986
        %v4303 = vpack.c.b16 %v3995, %v3991
        %v4304 = vpack.c.b16 %v3996, %v3992
        %v4305 = vpack.c.b16 %v3997, %v3993
        %v4306 = vpack.c.b16 %v3998, %v3994
        %v4307 = vpack.c.b16 %v4003, %v3999
        %v4308 = vpack.c.b16 %v4004, %v4000
        %v4309 = vpack.c.b16 %v4005, %v4001
        %v4310 = vpack.c.b16 %v4006, %v4002
        %v4311 = vpack.c.b16 %v4011, %v4007
        %v4312 = vpack.c.b16 %v4012, %v4008
        %v4313 = vpack.c.b16 %v4013, %v4009
        %v4314 = vpack.c.b16 %v4014, %v4010
        %v4315 = vpack.c.b16 %v4019, %v4015
        %v4316 = vpack.c.b16 %v4020, %v4016
        %v4317 = vpack.c.b16 %v4021, %v4017
        %v4318 = vpack.c.b16 %v4022, %v4018
        %v4319 = vpack.c.b16 %v4027, %v4023
        %v4320 = vpack.c.b16 %v4028, %v4024
        %v4321 = vpack.c.b16 %v4029, %v4025
        %v4322 = vpack.c.b16 %v4030, %v4026
        %v4323 = vpack.c.b16 %v4035, %v4031
        %v4324 = vpack.c.b16 %v4036, %v4032
        %v4325 = vpack.c.b16 %v4037, %v4033
        %v4326 = vpack.c.b16 %v4038, %v4034
        %v4327 = vpack.c.b16 %v4043, %v4039
        %v4328 = vpack.c.b16 %v4044, %v4040
        %v4329 = vpack.c.b16 %v4045, %v4041
        %v4330 = vpack.c.b16 %v4046, %v4042
        %v4331 = vpack.c.b16 %v4051, %v4047
        %v4332 = vpack.c.b16 %v4052, %v4048
        %v4333 = vpack.c.b16 %v4053, %v4049
        %v4334 = vpack.c.b16 %v4054, %v4050
        %v4335 = vpack.c.b16 %v4059, %v4055
        %v4336 = vpack.c.b16 %v4060, %v4056
        %v4337 = vpack.c.b16 %v4061, %v4057
        %v4338 = vpack.c.b16 %v4062, %v4058
        %v4339 = vpack.c.b16 %v4067, %v4063
        %v4340 = vpack.c.b16 %v4068, %v4064
        %v4341 = vpack.c.b16 %v4069, %v4065
        %v4342 = vpack.c.b16 %v4070, %v4066
        %v4343 = vpack.c.b16 %v4075, %v4071
        %v4344 = vpack.c.b16 %v4076, %v4072
        %v4345 = vpack.c.b16 %v4077, %v4073
        %v4346 = vpack.c.b16 %v4078, %v4074
        %v4347 = vpack.c.b16 %v4083, %v4079
        %v4348 = vpack.c.b16 %v4084, %v4080
        %v4349 = vpack.c.b16 %v4085, %v4081
        %v4350 = vpack.c.b16 %v4086, %v4082
        %v4351 = vpack.c.b16 %v4091, %v4087
        %v4352 = vpack.c.b16 %v4092, %v4088
        %v4353 = vpack.c.b16 %v4093, %v4089
        %v4354 = vpack.c.b16 %v4094, %v4090
        %v4355 = vpack.c.b16 %v4099, %v4095
        %v4356 = vpack.c.b16 %v4100, %v4096
        %v4357 = vpack.c.b16 %v4101, %v4097
        %v4358 = vpack.c.b16 %v4102, %v4098
        %v4359 = vpack.c.b16 %v4107, %v4103
        %v4360 = vpack.c.b16 %v4108, %v4104
        %v4361 = vpack.c.b16 %v4109, %v4105
        %v4362 = vpack.c.b16 %v4110, %v4106
        %v4363 = vpack.c.b16 %v4115, %v4111
        %v4364 = vpack.c.b16 %v4116, %v4112
        %v4365 = vpack.c.b16 %v4117, %v4113
        %v4366 = vpack.c.b16 %v4118, %v4114
        %v4367 = vpack.c.b16 %v4123, %v4119
        %v4368 = vpack.c.b16 %v4124, %v4120
        %v4369 = vpack.c.b16 %v4125, %v4121
        %v4370 = vpack.c.b16 %v4126, %v4122
        %v4371 = vpack.c.b16 %v4131, %v4127
        %v4372 = vpack.c.b16 %v4132, %v4128
        %v4373 = vpack.c.b16 %v4133, %v4129
        %v4374 = vpack.c.b16 %v4134, %v4130
        %v4375 = vpack.c.b16 %v4139, %v4135
        %v4376 = vpack.c.b16 %v4140, %v4136
        %v4377 = vpack.c.b16 %v4141, %v4137
        %v4378 = vpack.c.b16 %v4142, %v4138
        %v4379 = vpack.c.b16 %v4147, %v4143
        %v4380 = vpack.c.b16 %v4148, %v4144
        %v4381 = vpack.c.b16 %v4149, %v4145
        %v4382 = vpack.c.b16 %v4150, %v4146
        %v4383 = vpack.c.b16 %v4155, %v4151
        %v4384 = vpack.c.b16 %v4156, %v4152
        %v4385 = vpack.c.b16 %v4157, %v4153
        %v4386 = vpack.c.b16 %v4158, %v4154
        %v4387 = vpack.c.b16 %v4163, %v4159
        %v4388 = vpack.c.b16 %v4164, %v4160
        %v4389 = vpack.c.b16 %v4165, %v4161
        %v4390 = vpack.c.b16 %v4166, %v4162
        %v4391 = vpack.c.b16 %v4171, %v4167
        %v4392 = vpack.c.b16 %v4172, %v4168
        %v4393 = vpack.c.b16 %v4173, %v4169
        %v4394 = vpack.c.b16 %v4174, %v4170
        %v4395 = vpack.c.b16 %v4179, %v4175
        %v4396 = vpack.c.b16 %v4180, %v4176
        %v4397 = vpack.c.b16 %v4181, %v4177
        %v4398 = vpack.c.b16 %v4182, %v4178
        %v4399 = vpack.c.b16 %v4187, %v4183
        %v4400 = vpack.c.b16 %v4188, %v4184
        %v4401 = vpack.c.b16 %v4189, %v4185
        %v4402 = vpack.c.b16 %v4190, %v4186
        %v4403 = vpack.c.b16 %v4195, %v4191
        %v4404 = vpack.c.b16 %v4196, %v4192
        %v4405 = vpack.c.b16 %v4197, %v4193
        %v4406 = vpack.c.b16 %v4198, %v4194
        %v4407 = vpack.c.b16 %v4203, %v4199
        %v4408 = vpack.c.b16 %v4204, %v4200
        %v4409 = vpack.c.b16 %v4205, %v4201
        %v4410 = vpack.c.b16 %v4206, %v4202
        %v4411 = vpack.c.b16 %v4211, %v4207
        %v4412 = vpack.c.b16 %v4212, %v4208
        %v4413 = vpack.c.b16 %v4213, %v4209
        %v4414 = vpack.c.b16 %v4214, %v4210
        %v4415 = vpack.c.b16 %v4219, %v4215
        %v4416 = vpack.c.b16 %v4220, %v4216
        %v4417 = vpack.c.b16 %v4221, %v4217
        %v4418 = vpack.c.b16 %v4222, %v4218
        %v4419 = vpack.c.b16 %v4227, %v4223
        %v4420 = vpack.c.b16 %v4228, %v4224
        %v4421 = vpack.c.b16 %v4229, %v4225
        %v4422 = vpack.c.b16 %v4230, %v4226
        %4615 = vmatprep.subr.bf16.mxu0 %v4232
        %4616 = vmatpush1.bf16.msra.mxu0 %v4231
        %4617 = vmatprep.subr.bf16.mxu0 %v4236
        %4618 = vmatpush1.bf16.msra.mxu0 %v4235
        %4619 = vmatprep.subr.bf16.mxu0 %v4240
        %4620 = vmatpush1.bf16.msra.mxu0 %v4239
        %4621 = vmatprep.subr.bf16.mxu0 %v4244
        %4622 = vmatpush1.bf16.msra.mxu0 %v4243
        %4623 = vmatprep.subr.bf16.mxu0 %v4248
        %4624 = vmatpush1.bf16.msra.mxu0 %v4247
        %4625 = vmatprep.subr.bf16.mxu0 %v4252
        %4626 = vmatpush1.bf16.msra.mxu0 %v4251
        %4627 = vmatprep.subr.bf16.mxu0 %v4256
        %4628 = vmatpush1.bf16.msra.mxu0 %v4255
        %4629 = vmatprep.subr.bf16.mxu0 %v4260
        %4630 = vmatpush1.bf16.msra.mxu0 %v4259
        %4631 = vmatprep.subr.bf16.mxu0 %v4264
        %4632 = vmatpush1.bf16.msra.mxu0 %v4263
        %4633 = vmatprep.subr.bf16.mxu0 %v4268
        %4634 = vmatpush1.bf16.msra.mxu0 %v4267
        %4635 = vmatprep.subr.bf16.mxu0 %v4272
        %4636 = vmatpush1.bf16.msra.mxu0 %v4271
        %4637 = vmatprep.subr.bf16.mxu0 %v4276
        %4638 = vmatpush1.bf16.msra.mxu0 %v4275
        %4639 = vmatprep.subr.bf16.mxu0 %v4280
        %4640 = vmatpush1.bf16.msra.mxu0 %v4279
        %4641 = vmatprep.subr.bf16.mxu0 %v4284
        %4642 = vmatpush1.bf16.msra.mxu0 %v4283
        %4643 = vmatprep.subr.bf16.mxu0 %v4288
        %4644 = vmatpush1.bf16.msra.mxu0 %v4287
        %4645 = vmatprep.subr.bf16.mxu0 %v4292
        %4646 = vmatpush1.bf16.msra.mxu0 %v4291
        %4647 = vmatprep.mubr.bf16.mxu0 %v3418
        %4648 = vmatmul.mubr.bf16.gmra.mrb[0].mxu0 %v3417
        %v4649 = vpop.f32.mrb[0].mxu0
        %v4650 = vadd.f32 %v3638, %v4649
        %v4651 = vpop.f32.mrb[0].mxu0
        %v4652 = vadd.f32 %v3642, %v4651
        %v4653 = vpop.f32.mrb[0].mxu0
        %v4654 = vadd.f32 %v3638, %v4653
        %v4655 = vpop.f32.mrb[0].mxu0
        %v4656 = vadd.f32 %v3642, %v4655
        %4657 = vmatprep.mubr.bf16.mxu0 %v3424
        %4658 = vmatmul.mubr.bf16.gmra.mrb[0].mxu0 %v3423
        %v4659 = vpop.f32.mrb[0].mxu0
        %v4660 = vadd.f32 %v3638, %v4659
        %v4661 = vpop.f32.mrb[0].mxu0
        %v4662 = vadd.f32 %v3642, %v4661
        %v4663 = vpop.f32.mrb[0].mxu0
        %v4664 = vadd.f32 %v3638, %v4663
        %v4665 = vpop.f32.mrb[0].mxu0
        %v4666 = vadd.f32 %v3642, %v4665
        %4667 = vmatprep.mubr.bf16.mxu0 %v3430
        %4668 = vmatmul.mubr.bf16.gmra.mrb[0].mxu0 %v3429
        %v4669 = vpop.f32.mrb[0].mxu0
        %v4670 = vadd.f32 %v3638, %v4669
        %v4671 = vpop.f32.mrb[0].mxu0
        %v4672 = vadd.f32 %v3642, %v4671
        %v4673 = vpop.f32.mrb[0].mxu0
        %v4674 = vadd.f32 %v3638, %v4673
        %v4675 = vpop.f32.mrb[0].mxu0
        %v4676 = vadd.f32 %v3642, %v4675
        %4677 = vmatprep.mubr.bf16.mxu0 %v3436
        %4678 = vmatmul.mubr.bf16.gmra.mrb[0].mxu0 %v3435
        %v4679 = vpop.f32.mrb[0].mxu0
        %v4680 = vadd.f32 %v3638, %v4679
        %v4681 = vpop.f32.mrb[0].mxu0
        %v4682 = vadd.f32 %v3642, %v4681
        %v4683 = vpop.f32.mrb[0].mxu0
        %v4684 = vadd.f32 %v3638, %v4683
        %v4685 = vpop.f32.mrb[0].mxu0
        %v4686 = vadd.f32 %v3642, %v4685
        %4687 = vdwg.mxu0
        %4688 = vmatprep.subr.bf16.mxu0 %v4296
        %4689 = vmatpush1.bf16.msra.mxu0 %v4295
        %4690 = vmatprep.subr.bf16.mxu0 %v4300
        %4691 = vmatpush1.bf16.msra.mxu0 %v4299
        %4692 = vmatprep.subr.bf16.mxu0 %v4304
        %4693 = vmatpush1.bf16.msra.mxu0 %v4303
        %4694 = vmatprep.subr.bf16.mxu0 %v4308
        %4695 = vmatpush1.bf16.msra.mxu0 %v4307
        %4696 = vmatprep.subr.bf16.mxu0 %v4312
        %4697 = vmatpush1.bf16.msra.mxu0 %v4311
        %4698 = vmatprep.subr.bf16.mxu0 %v4316
        %4699 = vmatpush1.bf16.msra.mxu0 %v4315
        %4700 = vmatprep.subr.bf16.mxu0 %v4320
        %4701 = vmatpush1.bf16.msra.mxu0 %v4319
        %4702 = vmatprep.subr.bf16.mxu0 %v4324
        %4703 = vmatpush1.bf16.msra.mxu0 %v4323
        %4704 = vmatprep.subr.bf16.mxu0 %v4328
        %4705 = vmatpush1.bf16.msra.mxu0 %v4327
        %4706 = vmatprep.subr.bf16.mxu0 %v4332
        %4707 = vmatpush1.bf16.msra.mxu0 %v4331
        %4708 = vmatprep.subr.bf16.mxu0 %v4336
        %4709 = vmatpush1.bf16.msra.mxu0 %v4335
        %4710 = vmatprep.subr.bf16.mxu0 %v4340
        %4711 = vmatpush1.bf16.msra.mxu0 %v4339
        %4712 = vmatprep.subr.bf16.mxu0 %v4344
        %4713 = vmatpush1.bf16.msra.mxu0 %v4343
        %4714 = vmatprep.subr.bf16.mxu0 %v4348
        %4715 = vmatpush1.bf16.msra.mxu0 %v4347
        %4716 = vmatprep.subr.bf16.mxu0 %v4352
        %4717 = vmatpush1.bf16.msra.mxu0 %v4351
        %4718 = vmatprep.subr.bf16.mxu0 %v4356
        %4719 = vmatpush1.bf16.msra.mxu0 %v4355
        %4720 = vmatprep.mubr.bf16.mxu0 %v3420
        %4721 = vmatmul.mubr.bf16.gmra.mrb[0].mxu0 %v3419
        %v4722 = vpop.f32.mrb[0].mxu0
        %v4723 = vadd.f32 %v4650, %v4722
        %v4724 = vpop.f32.mrb[0].mxu0
        %v4725 = vadd.f32 %v4652, %v4724
        %v4726 = vpop.f32.mrb[0].mxu0
        %v4727 = vadd.f32 %v4654, %v4726
        %v4728 = vpop.f32.mrb[0].mxu0
        %v4729 = vadd.f32 %v4656, %v4728
        %4730 = vmatprep.mubr.bf16.mxu0 %v3426
        %4731 = vmatmul.mubr.bf16.gmra.mrb[0].mxu0 %v3425
        %v4732 = vpop.f32.mrb[0].mxu0
        %v4733 = vadd.f32 %v4660, %v4732
        %v4734 = vpop.f32.mrb[0].mxu0
        %v4735 = vadd.f32 %v4662, %v4734
        %v4736 = vpop.f32.mrb[0].mxu0
        %v4737 = vadd.f32 %v4664, %v4736
        %v4738 = vpop.f32.mrb[0].mxu0
        %v4739 = vadd.f32 %v4666, %v4738
        %4740 = vmatprep.mubr.bf16.mxu0 %v3432
        %4741 = vmatmul.mubr.bf16.gmra.mrb[0].mxu0 %v3431
        %v4742 = vpop.f32.mrb[0].mxu0
        %v4743 = vadd.f32 %v4670, %v4742
        %v4744 = vpop.f32.mrb[0].mxu0
        %v4745 = vadd.f32 %v4672, %v4744
        %v4746 = vpop.f32.mrb[0].mxu0
        %v4747 = vadd.f32 %v4674, %v4746
        %v4748 = vpop.f32.mrb[0].mxu0
        %v4749 = vadd.f32 %v4676, %v4748
        %4750 = vmatprep.mubr.bf16.mxu0 %v3438
        %4751 = vmatmul.mubr.bf16.gmra.mrb[0].mxu0 %v3437
        %v4752 = vpop.f32.mrb[0].mxu0
        %v4753 = vadd.f32 %v4680, %v4752
        %v4754 = vpop.f32.mrb[0].mxu0
        %v4755 = vadd.f32 %v4682, %v4754
        %v4756 = vpop.f32.mrb[0].mxu0
        %v4757 = vadd.f32 %v4684, %v4756
        %v4758 = vpop.f32.mrb[0].mxu0
        %v4759 = vadd.f32 %v4686, %v4758
        %4760 = vdwg.mxu0
        %4761 = vmatprep.subr.bf16.mxu0 %v4360
        %4762 = vmatpush1.bf16.msra.mxu0 %v4359
        %4763 = vmatprep.subr.bf16.mxu0 %v4364
        %4764 = vmatpush1.bf16.msra.mxu0 %v4363
        %4765 = vmatprep.subr.bf16.mxu0 %v4368
        %4766 = vmatpush1.bf16.msra.mxu0 %v4367
        %4767 = vmatprep.subr.bf16.mxu0 %v4372
        %4768 = vmatpush1.bf16.msra.mxu0 %v4371
        %4769 = vmatprep.subr.bf16.mxu0 %v4376
        %4770 = vmatpush1.bf16.msra.mxu0 %v4375
        %4771 = vmatprep.subr.bf16.mxu0 %v4380
        %4772 = vmatpush1.bf16.msra.mxu0 %v4379
        %4773 = vmatprep.subr.bf16.mxu0 %v4384
        %4774 = vmatpush1.bf16.msra.mxu0 %v4383
        %4775 = vmatprep.subr.bf16.mxu0 %v4388
        %4776 = vmatpush1.bf16.msra.mxu0 %v4387
        %4777 = vmatprep.subr.bf16.mxu0 %v4392
        %4778 = vmatpush1.bf16.msra.mxu0 %v4391
        %4779 = vmatprep.subr.bf16.mxu0 %v4396
        %4780 = vmatpush1.bf16.msra.mxu0 %v4395
        %4781 = vmatprep.subr.bf16.mxu0 %v4400
        %4782 = vmatpush1.bf16.msra.mxu0 %v4399
        %4783 = vmatprep.subr.bf16.mxu0 %v4404
        %4784 = vmatpush1.bf16.msra.mxu0 %v4403
        %4785 = vmatprep.subr.bf16.mxu0 %v4408
        %4786 = vmatpush1.bf16.msra.mxu0 %v4407
        %4787 = vmatprep.subr.bf16.mxu0 %v4412
        %4788 = vmatpush1.bf16.msra.mxu0 %v4411
        %4789 = vmatprep.subr.bf16.mxu0 %v4416
        %4790 = vmatpush1.bf16.msra.mxu0 %v4415
        %4791 = vmatprep.subr.bf16.mxu0 %v4420
        %4792 = vmatpush1.bf16.msra.mxu0 %v4419
        %4793 = vmatprep.mubr.bf16.mxu0 %v3422
        %4794 = vmatmul.mubr.bf16.gmra.mrb[0].mxu0 %v3421
        %v4795 = vpop.f32.mrb[0].mxu0
        %v4796 = vadd.f32 %v4723, %v4795
        %v4797 = vpop.f32.mrb[0].mxu0
        %v4798 = vadd.f32 %v4725, %v4797
        %v4799 = vpop.f32.mrb[0].mxu0
        %v4800 = vadd.f32 %v4727, %v4799
        %v4801 = vpop.f32.mrb[0].mxu0
        %v4802 = vadd.f32 %v4729, %v4801
        %4803 = vmatprep.mubr.bf16.mxu0 %v3428
        %4804 = vmatmul.mubr.bf16.gmra.mrb[0].mxu0 %v3427
        %v4805 = vpop.f32.mrb[0].mxu0
        %v4806 = vadd.f32 %v4733, %v4805
        %v4807 = vpop.f32.mrb[0].mxu0
        %v4808 = vadd.f32 %v4735, %v4807
        %v4809 = vpop.f32.mrb[0].mxu0
        %v4810 = vadd.f32 %v4737, %v4809
        %v4811 = vpop.f32.mrb[0].mxu0
        %v4812 = vadd.f32 %v4739, %v4811
        %4813 = vmatprep.mubr.bf16.mxu0 %v3434
        %4814 = vmatmul.mubr.bf16.gmra.mrb[0].mxu0 %v3433
        %v4815 = vpop.f32.mrb[0].mxu0
        %v4816 = vadd.f32 %v4743, %v4815
        %v4817 = vpop.f32.mrb[0].mxu0
        %v4818 = vadd.f32 %v4745, %v4817
        %v4819 = vpop.f32.mrb[0].mxu0
        %v4820 = vadd.f32 %v4747, %v4819
        %v4821 = vpop.f32.mrb[0].mxu0
        %v4822 = vadd.f32 %v4749, %v4821
        %4823 = vmatprep.mubr.bf16.mxu0 %v3440
        %4824 = vmatmul.mubr.bf16.gmra.mrb[0].mxu0 %v3439
        %v4825 = vpop.f32.mrb[0].mxu0
        %v4826 = vadd.f32 %v4753, %v4825
        %v4827 = vpop.f32.mrb[0].mxu0
        %v4828 = vadd.f32 %v4755, %v4827
        %v4829 = vpop.f32.mrb[0].mxu0
        %v4830 = vadd.f32 %v4757, %v4829
        %v4831 = vpop.f32.mrb[0].mxu0
        %v4832 = vadd.f32 %v4759, %v4831
        %4833 = vdwg.mxu0
        %4834 = vmatprep.subr.bf16.mxu0 %v4234
        %4835 = vmatpush1.bf16.msra.mxu0 %v4233
        %4836 = vmatprep.subr.bf16.mxu0 %v4238
        %4837 = vmatpush1.bf16.msra.mxu0 %v4237
        %4838 = vmatprep.subr.bf16.mxu0 %v4242
        %4839 = vmatpush1.bf16.msra.mxu0 %v4241
        %4840 = vmatprep.subr.bf16.mxu0 %v4246
        %4841 = vmatpush1.bf16.msra.mxu0 %v4245
        %4842 = vmatprep.subr.bf16.mxu0 %v4250
        %4843 = vmatpush1.bf16.msra.mxu0 %v4249
        %4844 = vmatprep.subr.bf16.mxu0 %v4254
        %4845 = vmatpush1.bf16.msra.mxu0 %v4253
        %4846 = vmatprep.subr.bf16.mxu0 %v4258
        %4847 = vmatpush1.bf16.msra.mxu0 %v4257
        %4848 = vmatprep.subr.bf16.mxu0 %v4262
        %4849 = vmatpush1.bf16.msra.mxu0 %v4261
        %4850 = vmatprep.subr.bf16.mxu0 %v4266
        %4851 = vmatpush1.bf16.msra.mxu0 %v4265
        %4852 = vmatprep.subr.bf16.mxu0 %v4270
        %4853 = vmatpush1.bf16.msra.mxu0 %v4269
        %4854 = vmatprep.subr.bf16.mxu0 %v4274
        %4855 = vmatpush1.bf16.msra.mxu0 %v4273
        %4856 = vmatprep.subr.bf16.mxu0 %v4278
        %4857 = vmatpush1.bf16.msra.mxu0 %v4277
        %4858 = vmatprep.subr.bf16.mxu0 %v4282
        %4859 = vmatpush1.bf16.msra.mxu0 %v4281
        %4860 = vmatprep.subr.bf16.mxu0 %v4286
        %4861 = vmatpush1.bf16.msra.mxu0 %v4285
        %4862 = vmatprep.subr.bf16.mxu0 %v4290
        %4863 = vmatpush1.bf16.msra.mxu0 %v4289
        %4864 = vmatprep.subr.bf16.mxu0 %v4294
        %4865 = vmatpush1.bf16.msra.mxu0 %v4293
        %4866 = vmatprep.mubr.bf16.mxu0 %v3418
        %4867 = vmatmul.mubr.bf16.gmra.mrb[0].mxu0 %v3417
        %v4868 = vpop.f32.mrb[0].mxu0
        %v4869 = vadd.f32 %v3646, %v4868
        %v4870 = vpop.f32.mrb[0].mxu0
        %v4871 = vadd.f32 %v3650, %v4870
        %v4872 = vpop.f32.mrb[0].mxu0
        %v4873 = vadd.f32 %v3646, %v4872
        %v4874 = vpop.f32.mrb[0].mxu0
        %v4875 = vadd.f32 %v3650, %v4874
        %4876 = vmatprep.mubr.bf16.mxu0 %v3424
        %4877 = vmatmul.mubr.bf16.gmra.mrb[0].mxu0 %v3423
        %v4878 = vpop.f32.mrb[0].mxu0
        %v4879 = vadd.f32 %v3646, %v4878
        %v4880 = vpop.f32.mrb[0].mxu0
        %v4881 = vadd.f32 %v3650, %v4880
        %v4882 = vpop.f32.mrb[0].mxu0
        %v4883 = vadd.f32 %v3646, %v4882
        %v4884 = vpop.f32.mrb[0].mxu0
        %v4885 = vadd.f32 %v3650, %v4884
        %4886 = vmatprep.mubr.bf16.mxu0 %v3430
        %4887 = vmatmul.mubr.bf16.gmra.mrb[0].mxu0 %v3429
        %v4888 = vpop.f32.mrb[0].mxu0
        %v4889 = vadd.f32 %v3646, %v4888
        %v4890 = vpop.f32.mrb[0].mxu0
        %v4891 = vadd.f32 %v3650, %v4890
        %v4892 = vpop.f32.mrb[0].mxu0
        %v4893 = vadd.f32 %v3646, %v4892
        %v4894 = vpop.f32.mrb[0].mxu0
        %v4895 = vadd.f32 %v3650, %v4894
        %4896 = vmatprep.mubr.bf16.mxu0 %v3436
        %4897 = vmatmul.mubr.bf16.gmra.mrb[0].mxu0 %v3435
        %v4898 = vpop.f32.mrb[0].mxu0
        %v4899 = vadd.f32 %v3646, %v4898
        %v4900 = vpop.f32.mrb[0].mxu0
        %v4901 = vadd.f32 %v3650, %v4900
        %v4902 = vpop.f32.mrb[0].mxu0
        %v4903 = vadd.f32 %v3646, %v4902
        %v4904 = vpop.f32.mrb[0].mxu0
        %v4905 = vadd.f32 %v3650, %v4904
        %4906 = vdwg.mxu0
        %4907 = vmatprep.subr.bf16.mxu0 %v4298
        %4908 = vmatpush1.bf16.msra.mxu0 %v4297
        %4909 = vmatprep.subr.bf16.mxu0 %v4302
        %4910 = vmatpush1.bf16.msra.mxu0 %v4301
        %4911 = vmatprep.subr.bf16.mxu0 %v4306
        %4912 = vmatpush1.bf16.msra.mxu0 %v4305
        %4913 = vmatprep.subr.bf16.mxu0 %v4310
        %4914 = vmatpush1.bf16.msra.mxu0 %v4309
        %4915 = vmatprep.subr.bf16.mxu0 %v4314
        %4916 = vmatpush1.bf16.msra.mxu0 %v4313
        %4917 = vmatprep.subr.bf16.mxu0 %v4318
        %4918 = vmatpush1.bf16.msra.mxu0 %v4317
        %4919 = vmatprep.subr.bf16.mxu0 %v4322
        %4920 = vmatpush1.bf16.msra.mxu0 %v4321
        %4921 = vmatprep.subr.bf16.mxu0 %v4326
        %4922 = vmatpush1.bf16.msra.mxu0 %v4325
        %4923 = vmatprep.subr.bf16.mxu0 %v4330
        %4924 = vmatpush1.bf16.msra.mxu0 %v4329
        %4925 = vmatprep.subr.bf16.mxu0 %v4334
        %4926 = vmatpush1.bf16.msra.mxu0 %v4333
        %4927 = vmatprep.subr.bf16.mxu0 %v4338
        %4928 = vmatpush1.bf16.msra.mxu0 %v4337
        %4929 = vmatprep.subr.bf16.mxu0 %v4342
        %4930 = vmatpush1.bf16.msra.mxu0 %v4341
        %4931 = vmatprep.subr.bf16.mxu0 %v4346
        %4932 = vmatpush1.bf16.msra.mxu0 %v4345
        %4933 = vmatprep.subr.bf16.mxu0 %v4350
        %4934 = vmatpush1.bf16.msra.mxu0 %v4349
        %4935 = vmatprep.subr.bf16.mxu0 %v4354
        %4936 = vmatpush1.bf16.msra.mxu0 %v4353
        %4937 = vmatprep.subr.bf16.mxu0 %v4358
        %4938 = vmatpush1.bf16.msra.mxu0 %v4357
        %4939 = vmatprep.mubr.bf16.mxu0 %v3420
        %4940 = vmatmul.mubr.bf16.gmra.mrb[0].mxu0 %v3419
        %v4941 = vpop.f32.mrb[0].mxu0
        %v4942 = vadd.f32 %v4869, %v4941
        %v4943 = vpop.f32.mrb[0].mxu0
        %v4944 = vadd.f32 %v4871, %v4943
        %v4945 = vpop.f32.mrb[0].mxu0
        %v4946 = vadd.f32 %v4873, %v4945
        %v4947 = vpop.f32.mrb[0].mxu0
        %v4948 = vadd.f32 %v4875, %v4947
        %4949 = vmatprep.mubr.bf16.mxu0 %v3426
        %4950 = vmatmul.mubr.bf16.gmra.mrb[0].mxu0 %v3425
        %v4951 = vpop.f32.mrb[0].mxu0
        %v4952 = vadd.f32 %v4879, %v4951
        %v4953 = vpop.f32.mrb[0].mxu0
        %v4954 = vadd.f32 %v4881, %v4953
        %v4955 = vpop.f32.mrb[0].mxu0
        %v4956 = vadd.f32 %v4883, %v4955
        %v4957 = vpop.f32.mrb[0].mxu0
        %v4958 = vadd.f32 %v4885, %v4957
        %4959 = vmatprep.mubr.bf16.mxu0 %v3432
        %4960 = vmatmul.mubr.bf16.gmra.mrb[0].mxu0 %v3431
        %v4961 = vpop.f32.mrb[0].mxu0
        %v4962 = vadd.f32 %v4889, %v4961
        %v4963 = vpop.f32.mrb[0].mxu0
        %v4964 = vadd.f32 %v4891, %v4963
        %v4965 = vpop.f32.mrb[0].mxu0
        %v4966 = vadd.f32 %v4893, %v4965
        %v4967 = vpop.f32.mrb[0].mxu0
        %v4968 = vadd.f32 %v4895, %v4967
        %4969 = vmatprep.mubr.bf16.mxu0 %v3438
        %4970 = vmatmul.mubr.bf16.gmra.mrb[0].mxu0 %v3437
        %v4971 = vpop.f32.mrb[0].mxu0
        %v4972 = vadd.f32 %v4899, %v4971
        %v4973 = vpop.f32.mrb[0].mxu0
        %v4974 = vadd.f32 %v4901, %v4973
        %v4975 = vpop.f32.mrb[0].mxu0
        %v4976 = vadd.f32 %v4903, %v4975
        %v4977 = vpop.f32.mrb[0].mxu0
        %v4978 = vadd.f32 %v4905, %v4977
        %4979 = vdwg.mxu0
        %4980 = vmatprep.subr.bf16.mxu0 %v4362
        %4981 = vmatpush1.bf16.msra.mxu0 %v4361
        %4982 = vmatprep.subr.bf16.mxu0 %v4366
        %4983 = vmatpush1.bf16.msra.mxu0 %v4365
        %4984 = vmatprep.subr.bf16.mxu0 %v4370
        %4985 = vmatpush1.bf16.msra.mxu0 %v4369
        %4986 = vmatprep.subr.bf16.mxu0 %v4374
        %4987 = vmatpush1.bf16.msra.mxu0 %v4373
        %4988 = vmatprep.subr.bf16.mxu0 %v4378
        %4989 = vmatpush1.bf16.msra.mxu0 %v4377
        %4990 = vmatprep.subr.bf16.mxu0 %v4382
        %4991 = vmatpush1.bf16.msra.mxu0 %v4381
        %4992 = vmatprep.subr.bf16.mxu0 %v4386
        %4993 = vmatpush1.bf16.msra.mxu0 %v4385
        %4994 = vmatprep.subr.bf16.mxu0 %v4390
        %4995 = vmatpush1.bf16.msra.mxu0 %v4389
        %4996 = vmatprep.subr.bf16.mxu0 %v4394
        %4997 = vmatpush1.bf16.msra.mxu0 %v4393
        %4998 = vmatprep.subr.bf16.mxu0 %v4398
        %4999 = vmatpush1.bf16.msra.mxu0 %v4397
        %5000 = vmatprep.subr.bf16.mxu0 %v4402
        %5001 = vmatpush1.bf16.msra.mxu0 %v4401
        %5002 = vmatprep.subr.bf16.mxu0 %v4406
        %5003 = vmatpush1.bf16.msra.mxu0 %v4405
        %5004 = vmatprep.subr.bf16.mxu0 %v4410
        %5005 = vmatpush1.bf16.msra.mxu0 %v4409
        %5006 = vmatprep.subr.bf16.mxu0 %v4414
        %5007 = vmatpush1.bf16.msra.mxu0 %v4413
        %5008 = vmatprep.subr.bf16.mxu0 %v4418
        %5009 = vmatpush1.bf16.msra.mxu0 %v4417
        %5010 = vmatprep.subr.bf16.mxu0 %v4422
        %5011 = vmatpush1.bf16.msra.mxu0 %v4421
        %5012 = vmatprep.mubr.bf16.mxu0 %v3422
        %5013 = vmatmul.mubr.bf16.gmra.mrb[0].mxu0 %v3421
        %v5014 = vpop.f32.mrb[0].mxu0
        %v5015 = vadd.f32 %v4942, %v5014
        %v5016 = vpop.f32.mrb[0].mxu0
        %v5017 = vadd.f32 %v4944, %v5016
        %v5018 = vpop.f32.mrb[0].mxu0
        %v5019 = vadd.f32 %v4946, %v5018
        %v5020 = vpop.f32.mrb[0].mxu0
        %v5021 = vadd.f32 %v4948, %v5020
        %5022 = vmatprep.mubr.bf16.mxu0 %v3428
        %5023 = vmatmul.mubr.bf16.gmra.mrb[0].mxu0 %v3427
        %v5024 = vpop.f32.mrb[0].mxu0
        %v5025 = vadd.f32 %v4952, %v5024
        %v5026 = vpop.f32.mrb[0].mxu0
        %v5027 = vadd.f32 %v4954, %v5026
        %v5028 = vpop.f32.mrb[0].mxu0
        %v5029 = vadd.f32 %v4956, %v5028
        %v5030 = vpop.f32.mrb[0].mxu0
        %v5031 = vadd.f32 %v4958, %v5030
        %5032 = vmatprep.mubr.bf16.mxu0 %v3434
        %5033 = vmatmul.mubr.bf16.gmra.mrb[0].mxu0 %v3433
        %v5034 = vpop.f32.mrb[0].mxu0
        %v5035 = vadd.f32 %v4962, %v5034
        %v5036 = vpop.f32.mrb[0].mxu0
        %v5037 = vadd.f32 %v4964, %v5036
        %v5038 = vpop.f32.mrb[0].mxu0
        %v5039 = vadd.f32 %v4966, %v5038
        %v5040 = vpop.f32.mrb[0].mxu0
        %v5041 = vadd.f32 %v4968, %v5040
        %5042 = vmatprep.mubr.bf16.mxu0 %v3440
        %5043 = vmatmul.mubr.bf16.gmra.mrb[0].mxu0 %v3439
        %v5044 = vpop.f32.mrb[0].mxu0
        %v5045 = vadd.f32 %v4972, %v5044
        %v5046 = vpop.f32.mrb[0].mxu0
        %v5047 = vadd.f32 %v4974, %v5046
        %v5048 = vpop.f32.mrb[0].mxu0
        %v5049 = vadd.f32 %v4976, %v5048
        %v5050 = vpop.f32.mrb[0].mxu0
        %v5051 = vadd.f32 %v4978, %v5050
        %5052 = vdwg.mxu0
        %v5053 = vmax.f32 %v4796, 0.0
        %v5054 = vmax.f32 %v4798, 0.0
        %v5055 = vmax.f32 %v5015, 0.0
        %v5056 = vmax.f32 %v5017, 0.0
        %v5057 = vmax.f32 %v4800, 0.0
        %v5058 = vmax.f32 %v4802, 0.0
        %v5059 = vmax.f32 %v5019, 0.0
        %v5060 = vmax.f32 %v5021, 0.0
        %v5061 = vmax.f32 %v4806, 0.0
        %v5062 = vmax.f32 %v4808, 0.0
        %v5063 = vmax.f32 %v5025, 0.0
        %v5064 = vmax.f32 %v5027, 0.0
        %v5065 = vmax.f32 %v4810, 0.0
        %v5066 = vmax.f32 %v4812, 0.0
        %v5067 = vmax.f32 %v5029, 0.0
        %v5068 = vmax.f32 %v5031, 0.0
        %v5069 = vmax.f32 %v4816, 0.0
        %v5070 = vmax.f32 %v4818, 0.0
        %v5071 = vmax.f32 %v5035, 0.0
        %v5072 = vmax.f32 %v5037, 0.0
        %v5073 = vmax.f32 %v4820, 0.0
        %v5074 = vmax.f32 %v4822, 0.0
        %v5075 = vmax.f32 %v5039, 0.0
        %v5076 = vmax.f32 %v5041, 0.0
        %v5077 = vmax.f32 %v4826, 0.0
        %v5078 = vmax.f32 %v4828, 0.0
        %v5079 = vmax.f32 %v5045, 0.0
        %v5080 = vmax.f32 %v5047, 0.0
        %v5081 = vmax.f32 %v4830, 0.0
        %v5082 = vmax.f32 %v4832, 0.0
        %v5083 = vmax.f32 %v5049, 0.0
        %v5084 = vmax.f32 %v5051, 0.0
        %v5085 = vpack.c.bf16 %v5057, %v5053
        %v5086 = vpack.c.bf16 %v5058, %v5054
        %v5087 = vpack.c.bf16 %v5059, %v5055
        %v5088 = vpack.c.bf16 %v5060, %v5056
        %v5089 = vpack.c.bf16 %v5065, %v5061
        %v5090 = vpack.c.bf16 %v5066, %v5062
        %v5091 = vpack.c.bf16 %v5067, %v5063
        %v5092 = vpack.c.bf16 %v5068, %v5064
        %v5093 = vpack.c.bf16 %v5073, %v5069
        %v5094 = vpack.c.bf16 %v5074, %v5070
        %v5095 = vpack.c.bf16 %v5075, %v5071
        %v5096 = vpack.c.bf16 %v5076, %v5072
        %v5097 = vpack.c.bf16 %v5081, %v5077
        %v5098 = vpack.c.bf16 %v5082, %v5078
        %v5099 = vpack.c.bf16 %v5083, %v5079
        %v5100 = vpack.c.bf16 %v5084, %v5080
        %v5101 = vld [vmem:[#allocation15] sm:$0xf]
        %v5102 = vld [vmem:[#allocation15 + $0x4] sm:$0xf]
        %v5103 = vld [vmem:[#allocation15 + $0x8] sm:$0xf]
        %v5104 = vld [vmem:[#allocation15 + $0xc] sm:$0xf]
        %v5105 = vld [vmem:[#allocation15 + $0x10] sm:$0xf]
        %v5106 = vld [vmem:[#allocation15 + $0x14] sm:$0xf]
        %v5107 = vld [vmem:[#allocation15 + $0x18] sm:$0xf]
        %v5108 = vld [vmem:[#allocation15 + $0x1c] sm:$0xf]
        %v5109 = vld [vmem:[#allocation15 + $0x20] sm:$0xf]
        %v5110 = vld [vmem:[#allocation15 + $0x24] sm:$0xf]
        %v5111 = vld [vmem:[#allocation15 + $0x28] sm:$0xf]
        %v5112 = vld [vmem:[#allocation15 + $0x2c] sm:$0xf]
        %v5113 = vld [vmem:[#allocation15 + $0x30] sm:$0xf]
        %v5114 = vld [vmem:[#allocation15 + $0x34] sm:$0xf]
        %v5115 = vld [vmem:[#allocation15 + $0x38] sm:$0xf]
        %v5116 = vld [vmem:[#allocation15 + $0x3c] sm:$0xf]
        %v5117 = vld [vmem:[#allocation15 + $0x40] sm:$0xf]
        %v5118 = vld [vmem:[#allocation15 + $0x44] sm:$0xf]
        %v5119 = vld [vmem:[#allocation15 + $0x48] sm:$0xf]
        %v5120 = vld [vmem:[#allocation15 + $0x4c] sm:$0xf]
        %v5121 = vld [vmem:[#allocation15 + $0x50] sm:$0xf]
        %v5122 = vld [vmem:[#allocation15 + $0x54] sm:$0xf]
        %v5123 = vld [vmem:[#allocation15 + $0x58] sm:$0xf]
        %v5124 = vld [vmem:[#allocation15 + $0x5c] sm:$0xf]
        %v5125 = vld [vmem:[#allocation15 + $0x60] sm:$0xf]
        %v5126 = vld [vmem:[#allocation15 + $0x64] sm:$0xf]
        %v5127 = vld [vmem:[#allocation15 + $0x68] sm:$0xf]
        %v5128 = vld [vmem:[#allocation15 + $0x6c] sm:$0xf]
        %v5129 = vld [vmem:[#allocation15 + $0x70] sm:$0xf]
        %v5130 = vld [vmem:[#allocation15 + $0x74] sm:$0xf]
        %v5131 = vld [vmem:[#allocation15 + $0x78] sm:$0xf]
        %v5132 = vld [vmem:[#allocation15 + $0x7c] sm:$0xf]
        %v5133 = vld [vmem:[#allocation15 + $0x80] sm:$0xf]
        %v5134 = vld [vmem:[#allocation15 + $0x84] sm:$0xf]
        %v5135 = vld [vmem:[#allocation15 + $0x88] sm:$0xf]
        %v5136 = vld [vmem:[#allocation15 + $0x8c] sm:$0xf]
        %v5137 = vld [vmem:[#allocation15 + $0x90] sm:$0xf]
        %v5138 = vld [vmem:[#allocation15 + $0x94] sm:$0xf]
        %v5139 = vld [vmem:[#allocation15 + $0x98] sm:$0xf]
        %v5140 = vld [vmem:[#allocation15 + $0x9c] sm:$0xf]
        %v5141 = vld [vmem:[#allocation15 + $0xa0] sm:$0xf]
        %v5142 = vld [vmem:[#allocation15 + $0xa4] sm:$0xf]
        %v5143 = vld [vmem:[#allocation15 + $0xa8] sm:$0xf]
        %v5144 = vld [vmem:[#allocation15 + $0xac] sm:$0xf]
        %v5145 = vld [vmem:[#allocation15 + $0xb0] sm:$0xf]
        %v5146 = vld [vmem:[#allocation15 + $0xb4] sm:$0xf]
        %v5147 = vld [vmem:[#allocation15 + $0xb8] sm:$0xf]
        %v5148 = vld [vmem:[#allocation15 + $0xbc] sm:$0xf]
        %v5149 = vld [vmem:[#allocation15 + $0xc0] sm:$0xf]
        %v5150 = vld [vmem:[#allocation15 + $0xc4] sm:$0xf]
        %v5151 = vld [vmem:[#allocation15 + $0xc8] sm:$0xf]
        %v5152 = vld [vmem:[#allocation15 + $0xcc] sm:$0xf]
        %v5153 = vld [vmem:[#allocation15 + $0xd0] sm:$0xf]
        %v5154 = vld [vmem:[#allocation15 + $0xd4] sm:$0xf]
        %v5155 = vld [vmem:[#allocation15 + $0xd8] sm:$0xf]
        %v5156 = vld [vmem:[#allocation15 + $0xdc] sm:$0xf]
        %v5157 = vld [vmem:[#allocation15 + $0xe0] sm:$0xf]
        %v5158 = vld [vmem:[#allocation15 + $0xe4] sm:$0xf]
        %v5159 = vld [vmem:[#allocation15 + $0xe8] sm:$0xf]
        %v5160 = vld [vmem:[#allocation15 + $0xec] sm:$0xf]
        %v5161 = vld [vmem:[#allocation15 + $0xf0] sm:$0xf]
        %v5162 = vld [vmem:[#allocation15 + $0xf4] sm:$0xf]
        %v5163 = vld [vmem:[#allocation15 + $0xf8] sm:$0xf]
        %v5164 = vld [vmem:[#allocation15 + $0xfc] sm:$0xf]
        %v5165 = vld [vmem:[#allocation16] sm:$0x1]
        %v5167 = vlaneseq
        %v5168 = vshrl.u32 %v5167, 7
        %v5169 = vsub.s32 0, %v5168
        %v5170 = vrot.slane %v5165, %v5169
        %v5236 = vunpack.c.l.b16 %v5101
        %v5237 = vunpack.c.l.b16 %v5102
        %v5238 = vunpack.c.l.b16 %v5103
        %v5239 = vunpack.c.l.b16 %v5104
        %v5240 = vunpack.c.l.b16 %v5105
        %v5241 = vunpack.c.l.b16 %v5106
        %v5242 = vunpack.c.l.b16 %v5107
        %v5243 = vunpack.c.l.b16 %v5108
        %v5244 = vunpack.c.l.b16 %v5109
        %v5245 = vunpack.c.l.b16 %v5110
        %v5246 = vunpack.c.l.b16 %v5111
        %v5247 = vunpack.c.l.b16 %v5112
        %v5248 = vunpack.c.l.b16 %v5113
        %v5249 = vunpack.c.l.b16 %v5114
        %v5250 = vunpack.c.l.b16 %v5115
        %v5251 = vunpack.c.l.b16 %v5116
        %v5252 = vunpack.c.l.b16 %v5117
        %v5253 = vunpack.c.l.b16 %v5118
        %v5254 = vunpack.c.l.b16 %v5119
        %v5255 = vunpack.c.l.b16 %v5120
        %v5256 = vunpack.c.l.b16 %v5121
        %v5257 = vunpack.c.l.b16 %v5122
        %v5258 = vunpack.c.l.b16 %v5123
        %v5259 = vunpack.c.l.b16 %v5124
        %v5260 = vunpack.c.l.b16 %v5125
        %v5261 = vunpack.c.l.b16 %v5126
        %v5262 = vunpack.c.l.b16 %v5127
        %v5263 = vunpack.c.l.b16 %v5128
        %v5264 = vunpack.c.l.b16 %v5129
        %v5265 = vunpack.c.l.b16 %v5130
        %v5266 = vunpack.c.l.b16 %v5131
        %v5267 = vunpack.c.l.b16 %v5132
        %v5268 = vunpack.c.l.b16 %v5133
        %v5269 = vunpack.c.l.b16 %v5134
        %v5270 = vunpack.c.l.b16 %v5135
        %v5271 = vunpack.c.l.b16 %v5136
        %v5272 = vunpack.c.l.b16 %v5137
        %v5273 = vunpack.c.l.b16 %v5138
        %v5274 = vunpack.c.l.b16 %v5139
        %v5275 = vunpack.c.l.b16 %v5140
        %v5276 = vunpack.c.l.b16 %v5141
        %v5277 = vunpack.c.l.b16 %v5142
        %v5278 = vunpack.c.l.b16 %v5143
        %v5279 = vunpack.c.l.b16 %v5144
        %v5280 = vunpack.c.l.b16 %v5145
        %v5281 = vunpack.c.l.b16 %v5146
        %v5282 = vunpack.c.l.b16 %v5147
        %v5283 = vunpack.c.l.b16 %v5148
        %v5284 = vunpack.c.l.b16 %v5149
        %v5285 = vunpack.c.l.b16 %v5150
        %v5286 = vunpack.c.l.b16 %v5151
        %v5287 = vunpack.c.l.b16 %v5152
        %v5288 = vunpack.c.l.b16 %v5153
        %v5289 = vunpack.c.l.b16 %v5154
        %v5290 = vunpack.c.l.b16 %v5155
        %v5291 = vunpack.c.l.b16 %v5156
        %v5292 = vunpack.c.l.b16 %v5157
        %v5293 = vunpack.c.l.b16 %v5158
        %v5294 = vunpack.c.l.b16 %v5159
        %v5295 = vunpack.c.l.b16 %v5160
        %v5296 = vunpack.c.l.b16 %v5161
        %v5297 = vunpack.c.l.b16 %v5162
        %v5298 = vunpack.c.l.b16 %v5163
        %v5299 = vunpack.c.l.b16 %v5164
        %v5300 = vpack.c.b16 %v5237, %v5236
        %v5301 = vpack.c.b16 %v5239, %v5238
        %v5302 = vpack.c.b16 %v5241, %v5240
        %v5303 = vpack.c.b16 %v5243, %v5242
        %v5304 = vpack.c.b16 %v5245, %v5244
        %v5305 = vpack.c.b16 %v5247, %v5246
        %v5306 = vpack.c.b16 %v5249, %v5248
        %v5307 = vpack.c.b16 %v5251, %v5250
        %v5308 = vpack.c.b16 %v5253, %v5252
        %v5309 = vpack.c.b16 %v5255, %v5254
        %v5310 = vpack.c.b16 %v5257, %v5256
        %v5311 = vpack.c.b16 %v5259, %v5258
        %v5312 = vpack.c.b16 %v5261, %v5260
        %v5313 = vpack.c.b16 %v5263, %v5262
        %v5314 = vpack.c.b16 %v5265, %v5264
        %v5315 = vpack.c.b16 %v5267, %v5266
        %v5316 = vpack.c.b16 %v5269, %v5268
        %v5317 = vpack.c.b16 %v5271, %v5270
        %v5318 = vpack.c.b16 %v5273, %v5272
        %v5319 = vpack.c.b16 %v5275, %v5274
        %v5320 = vpack.c.b16 %v5277, %v5276
        %v5321 = vpack.c.b16 %v5279, %v5278
        %v5322 = vpack.c.b16 %v5281, %v5280
        %v5323 = vpack.c.b16 %v5283, %v5282
        %v5324 = vpack.c.b16 %v5285, %v5284
        %v5325 = vpack.c.b16 %v5287, %v5286
        %v5326 = vpack.c.b16 %v5289, %v5288
        %v5327 = vpack.c.b16 %v5291, %v5290
        %v5328 = vpack.c.b16 %v5293, %v5292
        %v5329 = vpack.c.b16 %v5295, %v5294
        %v5330 = vpack.c.b16 %v5297, %v5296
        %v5331 = vpack.c.b16 %v5299, %v5298
        %5364 = vmatprep.subr.bf16.mxu0 0
        %5365 = vmatpush1.bf16.msra.mxu0 %v5300
        %5366 = vmatprep.subr.bf16.mxu0 0
        %5367 = vmatpush1.bf16.msra.mxu0 %v5301
        %5368 = vmatprep.subr.bf16.mxu0 0
        %5369 = vmatpush1.bf16.msra.mxu0 %v5302
        %5370 = vmatprep.subr.bf16.mxu0 0
        %5371 = vmatpush1.bf16.msra.mxu0 %v5303
        %5372 = vmatprep.subr.bf16.mxu0 0
        %5373 = vmatpush1.bf16.msra.mxu0 %v5304
        %5374 = vmatprep.subr.bf16.mxu0 0
        %5375 = vmatpush1.bf16.msra.mxu0 %v5305
        %5376 = vmatprep.subr.bf16.mxu0 0
        %5377 = vmatpush1.bf16.msra.mxu0 %v5306
        %5378 = vmatprep.subr.bf16.mxu0 0
        %5379 = vmatpush1.bf16.msra.mxu0 %v5307
        %5380 = vmatprep.subr.bf16.mxu0 0
        %5381 = vmatpush1.bf16.msra.mxu0 %v5308
        %5382 = vmatprep.subr.bf16.mxu0 0
        %5383 = vmatpush1.bf16.msra.mxu0 %v5309
        %5384 = vmatprep.subr.bf16.mxu0 0
        %5385 = vmatpush1.bf16.msra.mxu0 %v5310
        %5386 = vmatprep.subr.bf16.mxu0 0
        %5387 = vmatpush1.bf16.msra.mxu0 %v5311
        %5388 = vmatprep.subr.bf16.mxu0 0
        %5389 = vmatpush1.bf16.msra.mxu0 %v5312
        %5390 = vmatprep.subr.bf16.mxu0 0
        %5391 = vmatpush1.bf16.msra.mxu0 %v5313
        %5392 = vmatprep.subr.bf16.mxu0 0
        %5393 = vmatpush1.bf16.msra.mxu0 %v5314
        %5394 = vmatprep.subr.bf16.mxu0 0
        %5395 = vmatpush1.bf16.msra.mxu0 %v5315
        %5396 = vmatprep.mubr.bf16.mxu0 %v5086
        %5397 = vmatmul.mubr.bf16.gmra.mrb[0].mxu0 %v5085
        %v5398 = vpop.f32.mrb[0].mxu0
        %v5399 = vadd.f32 %v5170, %v5398
        %v5400 = vpop.f32.mrb[0].mxu0
        %v5401 = vpop.f32.mrb[0].mxu0
        %v5402 = vadd.f32 %v5170, %v5401
        %v5403 = vpop.f32.mrb[0].mxu0
        %5404 = vmatprep.mubr.bf16.mxu0 %v5090
        %5405 = vmatmul.mubr.bf16.gmra.mrb[0].mxu0 %v5089
        %v5406 = vpop.f32.mrb[0].mxu0
        %v5407 = vadd.f32 %v5170, %v5406
        %v5408 = vpop.f32.mrb[0].mxu0
        %v5409 = vpop.f32.mrb[0].mxu0
        %v5410 = vadd.f32 %v5170, %v5409
        %v5411 = vpop.f32.mrb[0].mxu0
        %5412 = vmatprep.mubr.bf16.mxu0 %v5094
        %5413 = vmatmul.mubr.bf16.gmra.mrb[0].mxu0 %v5093
        %v5414 = vpop.f32.mrb[0].mxu0
        %v5415 = vadd.f32 %v5170, %v5414
        %v5416 = vpop.f32.mrb[0].mxu0
        %v5417 = vpop.f32.mrb[0].mxu0
        %v5418 = vadd.f32 %v5170, %v5417
        %v5419 = vpop.f32.mrb[0].mxu0
        %5420 = vmatprep.mubr.bf16.mxu0 %v5098
        %5421 = vmatmul.mubr.bf16.gmra.mrb[0].mxu0 %v5097
        %v5422 = vpop.f32.mrb[0].mxu0
        %v5423 = vadd.f32 %v5170, %v5422
        %v5424 = vpop.f32.mrb[0].mxu0
        %v5425 = vpop.f32.mrb[0].mxu0
        %v5426 = vadd.f32 %v5170, %v5425
        %v5427 = vpop.f32.mrb[0].mxu0
        %5428 = vdwg.mxu0
        %5429 = vmatprep.subr.bf16.mxu0 0
        %5430 = vmatpush1.bf16.msra.mxu0 %v5316
        %5431 = vmatprep.subr.bf16.mxu0 0
        %5432 = vmatpush1.bf16.msra.mxu0 %v5317
        %5433 = vmatprep.subr.bf16.mxu0 0
        %5434 = vmatpush1.bf16.msra.mxu0 %v5318
        %5435 = vmatprep.subr.bf16.mxu0 0
        %5436 = vmatpush1.bf16.msra.mxu0 %v5319
        %5437 = vmatprep.subr.bf16.mxu0 0
        %5438 = vmatpush1.bf16.msra.mxu0 %v5320
        %5439 = vmatprep.subr.bf16.mxu0 0
        %5440 = vmatpush1.bf16.msra.mxu0 %v5321
        %5441 = vmatprep.subr.bf16.mxu0 0
        %5442 = vmatpush1.bf16.msra.mxu0 %v5322
        %5443 = vmatprep.subr.bf16.mxu0 0
        %5444 = vmatpush1.bf16.msra.mxu0 %v5323
        %5445 = vmatprep.subr.bf16.mxu0 0
        %5446 = vmatpush1.bf16.msra.mxu0 %v5324
        %5447 = vmatprep.subr.bf16.mxu0 0
        %5448 = vmatpush1.bf16.msra.mxu0 %v5325
        %5449 = vmatprep.subr.bf16.mxu0 0
        %5450 = vmatpush1.bf16.msra.mxu0 %v5326
        %5451 = vmatprep.subr.bf16.mxu0 0
        %5452 = vmatpush1.bf16.msra.mxu0 %v5327
        %5453 = vmatprep.subr.bf16.mxu0 0
        %5454 = vmatpush1.bf16.msra.mxu0 %v5328
        %5455 = vmatprep.subr.bf16.mxu0 0
        %5456 = vmatpush1.bf16.msra.mxu0 %v5329
        %5457 = vmatprep.subr.bf16.mxu0 0
        %5458 = vmatpush1.bf16.msra.mxu0 %v5330
        %5459 = vmatprep.subr.bf16.mxu0 0
        %5460 = vmatpush1.bf16.msra.mxu0 %v5331
        %5461 = vmatprep.mubr.bf16.mxu0 %v5088
        %5462 = vmatmul.mubr.bf16.gmra.mrb[0].mxu0 %v5087
        %v5463 = vpop.f32.mrb[0].mxu0
        %v5464 = vadd.f32 %v5399, %v5463
        %v5465 = vpop.f32.mrb[0].mxu0
        %v5466 = vpop.f32.mrb[0].mxu0
        %v5467 = vadd.f32 %v5402, %v5466
        %v5468 = vpop.f32.mrb[0].mxu0
        %5469 = vmatprep.mubr.bf16.mxu0 %v5092
        %5470 = vmatmul.mubr.bf16.gmra.mrb[0].mxu0 %v5091
        %v5471 = vpop.f32.mrb[0].mxu0
        %v5472 = vadd.f32 %v5407, %v5471
        %v5473 = vpop.f32.mrb[0].mxu0
        %v5474 = vpop.f32.mrb[0].mxu0
        %v5475 = vadd.f32 %v5410, %v5474
        %v5476 = vpop.f32.mrb[0].mxu0
        %5477 = vmatprep.mubr.bf16.mxu0 %v5096
        %5478 = vmatmul.mubr.bf16.gmra.mrb[0].mxu0 %v5095
        %v5479 = vpop.f32.mrb[0].mxu0
        %v5480 = vadd.f32 %v5415, %v5479
        %v5481 = vpop.f32.mrb[0].mxu0
        %v5482 = vpop.f32.mrb[0].mxu0
        %v5483 = vadd.f32 %v5418, %v5482
        %v5484 = vpop.f32.mrb[0].mxu0
        %5485 = vmatprep.mubr.bf16.mxu0 %v5100
        %5486 = vmatmul.mubr.bf16.gmra.mrb[0].mxu0 %v5099
        %v5487 = vpop.f32.mrb[0].mxu0
        %v5488 = vadd.f32 %v5423, %v5487
        %v5489 = vpop.f32.mrb[0].mxu0
        %v5490 = vpop.f32.mrb[0].mxu0
        %v5491 = vadd.f32 %v5426, %v5490
        %v5492 = vpop.f32.mrb[0].mxu0
        %5493 = vdwg.mxu0
        %v5494 = vlaneseq
        %v5495 = vand.u32 %v5494, 127
        %vm5496 = vcmp.lt.s32.totalorder %v5495, 2
        %v5497 = vsel %vm5496, %v5464, -1e+30
        %v5498 = vsel %vm5496, %v5467, -1e+30
        %v5499 = vsel %vm5496, %v5472, -1e+30
        %v5500 = vsel %vm5496, %v5475, -1e+30
        %v5501 = vsel %vm5496, %v5480, -1e+30
        %v5502 = vsel %vm5496, %v5483, -1e+30
        %v5503 = vsel %vm5496, %v5488, -1e+30
        %v5504 = vsel %vm5496, %v5491, -1e+30
        %5505 = vmax.xlane.f32.xlu0 %v5497
        %v5506 = vpop.xlane.xlu0 %5505
        %5507 = vmax.xlane.f32.xlu0 %v5498
        %v5508 = vpop.xlane.xlu0 %5507
        %5509 = vmax.xlane.f32.xlu0 %v5499
        %v5510 = vpop.xlane.xlu0 %5509
        %5511 = vmax.xlane.f32.xlu0 %v5500
        %v5512 = vpop.xlane.xlu0 %5511
        %5513 = vmax.xlane.f32.xlu0 %v5501
        %v5514 = vpop.xlane.xlu0 %5513
        %5515 = vmax.xlane.f32.xlu0 %v5502
        %v5516 = vpop.xlane.xlu0 %5515
        %5517 = vmax.xlane.f32.xlu0 %v5503
        %v5518 = vpop.xlane.xlu0 %5517
        %5519 = vmax.xlane.f32.xlu0 %v5504
        %v5520 = vpop.xlane.xlu0 %5519
        %v5521 = vsub.f32 %v5497, %v5506
        %v5522 = vsub.f32 %v5498, %v5508
        %v5523 = vsub.f32 %v5499, %v5510
        %v5524 = vsub.f32 %v5500, %v5512
        %v5525 = vsub.f32 %v5501, %v5514
        %v5526 = vsub.f32 %v5502, %v5516
        %v5527 = vsub.f32 %v5503, %v5518
        %v5528 = vsub.f32 %v5504, %v5520
        %v5529 = vmul.f32 %v5521, 1.442695
        %v5530 = vpow.pop %v5529
        %v5531 = vmul.f32 %v5522, 1.442695
        %v5532 = vpow.pop %v5531
        %v5533 = vmul.f32 %v5523, 1.442695
        %v5534 = vpow.pop %v5533
        %v5535 = vmul.f32 %v5524, 1.442695
        %v5536 = vpow.pop %v5535
        %v5537 = vmul.f32 %v5525, 1.442695
        %v5538 = vpow.pop %v5537
        %v5539 = vmul.f32 %v5526, 1.442695
        %v5540 = vpow.pop %v5539
        %v5541 = vmul.f32 %v5527, 1.442695
        %v5542 = vpow.pop %v5541
        %v5543 = vmul.f32 %v5528, 1.442695
        %v5544 = vpow.pop %v5543
        %5545 = vadd.xlane.f32.xlu0 %v5530
        %v5546 = vpop.xlane.xlu0 %5545
        %5547 = vadd.xlane.f32.xlu0 %v5532
        %v5548 = vpop.xlane.xlu0 %5547
        %5549 = vadd.xlane.f32.xlu0 %v5534
        %v5550 = vpop.xlane.xlu0 %5549
        %5551 = vadd.xlane.f32.xlu0 %v5536
        %v5552 = vpop.xlane.xlu0 %5551
        %5553 = vadd.xlane.f32.xlu0 %v5538
        %v5554 = vpop.xlane.xlu0 %5553
        %5555 = vadd.xlane.f32.xlu0 %v5540
        %v5556 = vpop.xlane.xlu0 %5555
        %5557 = vadd.xlane.f32.xlu0 %v5542
        %v5558 = vpop.xlane.xlu0 %5557
        %5559 = vadd.xlane.f32.xlu0 %v5544
        %v5560 = vpop.xlane.xlu0 %5559
        %v5561 = vlog2.pop %v5546
        %v5562 = vmul.f32 %v5561, 0.6931472
        %v5563 = vlog2.pop %v5548
        %v5564 = vmul.f32 %v5563, 0.6931472
        %v5565 = vlog2.pop %v5550
        %v5566 = vmul.f32 %v5565, 0.6931472
        %v5567 = vlog2.pop %v5552
        %v5568 = vmul.f32 %v5567, 0.6931472
        %v5569 = vlog2.pop %v5554
        %v5570 = vmul.f32 %v5569, 0.6931472
        %v5571 = vlog2.pop %v5556
        %v5572 = vmul.f32 %v5571, 0.6931472
        %v5573 = vlog2.pop %v5558
        %v5574 = vmul.f32 %v5573, 0.6931472
        %v5575 = vlog2.pop %v5560
        %v5576 = vmul.f32 %v5575, 0.6931472
        %v5577 = vadd.f32 %v5506, %v5562
        %v5578 = vadd.f32 %v5508, %v5564
        %v5579 = vadd.f32 %v5510, %v5566
        %v5580 = vadd.f32 %v5512, %v5568
        %v5581 = vadd.f32 %v5514, %v5570
        %v5582 = vadd.f32 %v5516, %v5572
        %v5583 = vadd.f32 %v5518, %v5574
        %v5584 = vadd.f32 %v5520, %v5576
        %v5585 = vsub.f32 %v5497, %v5577
        %v5586 = vsub.f32 %v5498, %v5578
        %v5587 = vsub.f32 %v5499, %v5579
        %v5588 = vsub.f32 %v5500, %v5580
        %v5589 = vsub.f32 %v5501, %v5581
        %v5590 = vsub.f32 %v5502, %v5582
        %v5591 = vsub.f32 %v5503, %v5583
        %v5592 = vsub.f32 %v5504, %v5584
        %5593 = vst [vmem:[%s375] sm:$0xff] %v5585
        %5594 = vst [vmem:[%s375 + $0x8] sm:$0xff] %v5586
        %5595 = vst [vmem:[%s375 + $0x10] sm:$0xff] %v5587
        %5596 = vst [vmem:[%s375 + $0x18] sm:$0xff] %v5588
        %5597 = vst [vmem:[%s375 + $0x20] sm:$0xff] %v5589
        %5598 = vst [vmem:[%s375 + $0x28] sm:$0xff] %v5590
        %5599 = vst [vmem:[%s375 + $0x30] sm:$0xff] %v5591
        %5600 = vst [vmem:[%s375 + $0x38] sm:$0xff] %v5592
        %s5601 = smul.u32 8, %s35
        %p5602 = scmp.lt.s32.totalorder %s5601, 15
        %s5603 = scalar_select %p5602, %s5601, 15
        %s5604 = smul.addr %s5603, 8
        %s5605 = scalar_lea.vmem %s10, %s5604
        // Predicated region
        $region112: #{bert_arch_forward.1} parent=47 // pred_check
          %p5606 = pneg %p205
        $region113: #{bert_arch_forward.1} parent=47 // pred_check_branch
          %5608 = sbr.rel (%p5606) target = $region115
        $region114: #{bert_arch_forward.1} parent=47 // pred_region
          %s5609 = smul.u32 8, %s35
        $region115: #{bert_arch_forward.1} parent=47 // pred_fallthru
          _
      $region48: #{bert_arch_forward.1} parent=5 // pred_fallthru
        _
      %p5610 = scmp.le.s32.totalorder 2, %s30
      // Predicated region
      $region116: #{bert_arch_forward.1} parent=5 // pred_check
        %p5611 = pneg %p5610
      $region117: #{bert_arch_forward.1} parent=5 // pred_check_branch
        %5613 = sbr.rel (%p5611) target = $region119
      $region118: #{bert_arch_forward.1} parent=5 // pred_region
        %s5614 = ssub.s32 %s30, 2
        // Predicated region
        $region120: #{bert_arch_forward.1} parent=118 // pred_check
          %p5615 = pneg %p211
        $region121: #{bert_arch_forward.1} parent=118 // pred_check_branch
          %5617 = sbr.rel (%p5615) target = $region123
        $region122: #{bert_arch_forward.1} parent=118 // pred_region
          %s5618 = smul.u32 8, %s36
          %p5619 = scmp.lt.s32.totalorder %s5618, 15
          %s5620 = scalar_select %p5619, %s5618, 15
          %s5621 = smul.addr %s5620, 8
          %s5622 = scalar_lea.vmem %s10, %s5621
        $region123: #{bert_arch_forward.1} parent=118 // pred_fallthru
          _
      $region119: #{bert_arch_forward.1} parent=5 // pred_fallthru
        _
    $region6: #{bert_arch_forward.1} parent=1 // loop_footer
      %s34 = sadd.s32 1, %s30
    $region7: #{bert_arch_forward.1} parent=1 // loop_footer_branch
      %29 = sbr.rel target = $region3
    $region8: #{bert_arch_forward.1} parent=1 // loop_exit
      _
    %5623 = vsyncpa [#allocation9], 1
    %s5624 = scalar_lea.sflag [#allocation9], 1
    %5625 = vsyncpa %s5624, 1
    %5626 = vsyncpa [#allocation11], 1
    %5627 = vsyncpa [#allocation14], 1
    %5628 = vsyncpa [#allocation17], 1
  %5629 = vsyncmov [#allocation3]
  %s5630 = vpop.sfrf %5629
  %p5631 = scmp.eq.s32.totalorder %s5630, 0
  %p5632 = pneg %p5631
  %5634 = shalt.err (%p5632)
  %s5635 = scalar_lea.sflag [#allocation3], 1
  %5636 = vsyncmov %s5635
  %s5637 = vpop.sfrf %5636
  %p5638 = scmp.eq.s32.totalorder %s5637, 0
  %p5639 = pneg %p5638
  %5641 = shalt.err (%p5639)
  %s5642 = scalar_lea.sflag [#allocation3], 2
  %5643 = vsyncmov %s5642
  %s5644 = vpop.sfrf %5643
  %p5645 = scmp.eq.s32.totalorder %s5644, 0
  %p5646 = pneg %p5645
  %5648 = shalt.err (%p5646)
  %s5649 = scalar_lea.sflag [#allocation3], 3
  %5650 = vsyncmov %s5649
  %s5651 = vpop.sfrf %5650
  %p5652 = scmp.eq.s32.totalorder %s5651, 0
  %p5653 = pneg %p5652
  %5655 = shalt.err (%p5653)

</llo_original>
